<compile_context>
chip_gen: v5e
topology: v5e:2x2
jax: 0.10.0
libtpu: 0.0.40
codegen_flags: <defaults>
</compile_context>

<pallas_src>
import math
import functools

import jax
import jax.numpy as jnp
from jax.experimental import pallas as pl
from jax.experimental.pallas import tpu as pltpu


# ----------------------------------------------------------------------------
# Kernels
# ----------------------------------------------------------------------------
def _conv1x1_bn_act_kernel(x_ref, w_ref, scale_ref, bias_ref, o_ref):
    # x_ref: (TM, Cin) bf16   w_ref: (Cin, Cout) bf16
    # scale/bias: (1, Cout) f32   o_ref: (TM, Cout) bf16
    acc = jnp.dot(x_ref[...], w_ref[...], preferred_element_type=jnp.float32)
    z = acc * scale_ref[...] + bias_ref[...]
    z = z * jax.nn.sigmoid(z)                       # SiLU in f32
    o_ref[...] = z.astype(o_ref.dtype)


def _conv3x3_core(x_ref, w_ref, scale_ref, bias_ref, *, th, w):
    # x_ref: (1, TH, W+2, 3*Cin) bf16  -- ky taps pre-folded into channels
    # w_ref: (3, 3*Cin, Cout) bf16     -- one (K=3*Cin, Cout) matrix per kx tap
    # Returns SiLU(conv*scale + bias) as f32 of shape (TH*W, Cout).
    k = w_ref.shape[1]
    cout = w_ref.shape[2]
    xt = x_ref[0]                                   # (TH, W+2, 3*Cin)
    acc = jnp.zeros((th * w, cout), jnp.float32)    # lives in vregs at these tile sizes
    for kx in range(3):                             # 3 MXU taps (was 9)
        patch = xt[:, kx:kx + w, :].reshape(th * w, k)
        acc = acc + jnp.dot(patch, w_ref[kx], preferred_element_type=jnp.float32)
    z = acc * scale_ref[...] + bias_ref[...]
    return z * jax.nn.sigmoid(z)                    # SiLU in f32


def _conv3x3_bn_act_kernel(x_ref, w_ref, scale_ref, bias_ref, o_ref, *, th, w):
    s = _conv3x3_core(x_ref, w_ref, scale_ref, bias_ref, th=th, w=w)
    o_ref[0] = s.reshape(th, w, -1).astype(o_ref.dtype)


def _conv3x3_bn_act_head_kernel(x_ref, w_ref, scale_ref, bias_ref,
                                hw_ref, hb_ref, o_ref, *, th, w):
    # Same 3x3 ConvBnAct plus the fused 1x1 output heads in the epilogue:
    # s = [h1 | h2] of shape (TH*W, 2*hidden); y = s @ head_w + head_b with a
    # lane-dense (128-wide, zero-padded) output slab.
    s = _conv3x3_core(x_ref, w_ref, scale_ref, bias_ref, th=th, w=w)
    y = jnp.dot(s.astype(hw_ref.dtype), hw_ref[...],
                preferred_element_type=jnp.float32) + hb_ref[...]
    o_ref[0] = y.reshape(th, w, -1).astype(o_ref.dtype)


# ----------------------------------------------------------------------------
# Pallas wrappers
# ----------------------------------------------------------------------------
def _pick_tile(total, target):
    # Largest clean tile: `target` if it divides `total`, else the full extent.
    return target if total % target == 0 else total


def conv1x1_bn_act(x_nhwc, w, scale, bias, *, block_m=256):
    """1x1 conv (channel matmul) + folded BN + SiLU, tiled over M = N*H*W rows.

    block_m: rows per tile (multiple of 8). Tune per generation: larger on
    v5e/v6e (128 MiB VMEM), smaller on v7x (64 MiB).
    """
    N, H, W, Cin = x_nhwc.shape
    Cout = w.shape[1]
    M = N * H * W
    tm = _pick_tile(M, block_m)
    xm = x_nhwc.reshape(M, Cin).astype(jnp.bfloat16)
    out = pl.pallas_call(
        _conv1x1_bn_act_kernel,
        out_shape=jax.ShapeDtypeStruct((M, Cout), jnp.bfloat16),
        grid_spec=pl.GridSpec(
            grid=(M // tm,),
            in_specs=[
                pl.BlockSpec((tm, Cin), lambda i: (i, 0)),
                pl.BlockSpec((Cin, Cout), lambda i: (0, 0)),
                pl.BlockSpec((1, Cout), lambda i: (0, 0)),
                pl.BlockSpec((1, Cout), lambda i: (0, 0)),
            ],
            out_specs=pl.BlockSpec((tm, Cout), lambda i: (i, 0)),
        ),
        compiler_params=pltpu.CompilerParams(dimension_semantics=("parallel",)),
    )(xm, w.astype(jnp.bfloat16),
      scale.reshape(1, Cout).astype(jnp.float32),
      bias.reshape(1, Cout).astype(jnp.float32))
    return out.reshape(N, H, W, Cout)


def _im2col_rows(x_nhwc):
    """(N,H,W,C) -> (N,H,W+2,3C): zero-pad by 1 and fold the 3 ky taps into K."""
    N, H, W, C = x_nhwc.shape
    xp = jnp.pad(x_nhwc, ((0, 0), (1, 1), (1, 1), (0, 0)))
    return jnp.concatenate([xp[:, 0:H], xp[:, 1:H + 1], xp[:, 2:H + 2]], axis=-1)


def conv3x3_bn_act(x_nhwc, w_taps, scale, bias, *, block_rows=8, head=None):
    """3x3 stride-1 pad-1 conv + folded BN + SiLU, row-tiled over (N, H/TH).

    w_taps: (3, 3*Cin, Cout) -- per-kx-tap weights, ky folded into K (matching
            _im2col_rows' channel ordering).
    head:   optional (head_w (Cout, CP), head_b (CP,)): fused 1x1 output-conv
            epilogue with a lane-dense CP-wide (multiple of 128) f32 output.
    block_rows: rows per tile (multiple of 8); tune per generation.
    """
    N, H, W, C = x_nhwc.shape
    Cout = w_taps.shape[-1]
    xr = _im2col_rows(x_nhwc)                        # (N, H, W+2, 3C), bf16
    th = _pick_tile(H, block_rows)
    grid = (N, H // th)                              # all parallel (v7x megacore)

    in_specs = [
        pl.BlockSpec((1, th, W + 2, 3 * C), lambda n, r: (n, r, 0, 0)),
        pl.BlockSpec((3, 3 * C, Cout), lambda n, r: (0, 0, 0)),
        pl.BlockSpec((1, Cout), lambda n, r: (0, 0)),
        pl.BlockSpec((1, Cout), lambda n, r: (0, 0)),
    ]
    args = [xr, w_taps.astype(jnp.bfloat16),
            scale.reshape(1, Cout).astype(jnp.float32),
            bias.reshape(1, Cout).astype(jnp.float32)]

    if head is None:
        kernel = functools.partial(_conv3x3_bn_act_kernel, th=th, w=W)
        out_c, out_dtype = Cout, jnp.bfloat16
    else:
        head_w, head_b = head
        cp = head_w.shape[-1]
        in_specs += [
            pl.BlockSpec((Cout, cp), lambda n, r: (0, 0)),
            pl.BlockSpec((1, cp), lambda n, r: (0, 0)),
        ]
        args += [head_w.astype(jnp.bfloat16),
                 head_b.reshape(1, cp).astype(jnp.float32)]
        kernel = functools.partial(_conv3x3_bn_act_head_kernel, th=th, w=W)
        out_c, out_dtype = cp, jnp.float32

    return pl.pallas_call(
        kernel,
        out_shape=jax.ShapeDtypeStruct((N, H, W, out_c), out_dtype),
        grid_spec=pl.GridSpec(
            grid=grid,
            in_specs=in_specs,
            out_specs=pl.BlockSpec((1, th, W, out_c), lambda n, r: (n, r, 0, 0)),
        ),
        compiler_params=pltpu.CompilerParams(
            dimension_semantics=("parallel", "parallel")),
    )(*args)


# ----------------------------------------------------------------------------
# Parameter construction (deterministic, synthetic) + fusion for the kernels
# ----------------------------------------------------------------------------
def round_to(x, div=8):
    return int(round(x / div) * div)


def make_params(key, in_channels, hidden, num_classes, prior_prob=0.01):
    """Raw per-layer parameters (same structure as the PyTorch module)."""
    ks = jax.random.split(key, 10)
    eps = 1e-5

    def conv_w(k, kh, kw, cin, cout):
        fan_in = cin * kh * kw
        return jax.random.normal(k, (kh, kw, cin, cout), jnp.float32) / math.sqrt(fan_in)

    def folded_bn(cout):
        gamma = jnp.ones((cout,), jnp.float32)
        beta = jnp.zeros((cout,), jnp.float32)
        mean = jnp.zeros((cout,), jnp.float32)
        var = jnp.ones((cout,), jnp.float32)
        scale = gamma / jnp.sqrt(var + eps)
        return scale, beta - mean * scale

    prior_bias = -math.log((1.0 - prior_prob) / prior_prob)
    p = {}
    p["stem_w"] = conv_w(ks[0], 1, 1, in_channels, hidden).reshape(in_channels, hidden)
    p["stem_scale"], p["stem_bias"] = folded_bn(hidden)
    for name, k in (("reg1", ks[1]), ("reg2", ks[2]), ("cls1", ks[3]), ("cls2", ks[4])):
        p[name + "_w"] = conv_w(k, 3, 3, hidden, hidden)
        p[name + "_scale"], p[name + "_bias"] = folded_bn(hidden)
    p["reg_out_w"] = conv_w(ks[5], 1, 1, hidden, 4).reshape(hidden, 4)
    p["reg_out_b"] = jax.random.uniform(ks[6], (4,), jnp.float32,
                                        -1.0 / math.sqrt(hidden), 1.0 / math.sqrt(hidden))
    p["obj_out_w"] = conv_w(ks[7], 1, 1, hidden, 1).reshape(hidden, 1)
    p["obj_out_b"] = jnp.full((1,), prior_bias, jnp.float32)
    p["cls_out_w"] = conv_w(ks[8], 1, 1, hidden, num_classes).reshape(hidden, num_classes)
    p["cls_out_b"] = jnp.full((num_classes,), prior_bias, jnp.float32)
    return p


def _fold_ky_into_k(w):
    # (3ky, 3kx, Cin, Cout) -> (3kx, 3*Cin, Cout) with K ordered (ky, cin),
    # matching _im2col_rows' channel ordering.
    kh, kw, cin, cout = w.shape
    return jnp.transpose(w, (1, 0, 2, 3)).reshape(kw, kh * cin, cout)


def fuse_params(p, hidden, num_classes):
    """Build kernel-side fused/rearranged parameters from the raw ones."""
    f = {"stem_w": p["stem_w"],
         "stem_scale": p["stem_scale"], "stem_bias": p["stem_bias"]}
    # Layer 1 of both branches fused along Cout (both read the stem output h).
    w1 = jnp.concatenate([p["reg1_w"], p["cls1_w"]], axis=-1)           # (3,3,C,2C)
    f["w1"] = _fold_ky_into_k(w1)
    f["scale1"] = jnp.concatenate([p["reg1_scale"], p["cls1_scale"]])
    f["bias1"] = jnp.concatenate([p["reg1_bias"], p["cls1_bias"]])
    # Layer 2 of both branches fused via block-diagonal weights (grouped conv).
    # NOTE: fine at small hidden (fills the MXU); at large hidden one would use
    # a branch grid axis with branch-indexed weights instead.
    z = jnp.zeros((3, 3, hidden, hidden), jnp.float32)
    w2 = jnp.concatenate([jnp.concatenate([p["reg2_w"], z], axis=-1),
                          jnp.concatenate([z, p["cls2_w"]], axis=-1)], axis=-2)
    f["w2"] = _fold_ky_into_k(w2)
    f["scale2"] = jnp.concatenate([p["reg2_scale"], p["cls2_scale"]])
    f["bias2"] = jnp.concatenate([p["reg2_bias"], p["cls2_bias"]])
    # 1x1 output heads (reg/obj/cls) fused into one lane-dense matmul epilogue.
    n_out = 4 + 1 + num_classes
    cp = ((n_out + 127) // 128) * 128
    hw = jnp.zeros((2 * hidden, cp), jnp.float32)
    hw = hw.at[:hidden, 0:4].set(p["reg_out_w"])
    hw = hw.at[:hidden, 4:5].set(p["obj_out_w"])
    hw = hw.at[hidden:, 5:5 + num_classes].set(p["cls_out_w"])
    hb = jnp.zeros((cp,), jnp.float32)
    hb = hb.at[0:4].set(p["reg_out_b"])
    hb = hb.at[4:5].set(p["obj_out_b"])
    hb = hb.at[5:5 + num_classes].set(p["cls_out_b"])
    f["head_w"], f["head_b"] = hw, hb
    return f, n_out


# ----------------------------------------------------------------------------
# Forward pass (matches DecoupledHeadUnit.forward, NCHW in / NCHW out)
# ----------------------------------------------------------------------------
def decoupled_head_unit(x_nchw, fp, n_out, *, block_m=256, block_rows=8):
    x = jnp.transpose(x_nchw, (0, 2, 3, 1)).astype(jnp.bfloat16)       # -> NHWC, bf16
    h = conv1x1_bn_act(x, fp["stem_w"], fp["stem_scale"], fp["stem_bias"],
                       block_m=block_m)                                # stem_conv
    g = conv3x3_bn_act(h, fp["w1"], fp["scale1"], fp["bias1"],
                       block_rows=block_rows)                          # reg_conv[0]+cls_conv[0]
    y = conv3x3_bn_act(g, fp["w2"], fp["scale2"], fp["bias2"],
                       block_rows=block_rows,
                       head=(fp["head_w"], fp["head_b"]))              # reg/cls_conv[1] + heads
    y = y[..., :n_out]                                                 # drop lane padding
    return jnp.transpose(y, (0, 3, 1, 2))                              # -> NCHW, f32


# ----------------------------------------------------------------------------
# Pure-JAX reference (same layer structure and dtype flow, unfused params)
# ----------------------------------------------------------------------------
def reference_forward(x_nchw, p):
    x = jnp.transpose(x_nchw, (0, 2, 3, 1)).astype(jnp.bfloat16)

    def bn_act(acc, scale, bias):
        z = acc * scale + bias
        return (z * jax.nn.sigmoid(z)).astype(jnp.bfloat16)

    def conv1x1(t, w):
        return jnp.einsum("nhwc,cd->nhwd", t, w.astype(jnp.bfloat16),
                          preferred_element_type=jnp.float32)

    def conv3x3(t, w):
        n, hh, ww, _ = t.shape
        tp = jnp.pad(t, ((0, 0), (1, 1), (1, 1), (0, 0)))
        acc = jnp.zeros((n, hh, ww, w.shape[-1]), jnp.float32)
        for ky in range(3):
            for kx in range(3):
                acc = acc + jnp.einsum(
                    "nhwc,cd->nhwd", tp[:, ky:ky + hh, kx:kx + ww, :],
                    w[ky, kx].astype(jnp.bfloat16),
                    preferred_element_type=jnp.float32)
        return acc

    h = bn_act(conv1x1(x, p["stem_w"]), p["stem_scale"], p["stem_bias"])
    h1 = bn_act(conv3x3(h, p["reg1_w"]), p["reg1_scale"], p["reg1_bias"])
    h1 = bn_act(conv3x3(h1, p["reg2_w"]), p["reg2_scale"], p["reg2_bias"])
    h2 = bn_act(conv3x3(h, p["cls1_w"]), p["cls1_scale"], p["cls1_bias"])
    h2 = bn_act(conv3x3(h2, p["cls2_w"]), p["cls2_scale"], p["cls2_bias"])
    y_reg = conv1x1(h1, p["reg_out_w"]) + p["reg_out_b"]
    y_obj = conv1x1(h1, p["obj_out_w"]) + p["obj_out_b"]
    y_cls = conv1x1(h2, p["cls_out_w"]) + p["cls_out_b"]
    y = jnp.concatenate([y_reg, y_obj, y_cls], axis=-1)
    return jnp.transpose(y, (0, 3, 1, 2))


if __name__ == "__main__":
    key = jax.random.PRNGKey(0)
    k_x, k_p = jax.random.split(key)

    # Small shapes: batch=2, in_channels=4, spatial=16x16,
    # width_mult=0.125 -> hidden=round_to(256*0.125)=32, num_classes=3.
    N, Cin, H, W = 2, 4, 16, 16
    width_mult = 0.125
    num_classes = 3
    hidden = round_to(256 * width_mult)

    x = jax.random.normal(k_x, (N, Cin, H, W), jnp.float32)
    raw = make_params(k_p, Cin, hidden, num_classes)
    fused, n_out = fuse_params(raw, hidden, num_classes)

    fwd = jax.jit(lambda t: decoupled_head_unit(t, fused, n_out))
    y = jax.block_until_ready(fwd(x))

    expected = (N, 4 + 1 + num_classes, H, W)
    assert y.shape == expected, (y.shape, expected)
    assert bool(jnp.all(jnp.isfinite(y)))

    # Numerical check against a pure-JAX reference with the same dtype flow
    # (bf16 activations / weights, f32 accumulation and SiLU).
    y_ref = reference_forward(x, raw)
    rel = jnp.linalg.norm(y - y_ref) / (jnp.linalg.norm(y_ref) + 1e-12)
    assert float(rel) < 2e-2, float(rel)

    print("KERNEL_OK")
</pallas_src>

<mosaic_0001>
module attributes {stable_mosaic.version = 11 : i64} {
  func.func @_conv1x1_bn_act_kernel(%arg0: i32, %arg1: memref<256x4xbf16, #tpu.memory_space<vmem>>, %arg2: memref<4x32xbf16, #tpu.memory_space<vmem>>, %arg3: memref<1x32xf32, #tpu.memory_space<vmem>>, %arg4: memref<1x32xf32, #tpu.memory_space<vmem>>, %arg5: memref<256x32xbf16, #tpu.memory_space<vmem>>) attributes {dimension_semantics = [#tpu.dimension_semantics<parallel>], iteration_bounds = array<i64: 2>, scalar_prefetch = 0 : i64, scratch_operands = 0 : i64, tpu.core_type = #tpu.core_type<tc>, window_params = [{transform_indices = @transform_0, window_bounds = array<i64: 256, 4>}, {pipeline_mode = #tpu.pipeline_mode<synchronous>, transform_indices = @transform_1, window_bounds = array<i64: 4, 32>}, {pipeline_mode = #tpu.pipeline_mode<synchronous>, transform_indices = @transform_2, window_bounds = array<i64: 1, 32>}, {pipeline_mode = #tpu.pipeline_mode<synchronous>, transform_indices = @transform_3, window_bounds = array<i64: 1, 32>}, {transform_indices = @transform_4, window_bounds = array<i64: 256, 32>}]} {
    %c0 = arith.constant 0 : index
    %c0_0 = arith.constant 0 : index
    %0 = vector.load %arg1[%c0, %c0_0] : memref<256x4xbf16, #tpu.memory_space<vmem>>, vector<256x4xbf16>
    %c0_1 = arith.constant 0 : index
    %c0_2 = arith.constant 0 : index
    %1 = vector.load %arg2[%c0_1, %c0_2] : memref<4x32xbf16, #tpu.memory_space<vmem>>, vector<4x32xbf16>
    %cst = arith.constant dense<0.000000e+00> : vector<256x32xf32>
    %2 = tpu.matmul %0, %1, %cst {dimension_numbers = #tpu.dot_dimension_numbers<[1], [0], [0], [1], [0, 0, 1, 1], [], []>} : vector<256x4xbf16>, vector<4x32xbf16>, vector<256x32xf32> -> vector<256x32xf32>
    %c0_3 = arith.constant 0 : index
    %c0_4 = arith.constant 0 : index
    %3 = vector.load %arg3[%c0_3, %c0_4] : memref<1x32xf32, #tpu.memory_space<vmem>>, vector<1x32xf32>
    %4 = vector.broadcast %3 : vector<1x32xf32> to vector<256x32xf32>
    %5 = arith.mulf %2, %4 : vector<256x32xf32>
    %c0_5 = arith.constant 0 : index
    %c0_6 = arith.constant 0 : index
    %6 = vector.load %arg4[%c0_5, %c0_6] : memref<1x32xf32, #tpu.memory_space<vmem>>, vector<1x32xf32>
    %7 = vector.broadcast %6 : vector<1x32xf32> to vector<256x32xf32>
    %8 = arith.addf %5, %7 : vector<256x32xf32>
    %9 = arith.negf %8 : vector<256x32xf32>
    %10 = math.exp %9 : vector<256x32xf32>
    %cst_7 = arith.constant 1.000000e+00 : f32
    %11 = vector.broadcast %cst_7 : f32 to vector<256x32xf32>
    %12 = arith.addf %11, %10 : vector<256x32xf32>
    %13 = arith.divf %11, %12 : vector<256x32xf32>
    %14 = arith.mulf %8, %13 : vector<256x32xf32>
    %15 = arith.truncf %14 : vector<256x32xf32> to vector<256x32xbf16>
    %c0_8 = arith.constant 0 : index
    %c0_9 = arith.constant 0 : index
    %16 = vector.load %arg5[%c0_8, %c0_9] : memref<256x32xbf16, #tpu.memory_space<vmem>>, vector<256x32xbf16>
    tpu.vector_store %arg5[%c0_8, %c0_9], %15 {strides = array<i32>} : memref<256x32xbf16, #tpu.memory_space<vmem>>, vector<256x32xbf16>,
    return
  }
  func.func @transform_0(%arg0: i32) -> (i32, i32) {
    %c0_i32 = arith.constant 0 : i32
    %c0_i32_0 = arith.constant 0 : i32
    return %arg0, %c0_i32 : i32, i32
  }
  func.func @transform_1(%arg0: i32) -> (i32, i32) {
    %c0_i32 = arith.constant 0 : i32
    %c0_i32_0 = arith.constant 0 : i32
    %c0_i32_1 = arith.constant 0 : i32
    return %c0_i32, %c0_i32_0 : i32, i32
  }
  func.func @transform_2(%arg0: i32) -> (i32, i32) {
    %c0_i32 = arith.constant 0 : i32
    %c0_i32_0 = arith.constant 0 : i32
    %c0_i32_1 = arith.constant 0 : i32
    return %c0_i32, %c0_i32_0 : i32, i32
  }
  func.func @transform_3(%arg0: i32) -> (i32, i32) {
    %c0_i32 = arith.constant 0 : i32
    %c0_i32_0 = arith.constant 0 : i32
    %c0_i32_1 = arith.constant 0 : i32
    return %c0_i32, %c0_i32_0 : i32, i32
  }
  func.func @transform_4(%arg0: i32) -> (i32, i32) {
    %c0_i32 = arith.constant 0 : i32
    %c0_i32_0 = arith.constant 0 : i32
    return %arg0, %c0_i32 : i32, i32
  }
}

module attributes {stable_mosaic.version = 11 : i64} {
  func.func @_conv3x3_bn_act_kernel(%arg0: i32, %arg1: i32, %arg2: memref<1x8x18x96xbf16, #tpu.memory_space<vmem>>, %arg3: memref<3x96x64xbf16, #tpu.memory_space<vmem>>, %arg4: memref<1x64xf32, #tpu.memory_space<vmem>>, %arg5: memref<1x64xf32, #tpu.memory_space<vmem>>, %arg6: memref<1x8x16x64xbf16, #tpu.memory_space<vmem>>) attributes {dimension_semantics = [#tpu.dimension_semantics<parallel>, #tpu.dimension_semantics<parallel>], iteration_bounds = array<i64: 2, 2>, scalar_prefetch = 0 : i64, scratch_operands = 0 : i64, tpu.core_type = #tpu.core_type<tc>, window_params = [{transform_indices = @transform_0, window_bounds = array<i64: 1, 8, 18, 96>}, {pipeline_mode = #tpu.pipeline_mode<synchronous>, transform_indices = @transform_1, window_bounds = array<i64: 3, 96, 64>}, {pipeline_mode = #tpu.pipeline_mode<synchronous>, transform_indices = @transform_2, window_bounds = array<i64: 1, 64>}, {pipeline_mode = #tpu.pipeline_mode<synchronous>, transform_indices = @transform_3, window_bounds = array<i64: 1, 64>}, {transform_indices = @transform_4, window_bounds = array<i64: 1, 8, 16, 64>}]} {
    %c0 = arith.constant 0 : index
    %c0_0 = arith.constant 0 : index
    %c0_1 = arith.constant 0 : index
    %c0_2 = arith.constant 0 : index
    %0 = vector.load %arg2[%c0, %c0_0, %c0_1, %c0_2] : memref<1x8x18x96xbf16, #tpu.memory_space<vmem>>, vector<1x8x18x96xbf16>
    %1 = vector.shape_cast %0 : vector<1x8x18x96xbf16> to vector<8x18x96xbf16>
    %cst = arith.constant 0.000000e+00 : f32
    %2 = vector.broadcast %cst : f32 to vector<128x64xf32>
    %3 = vector.extract_strided_slice %1 {offsets = [0, 0, 0], sizes = [8, 16, 96], strides = [1, 1, 1]} : vector<8x18x96xbf16> to vector<8x16x96xbf16>
    %4 = vector.shape_cast %3 : vector<8x16x96xbf16> to vector<128x96xbf16>
    %c0_3 = arith.constant 0 : index
    %c0_4 = arith.constant 0 : index
    %c0_5 = arith.constant 0 : index
    %5 = vector.load %arg3[%c0_3, %c0_4, %c0_5] : memref<3x96x64xbf16, #tpu.memory_space<vmem>>, vector<1x96x64xbf16>
    %6 = vector.shape_cast %5 : vector<1x96x64xbf16> to vector<96x64xbf16>
    %cst_6 = arith.constant dense<0.000000e+00> : vector<128x64xf32>
    %7 = tpu.matmul %4, %6, %cst_6 {dimension_numbers = #tpu.dot_dimension_numbers<[1], [0], [0], [1], [0, 0, 1, 1], [], []>} : vector<128x96xbf16>, vector<96x64xbf16>, vector<128x64xf32> -> vector<128x64xf32>
    %8 = arith.addf %2, %7 : vector<128x64xf32>
    %9 = vector.extract_strided_slice %1 {offsets = [0, 1, 0], sizes = [8, 16, 96], strides = [1, 1, 1]} : vector<8x18x96xbf16> to vector<8x16x96xbf16>
    %10 = vector.shape_cast %9 : vector<8x16x96xbf16> to vector<128x96xbf16>
    %c1 = arith.constant 1 : index
    %c0_7 = arith.constant 0 : index
    %c0_8 = arith.constant 0 : index
    %11 = vector.load %arg3[%c1, %c0_7, %c0_8] : memref<3x96x64xbf16, #tpu.memory_space<vmem>>, vector<1x96x64xbf16>
    %12 = vector.shape_cast %11 : vector<1x96x64xbf16> to vector<96x64xbf16>
    %cst_9 = arith.constant dense<0.000000e+00> : vector<128x64xf32>
    %13 = tpu.matmul %10, %12, %cst_9 {dimension_numbers = #tpu.dot_dimension_numbers<[1], [0], [0], [1], [0, 0, 1, 1], [], []>} : vector<128x96xbf16>, vector<96x64xbf16>, vector<128x64xf32> -> vector<128x64xf32>
    %14 = arith.addf %8, %13 : vector<128x64xf32>
    %15 = vector.extract_strided_slice %1 {offsets = [0, 2, 0], sizes = [8, 16, 96], strides = [1, 1, 1]} : vector<8x18x96xbf16> to vector<8x16x96xbf16>
    %16 = vector.shape_cast %15 : vector<8x16x96xbf16> to vector<128x96xbf16>
    %c2 = arith.constant 2 : index
    %c0_10 = arith.constant 0 : index
    %c0_11 = arith.constant 0 : index
    %17 = vector.load %arg3[%c2, %c0_10, %c0_11] : memref<3x96x64xbf16, #tpu.memory_space<vmem>>, vector<1x96x64xbf16>
    %18 = vector.shape_cast %17 : vector<1x96x64xbf16> to vector<96x64xbf16>
    %cst_12 = arith.constant dense<0.000000e+00> : vector<128x64xf32>
    %19 = tpu.matmul %16, %18, %cst_12 {dimension_numbers = #tpu.dot_dimension_numbers<[1], [0], [0], [1], [0, 0, 1, 1], [], []>} : vector<128x96xbf16>, vector<96x64xbf16>, vector<128x64xf32> -> vector<128x64xf32>
    %20 = arith.addf %14, %19 : vector<128x64xf32>
    %c0_13 = arith.constant 0 : index
    %c0_14 = arith.constant 0 : index
    %21 = vector.load %arg4[%c0_13, %c0_14] : memref<1x64xf32, #tpu.memory_space<vmem>>, vector<1x64xf32>
    %22 = vector.broadcast %21 : vector<1x64xf32> to vector<128x64xf32>
    %23 = arith.mulf %20, %22 : vector<128x64xf32>
    %c0_15 = arith.constant 0 : index
    %c0_16 = arith.constant 0 : index
    %24 = vector.load %arg5[%c0_15, %c0_16] : memref<1x64xf32, #tpu.memory_space<vmem>>, vector<1x64xf32>
    %25 = vector.broadcast %24 : vector<1x64xf32> to vector<128x64xf32>
    %26 = arith.addf %23, %25 : vector<128x64xf32>
    %27 = arith.negf %26 : vector<128x64xf32>
    %28 = math.exp %27 : vector<128x64xf32>
    %cst_17 = arith.constant 1.000000e+00 : f32
    %29 = vector.broadcast %cst_17 : f32 to vector<128x64xf32>
    %30 = arith.addf %29, %28 : vector<128x64xf32>
    %31 = arith.divf %29, %30 : vector<128x64xf32>
    %32 = arith.mulf %26, %31 : vector<128x64xf32>
    %33 = vector.shape_cast %32 : vector<128x64xf32> to vector<8x16x64xf32>
    %34 = arith.truncf %33 : vector<8x16x64xf32> to vector<8x16x64xbf16>
    %c0_18 = arith.constant 0 : index
    %c0_19 = arith.constant 0 : index
    %c0_20 = arith.constant 0 : index
    %c0_21 = arith.constant 0 : index
    %35 = vector.load %arg6[%c0_18, %c0_19, %c0_20, %c0_21] : memref<1x8x16x64xbf16, #tpu.memory_space<vmem>>, vector<1x8x16x64xbf16>
    %36 = vector.shape_cast %35 : vector<1x8x16x64xbf16> to vector<8x16x64xbf16>
    %37 = vector.shape_cast %34 : vector<8x16x64xbf16> to vector<1x8x16x64xbf16>
    tpu.vector_store %arg6[%c0_18, %c0_19, %c0_20, %c0_21], %37 {strides = array<i32>} : memref<1x8x16x64xbf16, #tpu.memory_space<vmem>>, vector<1x8x16x64xbf16>,
    return
  }
  func.func @transform_0(%arg0: i32, %arg1: i32) -> (i32, i32, i32, i32) {
    %c0_i32 = arith.constant 0 : i32
    %c0_i32_0 = arith.constant 0 : i32
    %c0_i32_1 = arith.constant 0 : i32
    return %arg0, %arg1, %c0_i32, %c0_i32_0 : i32, i32, i32, i32
  }
  func.func @transform_1(%arg0: i32, %arg1: i32) -> (i32, i32, i32) {
    %c0_i32 = arith.constant 0 : i32
    %c0_i32_0 = arith.constant 0 : i32
    %c0_i32_1 = arith.constant 0 : i32
    %c0_i32_2 = arith.constant 0 : i32
    return %c0_i32, %c0_i32_0, %c0_i32_1 : i32, i32, i32
  }
  func.func @transform_2(%arg0: i32, %arg1: i32) -> (i32, i32) {
    %c0_i32 = arith.constant 0 : i32
    %c0_i32_0 = arith.constant 0 : i32
    %c0_i32_1 = arith.constant 0 : i32
    return %c0_i32, %c0_i32_0 : i32, i32
  }
  func.func @transform_3(%arg0: i32, %arg1: i32) -> (i32, i32) {
    %c0_i32 = arith.constant 0 : i32
    %c0_i32_0 = arith.constant 0 : i32
    %c0_i32_1 = arith.constant 0 : i32
    return %c0_i32, %c0_i32_0 : i32, i32
  }
  func.func @transform_4(%arg0: i32, %arg1: i32) -> (i32, i32, i32, i32) {
    %c0_i32 = arith.constant 0 : i32
    %c0_i32_0 = arith.constant 0 : i32
    %c0_i32_1 = arith.constant 0 : i32
    return %arg0, %arg1, %c0_i32, %c0_i32_0 : i32, i32, i32, i32
  }
}

module attributes {stable_mosaic.version = 11 : i64} {
  func.func @_conv3x3_bn_act_head_kernel(%arg0: i32, %arg1: i32, %arg2: memref<1x8x18x192xbf16, #tpu.memory_space<vmem>>, %arg3: memref<3x192x64xbf16, #tpu.memory_space<vmem>>, %arg4: memref<1x64xf32, #tpu.memory_space<vmem>>, %arg5: memref<1x64xf32, #tpu.memory_space<vmem>>, %arg6: memref<64x128xbf16, #tpu.memory_space<vmem>>, %arg7: memref<1x128xf32, #tpu.memory_space<vmem>>, %arg8: memref<1x8x16x128xf32, #tpu.memory_space<vmem>>) attributes {dimension_semantics = [#tpu.dimension_semantics<parallel>, #tpu.dimension_semantics<parallel>], iteration_bounds = array<i64: 2, 2>, scalar_prefetch = 0 : i64, scratch_operands = 0 : i64, tpu.core_type = #tpu.core_type<tc>, window_params = [{transform_indices = @transform_0, window_bounds = array<i64: 1, 8, 18, 192>}, {pipeline_mode = #tpu.pipeline_mode<synchronous>, transform_indices = @transform_1, window_bounds = array<i64: 3, 192, 64>}, {pipeline_mode = #tpu.pipeline_mode<synchronous>, transform_indices = @transform_2, window_bounds = array<i64: 1, 64>}, {pipeline_mode = #tpu.pipeline_mode<synchronous>, transform_indices = @transform_3, window_bounds = array<i64: 1, 64>}, {pipeline_mode = #tpu.pipeline_mode<synchronous>, transform_indices = @transform_4, window_bounds = array<i64: 64, 128>}, {pipeline_mode = #tpu.pipeline_mode<synchronous>, transform_indices = @transform_5, window_bounds = array<i64: 1, 128>}, {transform_indices = @transform_6, window_bounds = array<i64: 1, 8, 16, 128>}]} {
    %c0 = arith.constant 0 : index
    %c0_0 = arith.constant 0 : index
    %c0_1 = arith.constant 0 : index
    %c0_2 = arith.constant 0 : index
    %0 = vector.load %arg2[%c0, %c0_0, %c0_1, %c0_2] : memref<1x8x18x192xbf16, #tpu.memory_space<vmem>>, vector<1x8x18x192xbf16>
    %1 = vector.shape_cast %0 : vector<1x8x18x192xbf16> to vector<8x18x192xbf16>
    %cst = arith.constant 0.000000e+00 : f32
    %2 = vector.broadcast %cst : f32 to vector<128x64xf32>
    %3 = vector.extract_strided_slice %1 {offsets = [0, 0, 0], sizes = [8, 16, 192], strides = [1, 1, 1]} : vector<8x18x192xbf16> to vector<8x16x192xbf16>
    %4 = vector.shape_cast %3 : vector<8x16x192xbf16> to vector<128x192xbf16>
    %c0_3 = arith.constant 0 : index
    %c0_4 = arith.constant 0 : index
    %c0_5 = arith.constant 0 : index
    %5 = vector.load %arg3[%c0_3, %c0_4, %c0_5] : memref<3x192x64xbf16, #tpu.memory_space<vmem>>, vector<1x192x64xbf16>
    %6 = vector.shape_cast %5 : vector<1x192x64xbf16> to vector<192x64xbf16>
    %cst_6 = arith.constant dense<0.000000e+00> : vector<128x64xf32>
    %7 = tpu.matmul %4, %6, %cst_6 {dimension_numbers = #tpu.dot_dimension_numbers<[1], [0], [0], [1], [0, 0, 1, 1], [], []>} : vector<128x192xbf16>, vector<192x64xbf16>, vector<128x64xf32> -> vector<128x64xf32>
    %8 = arith.addf %2, %7 : vector<128x64xf32>
    %9 = vector.extract_strided_slice %1 {offsets = [0, 1, 0], sizes = [8, 16, 192], strides = [1, 1, 1]} : vector<8x18x192xbf16> to vector<8x16x192xbf16>
    %10 = vector.shape_cast %9 : vector<8x16x192xbf16> to vector<128x192xbf16>
    %c1 = arith.constant 1 : index
    %c0_7 = arith.constant 0 : index
    %c0_8 = arith.constant 0 : index
    %11 = vector.load %arg3[%c1, %c0_7, %c0_8] : memref<3x192x64xbf16, #tpu.memory_space<vmem>>, vector<1x192x64xbf16>
    %12 = vector.shape_cast %11 : vector<1x192x64xbf16> to vector<192x64xbf16>
    %cst_9 = arith.constant dense<0.000000e+00> : vector<128x64xf32>
    %13 = tpu.matmul %10, %12, %cst_9 {dimension_numbers = #tpu.dot_dimension_numbers<[1], [0], [0], [1], [0, 0, 1, 1], [], []>} : vector<128x192xbf16>, vector<192x64xbf16>, vector<128x64xf32> -> vector<128x64xf32>
    %14 = arith.addf %8, %13 : vector<128x64xf32>
    %15 = vector.extract_strided_slice %1 {offsets = [0, 2, 0], sizes = [8, 16, 192], strides = [1, 1, 1]} : vector<8x18x192xbf16> to vector<8x16x192xbf16>
    %16 = vector.shape_cast %15 : vector<8x16x192xbf16> to vector<128x192xbf16>
    %c2 = arith.constant 2 : index
    %c0_10 = arith.constant 0 : index
    %c0_11 = arith.constant 0 : index
    %17 = vector.load %arg3[%c2, %c0_10, %c0_11] : memref<3x192x64xbf16, #tpu.memory_space<vmem>>, vector<1x192x64xbf16>
    %18 = vector.shape_cast %17 : vector<1x192x64xbf16> to vector<192x64xbf16>
    %cst_12 = arith.constant dense<0.000000e+00> : vector<128x64xf32>
    %19 = tpu.matmul %16, %18, %cst_12 {dimension_numbers = #tpu.dot_dimension_numbers<[1], [0], [0], [1], [0, 0, 1, 1], [], []>} : vector<128x192xbf16>, vector<192x64xbf16>, vector<128x64xf32> -> vector<128x64xf32>
    %20 = arith.addf %14, %19 : vector<128x64xf32>
    %c0_13 = arith.constant 0 : index
    %c0_14 = arith.constant 0 : index
    %21 = vector.load %arg4[%c0_13, %c0_14] : memref<1x64xf32, #tpu.memory_space<vmem>>, vector<1x64xf32>
    %22 = vector.broadcast %21 : vector<1x64xf32> to vector<128x64xf32>
    %23 = arith.mulf %20, %22 : vector<128x64xf32>
    %c0_15 = arith.constant 0 : index
    %c0_16 = arith.constant 0 : index
    %24 = vector.load %arg5[%c0_15, %c0_16] : memref<1x64xf32, #tpu.memory_space<vmem>>, vector<1x64xf32>
    %25 = vector.broadcast %24 : vector<1x64xf32> to vector<128x64xf32>
    %26 = arith.addf %23, %25 : vector<128x64xf32>
    %27 = arith.negf %26 : vector<128x64xf32>
    %28 = math.exp %27 : vector<128x64xf32>
    %cst_17 = arith.constant 1.000000e+00 : f32
    %29 = vector.broadcast %cst_17 : f32 to vector<128x64xf32>
    %30 = arith.addf %29, %28 : vector<128x64xf32>
    %31 = arith.divf %29, %30 : vector<128x64xf32>
    %32 = arith.mulf %26, %31 : vector<128x64xf32>
    %33 = arith.truncf %32 : vector<128x64xf32> to vector<128x64xbf16>
    %c0_18 = arith.constant 0 : index
    %c0_19 = arith.constant 0 : index
    %34 = vector.load %arg6[%c0_18, %c0_19] : memref<64x128xbf16, #tpu.memory_space<vmem>>, vector<64x128xbf16>
    %cst_20 = arith.constant dense<0.000000e+00> : vector<128x128xf32>
    %35 = tpu.matmul %33, %34, %cst_20 {dimension_numbers = #tpu.dot_dimension_numbers<[1], [0], [0], [1], [0, 0, 1, 1], [], []>} : vector<128x64xbf16>, vector<64x128xbf16>, vector<128x128xf32> -> vector<128x128xf32>
    %c0_21 = arith.constant 0 : index
    %c0_22 = arith.constant 0 : index
    %36 = vector.load %arg7[%c0_21, %c0_22] : memref<1x128xf32, #tpu.memory_space<vmem>>, vector<1x128xf32>
    %37 = vector.broadcast %36 : vector<1x128xf32> to vector<128x128xf32>
    %38 = arith.addf %35, %37 : vector<128x128xf32>
    %39 = vector.shape_cast %38 : vector<128x128xf32> to vector<8x16x128xf32>
    %c0_23 = arith.constant 0 : index
    %c0_24 = arith.constant 0 : index
    %c0_25 = arith.constant 0 : index
    %c0_26 = arith.constant 0 : index
    %40 = vector.load %arg8[%c0_23, %c0_24, %c0_25, %c0_26] : memref<1x8x16x128xf32, #tpu.memory_space<vmem>>, vector<1x8x16x128xf32>
    %41 = vector.shape_cast %40 : vector<1x8x16x128xf32> to vector<8x16x128xf32>
    %42 = vector.shape_cast %39 : vector<8x16x128xf32> to vector<1x8x16x128xf32>
    tpu.vector_store %arg8[%c0_23, %c0_24, %c0_25, %c0_26], %42 {strides = array<i32>} : memref<1x8x16x128xf32, #tpu.memory_space<vmem>>, vector<1x8x16x128xf32>,
    return
  }
  func.func @transform_0(%arg0: i32, %arg1: i32) -> (i32, i32, i32, i32) {
    %c0_i32 = arith.constant 0 : i32
    %c0_i32_0 = arith.constant 0 : i32
    %c0_i32_1 = arith.constant 0 : i32
    return %arg0, %arg1, %c0_i32, %c0_i32_0 : i32, i32, i32, i32
  }
  func.func @transform_1(%arg0: i32, %arg1: i32) -> (i32, i32, i32) {
    %c0_i32 = arith.constant 0 : i32
    %c0_i32_0 = arith.constant 0 : i32
    %c0_i32_1 = arith.constant 0 : i32
    %c0_i32_2 = arith.constant 0 : i32
    return %c0_i32, %c0_i32_0, %c0_i32_1 : i32, i32, i32
  }
  func.func @transform_2(%arg0: i32, %arg1: i32) -> (i32, i32) {
    %c0_i32 = arith.constant 0 : i32
    %c0_i32_0 = arith.constant 0 : i32
    %c0_i32_1 = arith.constant 0 : i32
    return %c0_i32, %c0_i32_0 : i32, i32
  }
  func.func @transform_3(%arg0: i32, %arg1: i32) -> (i32, i32) {
    %c0_i32 = arith.constant 0 : i32
    %c0_i32_0 = arith.constant 0 : i32
    %c0_i32_1 = arith.constant 0 : i32
    return %c0_i32, %c0_i32_0 : i32, i32
  }
  func.func @transform_4(%arg0: i32, %arg1: i32) -> (i32, i32) {
    %c0_i32 = arith.constant 0 : i32
    %c0_i32_0 = arith.constant 0 : i32
    %c0_i32_1 = arith.constant 0 : i32
    return %c0_i32, %c0_i32_0 : i32, i32
  }
  func.func @transform_5(%arg0: i32, %arg1: i32) -> (i32, i32) {
    %c0_i32 = arith.constant 0 : i32
    %c0_i32_0 = arith.constant 0 : i32
    %c0_i32_1 = arith.constant 0 : i32
    return %c0_i32, %c0_i32_0 : i32, i32
  }
  func.func @transform_6(%arg0: i32, %arg1: i32) -> (i32, i32, i32, i32) {
    %c0_i32 = arith.constant 0 : i32
    %c0_i32_0 = arith.constant 0 : i32
    %c0_i32_1 = arith.constant 0 : i32
    return %arg0, %arg1, %c0_i32, %c0_i32_0 : i32, i32, i32, i32
  }
}

</mosaic_0001>

<llo_original>
// kernel: _lambda_.3
$region0: #{_lambda_.3}
  #allocation0 [shape = 'u32[]', space=smem, size = 0x4, offset = 0x4, fixed_abs, tag = 'smem constant byte address 0x4 - core index']
  #allocation1 [shape = 'u32[72,128]{1,0:T(1,128)}', space=vmem, size = 0x9000, scoped, tag = 'internal scratch']
  %s0 = inlined_call_operand.vmem [shape: bf16[512,4], index: 0, kind: input, shape index: {}]
  %s1 = inlined_call_operand.vmem [shape: bf16[4,32], index: 1, kind: input, shape index: {}]
  %s2 = inlined_call_operand.vmem [shape: f32[1,32], index: 2, kind: input, shape index: {}]
  %s3 = inlined_call_operand.vmem [shape: f32[1,32], index: 3, kind: input, shape index: {}]
  %s4 = inlined_call_operand.vmem [shape: bf16[512,32], index: 4, kind: output, shape index: {}]
  %s5 = sld [smem:[#allocation0]]
  $region49: #{_lambda_.3} parent=0
    _
  %s7 = ssub.s32 1, %s5
  %s8 = scalar_select 0, %s7, %s5
  loop: start=0, step=1, limit=4
  $region2: #{_lambda_.3} parent=0 // loop_pre_header
    _
  $region3: #{_lambda_.3} parent=0 // loop_header
    %s10 = sphi 0, %s14
    %p11 = scmp.ge.s32.totalorder %s10, 4
    %s20 = sphi 0, %s22
    %s23 = sphi 0, %s20
    %s24 = sphi 0, %s23
    %s40 = sphi 0, %s24
    %s44 = sphi 0, %s44
    %s46 = sphi 0, %s44
    %s47 = sphi 0, %s46
    %s61 = sphi 0, %s47
    %s65 = sphi 0, %s65
    %s67 = sphi 0, %s65
    %s68 = sphi 0, %s67
    %s82 = sphi 0, %s68
    %s86 = sphi 0, %s86
    %s88 = sphi 0, %s86
    %s89 = sphi 0, %s88
    %s103 = sphi 0, %s89
    %s109 = sphi 0, %s111
    %s112 = sphi 0, %s109
    %s113 = sphi 0, %s112
    %s129 = sphi 0, %s113
  $region4: #{_lambda_.3} parent=0 // loop_header_branch
    %13 = sbr.rel (%p11) target = $region8
  $region5: #{_lambda_.3} parent=0 // loop_body
    %s15 = ssub.s32 %s10, 1
    %s16 = ssub.s32 %s10, 2
    %s17 = sadd.s32 %s10, 1
    %s18 = ssub.s32 %s10, %s17
    %p19 = scmp.eq.s32.totalorder %s18, 0
    %s21 = sadd.s32 %s20, 1
    %s22 = scalar_select %p19, %s20, %s21
    %p25 = pneg %p19
    %p26 = scmp.eq.s32.totalorder %s10, 1
    %p27 = por %p25, %p26
    %p28 = scmp.ne.s32.totalorder %s20, %s23
    %p29 = scmp.eq.s32.totalorder %s10, 0
    %p30 = por %p28, %p29
    %p31 = scmp.ne.s32.totalorder %s20, %s23
    %p32 = scmp.eq.s32.totalorder %s15, 1
    %p33 = por %p31, %p32
    %p34 = scmp.ne.s32.totalorder %s23, %s24
    %p35 = scmp.eq.s32.totalorder %s15, 0
    %p36 = por %p34, %p35
    %p37 = scmp.ne.s32.totalorder %s23, %s24
    %p38 = scmp.eq.s32.totalorder %s16, 1
    %p39 = por %p37, %p38
    %p41 = scmp.ne.s32.totalorder %s24, %s40
    %p42 = scmp.eq.s32.totalorder %s16, 0
    %p43 = por %p41, %p42
    %s45 = sadd.s32 %s44, 1
    %p48 = scmp.eq.s32.totalorder %s10, 1
    %p49 = scmp.ne.s32.totalorder %s44, %s46
    %p50 = scmp.eq.s32.totalorder %s10, 0
    %p51 = por %p49, %p50
    %p52 = scmp.ne.s32.totalorder %s44, %s46
    %p53 = scmp.eq.s32.totalorder %s15, 1
    %p54 = por %p52, %p53
    %p55 = scmp.ne.s32.totalorder %s46, %s47
    %p56 = scmp.eq.s32.totalorder %s15, 0
    %p57 = por %p55, %p56
    %p58 = scmp.ne.s32.totalorder %s46, %s47
    %p59 = scmp.eq.s32.totalorder %s16, 1
    %p60 = por %p58, %p59
    %p62 = scmp.ne.s32.totalorder %s47, %s61
    %p63 = scmp.eq.s32.totalorder %s16, 0
    %p64 = por %p62, %p63
    %s66 = sadd.s32 %s65, 1
    %p69 = scmp.eq.s32.totalorder %s10, 1
    %p70 = scmp.ne.s32.totalorder %s65, %s67
    %p71 = scmp.eq.s32.totalorder %s10, 0
    %p72 = por %p70, %p71
    %p73 = scmp.ne.s32.totalorder %s65, %s67
    %p74 = scmp.eq.s32.totalorder %s15, 1
    %p75 = por %p73, %p74
    %p76 = scmp.ne.s32.totalorder %s67, %s68
    %p77 = scmp.eq.s32.totalorder %s15, 0
    %p78 = por %p76, %p77
    %p79 = scmp.ne.s32.totalorder %s67, %s68
    %p80 = scmp.eq.s32.totalorder %s16, 1
    %p81 = por %p79, %p80
    %p83 = scmp.ne.s32.totalorder %s68, %s82
    %p84 = scmp.eq.s32.totalorder %s16, 0
    %p85 = por %p83, %p84
    %s87 = sadd.s32 %s86, 1
    %p90 = scmp.eq.s32.totalorder %s10, 1
    %p91 = scmp.ne.s32.totalorder %s86, %s88
    %p92 = scmp.eq.s32.totalorder %s10, 0
    %p93 = por %p91, %p92
    %p94 = scmp.ne.s32.totalorder %s86, %s88
    %p95 = scmp.eq.s32.totalorder %s15, 1
    %p96 = por %p94, %p95
    %p97 = scmp.ne.s32.totalorder %s88, %s89
    %p98 = scmp.eq.s32.totalorder %s15, 0
    %p99 = por %p97, %p98
    %p100 = scmp.ne.s32.totalorder %s88, %s89
    %p101 = scmp.eq.s32.totalorder %s16, 1
    %p102 = por %p100, %p101
    %p104 = scmp.ne.s32.totalorder %s89, %s103
    %p105 = scmp.eq.s32.totalorder %s16, 0
    %p106 = por %p104, %p105
    %s107 = ssub.s32 %s10, %s17
    %p108 = scmp.eq.s32.totalorder %s107, 0
    %s110 = sadd.s32 %s109, 1
    %s111 = scalar_select %p108, %s109, %s110
    %p114 = pneg %p108
    %p115 = scmp.eq.s32.totalorder %s10, 1
    %p116 = por %p114, %p115
    %p117 = scmp.ne.s32.totalorder %s109, %s112
    %p118 = scmp.eq.s32.totalorder %s10, 0
    %p119 = por %p117, %p118
    %p120 = scmp.ne.s32.totalorder %s109, %s112
    %p121 = scmp.eq.s32.totalorder %s15, 1
    %p122 = por %p120, %p121
    %p123 = scmp.ne.s32.totalorder %s112, %s113
    %p124 = scmp.eq.s32.totalorder %s15, 0
    %p125 = por %p123, %p124
    %p126 = scmp.ne.s32.totalorder %s112, %s113
    %p127 = scmp.eq.s32.totalorder %s16, 1
    %p128 = por %p126, %p127
    %p130 = scmp.ne.s32.totalorder %s113, %s129
    %p131 = scmp.eq.s32.totalorder %s16, 0
    %p132 = por %p130, %p131
    %p133 = scmp.le.s32.totalorder 1, %s10
    %p134 = scmp.lt.s32.totalorder %s10, 3
    %p135 = pnand %p133, %p134
    %p136 = pneg %p135
    // Predicated region
    $region9: #{_lambda_.3} parent=5 // pred_check
      _
    $region10: #{_lambda_.3} parent=5 // pred_check_branch
      %138 = sbr.rel (%p135) target = $region12
    $region11: #{_lambda_.3} parent=5 // pred_region
      %s139 = ssub.s32 %s10, 1
      // Predicated region
      $region13: #{_lambda_.3} parent=11 // pred_check
        %p140 = pneg %p57
      $region14: #{_lambda_.3} parent=11 // pred_check_branch
        %142 = sbr.rel (%p140) target = $region16
      $region15: #{_lambda_.3} parent=11 // pred_region
        _
      $region16: #{_lambda_.3} parent=11 // pred_fallthru
        _
      // Predicated region
      $region17: #{_lambda_.3} parent=11 // pred_check
        %p143 = pneg %p78
      $region18: #{_lambda_.3} parent=11 // pred_check_branch
        %145 = sbr.rel (%p143) target = $region20
      $region19: #{_lambda_.3} parent=11 // pred_region
        _
      $region20: #{_lambda_.3} parent=11 // pred_fallthru
        _
      // Predicated region
      $region21: #{_lambda_.3} parent=11 // pred_check
        %p146 = pneg %p99
      $region22: #{_lambda_.3} parent=11 // pred_check_branch
        %148 = sbr.rel (%p146) target = $region24
      $region23: #{_lambda_.3} parent=11 // pred_region
        _
      $region24: #{_lambda_.3} parent=11 // pred_fallthru
        _
    $region12: #{_lambda_.3} parent=5 // pred_fallthru
      _
    %p149 = scmp.lt.s32.totalorder %s10, 2
    // Predicated region
    $region25: #{_lambda_.3} parent=5 // pred_check
      %p150 = pneg %p149
    $region26: #{_lambda_.3} parent=5 // pred_check_branch
      %152 = sbr.rel (%p150) target = $region28
    $region27: #{_lambda_.3} parent=5 // pred_region
      // Predicated region
      $region29: #{_lambda_.3} parent=27 // pred_check
        %p153 = pneg %p30
      $region30: #{_lambda_.3} parent=27 // pred_check_branch
        %155 = sbr.rel (%p153) target = $region32
      $region31: #{_lambda_.3} parent=27 // pred_region
        %s156 = smul.u32 32, %s10
        %p157 = scmp.lt.s32.totalorder %s156, 63
        %s158 = scalar_select %p157, %s156, 63
        %s159 = smul.addr %s158, 4
        %s160 = scalar_lea.vmem %s0, %s159
        %s161 = smul.u32 32, %s10
      $region32: #{_lambda_.3} parent=27 // pred_fallthru
        _
    $region28: #{_lambda_.3} parent=5 // pred_fallthru
      _
    %p162 = scmp.le.s32.totalorder 1, %s10
    %p163 = scmp.lt.s32.totalorder %s10, 3
    %p164 = pnand %p162, %p163
    %p165 = pneg %p164
    // Predicated region
    $region33: #{_lambda_.3} parent=5 // pred_check
      _
    $region34: #{_lambda_.3} parent=5 // pred_check_branch
      %167 = sbr.rel (%p164) target = $region36
    $region35: #{_lambda_.3} parent=5 // pred_region
      %s168 = ssub.s32 %s10, 1
      %s169 = smul.u32 32, %s15
      %p170 = scmp.lt.s32.totalorder %s169, 63
      %s171 = scalar_select %p170, %s169, 63
      %s172 = smul.addr %s171, 4
      %s173 = scalar_lea.vmem %s0, %s172
      %p174 = pneg %p36
      %p175 = pneg %p33
      %p176 = pneg %p57
      %p177 = pneg %p54
      %p178 = pneg %p78
      %p179 = pneg %p75
      %p180 = pneg %p99
      %p181 = pneg %p96
      %p182 = pneg %p125
      %p183 = pneg %p122
      %s184 = smul.u32 32, %s15
      %p185 = scmp.lt.s32.totalorder %s184, 63
      %s186 = scalar_select %p185, %s184, 63
      %s187 = smul.addr %s186, 4
      %s188 = scalar_lea.vmem %s4, %s187
      %s189 = smul.u32 32, %s15
      %p190 = scmp.lt.s32.totalorder %s189, 63
      %s191 = scalar_select %p190, %s189, 63
      %s192 = smul.addr %s191, 4
      %s193 = scalar_lea.vmem %s0, %s192
      %s194 = smul.u32 32, %s15
      %s195 = smul.u32 32, %s15
      %p196 = scmp.lt.s32.totalorder %s195, 63
      %s197 = scalar_select %p196, %s195, 63
      %s198 = smul.addr %s197, 4
      %s199 = scalar_lea.vmem %s4, %s198
      %s200 = smul.u32 32, %s15
      %v202 = vld [vmem:[%s193] sm:$0xf]
      %v203 = vld [vmem:[%s193 + $0x4] sm:$0xf]
      %v204 = vld [vmem:[%s193 + $0x8] sm:$0xf]
      %v205 = vld [vmem:[%s193 + $0xc] sm:$0xf]
      %v206 = vld [vmem:[%s193 + $0x10] sm:$0xf]
      %v207 = vld [vmem:[%s193 + $0x14] sm:$0xf]
      %v208 = vld [vmem:[%s193 + $0x18] sm:$0xf]
      %v209 = vld [vmem:[%s193 + $0x1c] sm:$0xf]
      %v210 = vld [vmem:[%s193 + $0x20] sm:$0xf]
      %v211 = vld [vmem:[%s193 + $0x24] sm:$0xf]
      %v212 = vld [vmem:[%s193 + $0x28] sm:$0xf]
      %v213 = vld [vmem:[%s193 + $0x2c] sm:$0xf]
      %v214 = vld [vmem:[%s193 + $0x30] sm:$0xf]
      %v215 = vld [vmem:[%s193 + $0x34] sm:$0xf]
      %v216 = vld [vmem:[%s193 + $0x38] sm:$0xf]
      %v217 = vld [vmem:[%s193 + $0x3c] sm:$0xf]
      %v218 = vld [vmem:[%s193 + $0x40] sm:$0xf]
      %v219 = vld [vmem:[%s193 + $0x44] sm:$0xf]
      %v220 = vld [vmem:[%s193 + $0x48] sm:$0xf]
      %v221 = vld [vmem:[%s193 + $0x4c] sm:$0xf]
      %v222 = vld [vmem:[%s193 + $0x50] sm:$0xf]
      %v223 = vld [vmem:[%s193 + $0x54] sm:$0xf]
      %v224 = vld [vmem:[%s193 + $0x58] sm:$0xf]
      %v225 = vld [vmem:[%s193 + $0x5c] sm:$0xf]
      %v226 = vld [vmem:[%s193 + $0x60] sm:$0xf]
      %v227 = vld [vmem:[%s193 + $0x64] sm:$0xf]
      %v228 = vld [vmem:[%s193 + $0x68] sm:$0xf]
      %v229 = vld [vmem:[%s193 + $0x6c] sm:$0xf]
      %v230 = vld [vmem:[%s193 + $0x70] sm:$0xf]
      %v231 = vld [vmem:[%s193 + $0x74] sm:$0xf]
      %v232 = vld [vmem:[%s193 + $0x78] sm:$0xf]
      %v233 = vld [vmem:[%s193 + $0x7c] sm:$0xf]
      %v234 = vld [vmem:[%s1] sm:$0x3]
      %v267 = vunpack.c.l.b16 %v202
      %v268 = vunpack.c.l.b16 %v203
      %v269 = vunpack.c.l.b16 %v204
      %v270 = vunpack.c.l.b16 %v205
      %v271 = vunpack.c.l.b16 %v206
      %v272 = vunpack.c.l.b16 %v207
      %v273 = vunpack.c.l.b16 %v208
      %v274 = vunpack.c.l.b16 %v209
      %v275 = vunpack.c.l.b16 %v210
      %v276 = vunpack.c.l.b16 %v211
      %v277 = vunpack.c.l.b16 %v212
      %v278 = vunpack.c.l.b16 %v213
      %v279 = vunpack.c.l.b16 %v214
      %v280 = vunpack.c.l.b16 %v215
      %v281 = vunpack.c.l.b16 %v216
      %v282 = vunpack.c.l.b16 %v217
      %v283 = vunpack.c.l.b16 %v218
      %v284 = vunpack.c.l.b16 %v219
      %v285 = vunpack.c.l.b16 %v220
      %v286 = vunpack.c.l.b16 %v221
      %v287 = vunpack.c.l.b16 %v222
      %v288 = vunpack.c.l.b16 %v223
      %v289 = vunpack.c.l.b16 %v224
      %v290 = vunpack.c.l.b16 %v225
      %v291 = vunpack.c.l.b16 %v226
      %v292 = vunpack.c.l.b16 %v227
      %v293 = vunpack.c.l.b16 %v228
      %v294 = vunpack.c.l.b16 %v229
      %v295 = vunpack.c.l.b16 %v230
      %v296 = vunpack.c.l.b16 %v231
      %v297 = vunpack.c.l.b16 %v232
      %v298 = vunpack.c.l.b16 %v233
      %v299 = vpack.c.b16 %v268, %v267
      %v300 = vpack.c.b16 %v270, %v269
      %v301 = vpack.c.b16 %v272, %v271
      %v302 = vpack.c.b16 %v274, %v273
      %v303 = vpack.c.b16 %v276, %v275
      %v304 = vpack.c.b16 %v278, %v277
      %v305 = vpack.c.b16 %v280, %v279
      %v306 = vpack.c.b16 %v282, %v281
      %v307 = vpack.c.b16 %v284, %v283
      %v308 = vpack.c.b16 %v286, %v285
      %v309 = vpack.c.b16 %v288, %v287
      %v310 = vpack.c.b16 %v290, %v289
      %v311 = vpack.c.b16 %v292, %v291
      %v312 = vpack.c.b16 %v294, %v293
      %v313 = vpack.c.b16 %v296, %v295
      %v314 = vpack.c.b16 %v298, %v297
      %vm315 = vcmask 31744
      %v317 = vsel %vm315, %v299, 0
      %v320 = vsel %vm315, %v300, 0
      %v323 = vsel %vm315, %v301, 0
      %v326 = vsel %vm315, %v302, 0
      %v329 = vsel %vm315, %v303, 0
      %v332 = vsel %vm315, %v304, 0
      %v335 = vsel %vm315, %v305, 0
      %v338 = vsel %vm315, %v306, 0
      %v341 = vsel %vm315, %v307, 0
      %v344 = vsel %vm315, %v308, 0
      %v347 = vsel %vm315, %v309, 0
      %v350 = vsel %vm315, %v310, 0
      %v353 = vsel %vm315, %v311, 0
      %v356 = vsel %vm315, %v312, 0
      %v359 = vsel %vm315, %v313, 0
      %v362 = vsel %vm315, %v314, 0
      %vm364 = vcmask 1041408
      %v366 = vsel %vm364, %v234, 0
      %368 = vmatpush.bf16.msra.mxu0 0
      %369 = vmatpush.bf16.msra.mxu0 0
      %370 = vmatpush.bf16.msra.mxu0 0
      %371 = vmatpush.bf16.msra.mxu0 0
      %372 = vmatpush.bf16.msra.mxu0 0
      %373 = vmatpush.bf16.msra.mxu0 0
      %374 = vmatpush.bf16.msra.mxu0 0
      %375 = vmatpush.bf16.msra.mxu0 %v366
      %376 = vmatmul.bf16.gmra.mxu0 %v317
      %v377 = vpop.f32.mrf.mxu0
      %v378 = vadd.f32 0.0, %v377
      %v379 = vpop.f32.mrf.mxu0
      %v380 = vadd.f32 0.0, %v379
      %381 = vmatmul.bf16.gmra.mxu0 %v320
      %v382 = vpop.f32.mrf.mxu0
      %v383 = vadd.f32 0.0, %v382
      %v384 = vpop.f32.mrf.mxu0
      %v385 = vadd.f32 0.0, %v384
      %386 = vmatmul.bf16.gmra.mxu0 %v323
      %v387 = vpop.f32.mrf.mxu0
      %v388 = vadd.f32 0.0, %v387
      %v389 = vpop.f32.mrf.mxu0
      %v390 = vadd.f32 0.0, %v389
      %391 = vmatmul.bf16.gmra.mxu0 %v326
      %v392 = vpop.f32.mrf.mxu0
      %v393 = vadd.f32 0.0, %v392
      %v394 = vpop.f32.mrf.mxu0
      %v395 = vadd.f32 0.0, %v394
      %396 = vmatmul.bf16.gmra.mxu0 %v329
      %v397 = vpop.f32.mrf.mxu0
      %v398 = vadd.f32 0.0, %v397
      %v399 = vpop.f32.mrf.mxu0
      %v400 = vadd.f32 0.0, %v399
      %401 = vmatmul.bf16.gmra.mxu0 %v332
      %v402 = vpop.f32.mrf.mxu0
      %v403 = vadd.f32 0.0, %v402
      %v404 = vpop.f32.mrf.mxu0
      %v405 = vadd.f32 0.0, %v404
      %406 = vmatmul.bf16.gmra.mxu0 %v335
      %v407 = vpop.f32.mrf.mxu0
      %v408 = vadd.f32 0.0, %v407
      %v409 = vpop.f32.mrf.mxu0
      %v410 = vadd.f32 0.0, %v409
      %411 = vmatmul.bf16.gmra.mxu0 %v338
      %v412 = vpop.f32.mrf.mxu0
      %v413 = vadd.f32 0.0, %v412
      %v414 = vpop.f32.mrf.mxu0
      %v415 = vadd.f32 0.0, %v414
      %416 = vmatmul.bf16.gmra.mxu0 %v341
      %v417 = vpop.f32.mrf.mxu0
      %v418 = vadd.f32 0.0, %v417
      %v419 = vpop.f32.mrf.mxu0
      %v420 = vadd.f32 0.0, %v419
      %421 = vmatmul.bf16.gmra.mxu0 %v344
      %v422 = vpop.f32.mrf.mxu0
      %v423 = vadd.f32 0.0, %v422
      %v424 = vpop.f32.mrf.mxu0
      %v425 = vadd.f32 0.0, %v424
      %426 = vmatmul.bf16.gmra.mxu0 %v347
      %v427 = vpop.f32.mrf.mxu0
      %v428 = vadd.f32 0.0, %v427
      %v429 = vpop.f32.mrf.mxu0
      %v430 = vadd.f32 0.0, %v429
      %431 = vmatmul.bf16.gmra.mxu0 %v350
      %v432 = vpop.f32.mrf.mxu0
      %v433 = vadd.f32 0.0, %v432
      %v434 = vpop.f32.mrf.mxu0
      %v435 = vadd.f32 0.0, %v434
      %436 = vmatmul.bf16.gmra.mxu0 %v353
      %v437 = vpop.f32.mrf.mxu0
      %v438 = vadd.f32 0.0, %v437
      %v439 = vpop.f32.mrf.mxu0
      %v440 = vadd.f32 0.0, %v439
      %441 = vmatmul.bf16.gmra.mxu0 %v356
      %v442 = vpop.f32.mrf.mxu0
      %v443 = vadd.f32 0.0, %v442
      %v444 = vpop.f32.mrf.mxu0
      %v445 = vadd.f32 0.0, %v444
      %446 = vmatmul.bf16.gmra.mxu0 %v359
      %v447 = vpop.f32.mrf.mxu0
      %v448 = vadd.f32 0.0, %v447
      %v449 = vpop.f32.mrf.mxu0
      %v450 = vadd.f32 0.0, %v449
      %451 = vmatmul.bf16.gmra.mxu0 %v362
      %v452 = vpop.f32.mrf.mxu0
      %v453 = vadd.f32 0.0, %v452
      %v454 = vpop.f32.mrf.mxu0
      %v455 = vadd.f32 0.0, %v454
      %456 = vdwg.mxu0
      %v457 = vld [vmem:[%s2] sm:$0x1]
      %v459 = vperm.slane %v457, 0
      %v461 = vmul.f32 %v378, %v459
      %v462 = vmul.f32 %v380, %v459
      %v463 = vmul.f32 %v383, %v459
      %v464 = vmul.f32 %v385, %v459
      %v465 = vmul.f32 %v388, %v459
      %v466 = vmul.f32 %v390, %v459
      %v467 = vmul.f32 %v393, %v459
      %v468 = vmul.f32 %v395, %v459
      %v469 = vmul.f32 %v398, %v459
      %v470 = vmul.f32 %v400, %v459
      %v471 = vmul.f32 %v403, %v459
      %v472 = vmul.f32 %v405, %v459
      %v473 = vmul.f32 %v408, %v459
      %v474 = vmul.f32 %v410, %v459
      %v475 = vmul.f32 %v413, %v459
      %v476 = vmul.f32 %v415, %v459
      %v477 = vmul.f32 %v418, %v459
      %v478 = vmul.f32 %v420, %v459
      %v479 = vmul.f32 %v423, %v459
      %v480 = vmul.f32 %v425, %v459
      %v481 = vmul.f32 %v428, %v459
      %v482 = vmul.f32 %v430, %v459
      %v483 = vmul.f32 %v433, %v459
      %v484 = vmul.f32 %v435, %v459
      %v485 = vmul.f32 %v438, %v459
      %v486 = vmul.f32 %v440, %v459
      %v487 = vmul.f32 %v443, %v459
      %v488 = vmul.f32 %v445, %v459
      %v489 = vmul.f32 %v448, %v459
      %v490 = vmul.f32 %v450, %v459
      %v491 = vmul.f32 %v453, %v459
      %v492 = vmul.f32 %v455, %v459
      %v493 = vld [vmem:[%s3] sm:$0x1]
      %v495 = vperm.slane %v493, 0
      %v497 = vadd.f32 %v461, %v495
      %v498 = vadd.f32 %v462, %v495
      %v499 = vadd.f32 %v463, %v495
      %v500 = vadd.f32 %v464, %v495
      %v501 = vadd.f32 %v465, %v495
      %v502 = vadd.f32 %v466, %v495
      %v503 = vadd.f32 %v467, %v495
      %v504 = vadd.f32 %v468, %v495
      %v505 = vadd.f32 %v469, %v495
      %v506 = vadd.f32 %v470, %v495
      %v507 = vadd.f32 %v471, %v495
      %v508 = vadd.f32 %v472, %v495
      %v509 = vadd.f32 %v473, %v495
      %v510 = vadd.f32 %v474, %v495
      %v511 = vadd.f32 %v475, %v495
      %v512 = vadd.f32 %v476, %v495
      %v513 = vadd.f32 %v477, %v495
      %v514 = vadd.f32 %v478, %v495
      %v515 = vadd.f32 %v479, %v495
      %v516 = vadd.f32 %v480, %v495
      %v517 = vadd.f32 %v481, %v495
      %v518 = vadd.f32 %v482, %v495
      %v519 = vadd.f32 %v483, %v495
      %v520 = vadd.f32 %v484, %v495
      %v521 = vadd.f32 %v485, %v495
      %v522 = vadd.f32 %v486, %v495
      %v523 = vadd.f32 %v487, %v495
      %v524 = vadd.f32 %v488, %v495
      %v525 = vadd.f32 %v489, %v495
      %v526 = vadd.f32 %v490, %v495
      %v527 = vadd.f32 %v491, %v495
      %v528 = vadd.f32 %v492, %v495
      %v529 = vxor.u32 %v497, 2147483648
      %v530 = vxor.u32 %v498, 2147483648
      %v531 = vxor.u32 %v499, 2147483648
      %v532 = vxor.u32 %v500, 2147483648
      %v533 = vxor.u32 %v501, 2147483648
      %v534 = vxor.u32 %v502, 2147483648
      %v535 = vxor.u32 %v503, 2147483648
      %v536 = vxor.u32 %v504, 2147483648
      %v537 = vxor.u32 %v505, 2147483648
      %v538 = vxor.u32 %v506, 2147483648
      %v539 = vxor.u32 %v507, 2147483648
      %v540 = vxor.u32 %v508, 2147483648
      %v541 = vxor.u32 %v509, 2147483648
      %v542 = vxor.u32 %v510, 2147483648
      %v543 = vxor.u32 %v511, 2147483648
      %v544 = vxor.u32 %v512, 2147483648
      %v545 = vxor.u32 %v513, 2147483648
      %v546 = vxor.u32 %v514, 2147483648
      %v547 = vxor.u32 %v515, 2147483648
      %v548 = vxor.u32 %v516, 2147483648
      %v549 = vxor.u32 %v517, 2147483648
      %v550 = vxor.u32 %v518, 2147483648
      %v551 = vxor.u32 %v519, 2147483648
      %v552 = vxor.u32 %v520, 2147483648
      %v553 = vxor.u32 %v521, 2147483648
      %v554 = vxor.u32 %v522, 2147483648
      %v555 = vxor.u32 %v523, 2147483648
      %v556 = vxor.u32 %v524, 2147483648
      %v557 = vxor.u32 %v525, 2147483648
      %v558 = vxor.u32 %v526, 2147483648
      %v559 = vxor.u32 %v527, 2147483648
      %v560 = vxor.u32 %v528, 2147483648
      %v561 = vmul.f32 %v529, 1.442695
      %v562 = vpow.pop %v561
      %v563 = vmul.f32 %v530, 1.442695
      %v564 = vpow.pop %v563
      %v565 = vmul.f32 %v531, 1.442695
      %v566 = vpow.pop %v565
      %v567 = vmul.f32 %v532, 1.442695
      %v568 = vpow.pop %v567
      %v569 = vmul.f32 %v533, 1.442695
      %v570 = vpow.pop %v569
      %v571 = vmul.f32 %v534, 1.442695
      %v572 = vpow.pop %v571
      %v573 = vmul.f32 %v535, 1.442695
      %v574 = vpow.pop %v573
      %v575 = vmul.f32 %v536, 1.442695
      %v576 = vpow.pop %v575
      %v577 = vmul.f32 %v537, 1.442695
      %v578 = vpow.pop %v577
      %v579 = vmul.f32 %v538, 1.442695
      %v580 = vpow.pop %v579
      %v581 = vmul.f32 %v539, 1.442695
      %v582 = vpow.pop %v581
      %v583 = vmul.f32 %v540, 1.442695
      %v584 = vpow.pop %v583
      %v585 = vmul.f32 %v541, 1.442695
      %v586 = vpow.pop %v585
      %v587 = vmul.f32 %v542, 1.442695
      %v588 = vpow.pop %v587
      %v589 = vmul.f32 %v543, 1.442695
      %v590 = vpow.pop %v589
      %v591 = vmul.f32 %v544, 1.442695
      %v592 = vpow.pop %v591
      %v593 = vmul.f32 %v545, 1.442695
      %v594 = vpow.pop %v593
      %v595 = vmul.f32 %v546, 1.442695
      %v596 = vpow.pop %v595
      %v597 = vmul.f32 %v547, 1.442695
      %v598 = vpow.pop %v597
      %v599 = vmul.f32 %v548, 1.442695
      %v600 = vpow.pop %v599
      %v601 = vmul.f32 %v549, 1.442695
      %v602 = vpow.pop %v601
      %v603 = vmul.f32 %v550, 1.442695
      %v604 = vpow.pop %v603
      %v605 = vmul.f32 %v551, 1.442695
      %v606 = vpow.pop %v605
      %v607 = vmul.f32 %v552, 1.442695
      %v608 = vpow.pop %v607
      %v609 = vmul.f32 %v553, 1.442695
      %v610 = vpow.pop %v609
      %v611 = vmul.f32 %v554, 1.442695
      %v612 = vpow.pop %v611
      %v613 = vmul.f32 %v555, 1.442695
      %v614 = vpow.pop %v613
      %v615 = vmul.f32 %v556, 1.442695
      %v616 = vpow.pop %v615
      %v617 = vmul.f32 %v557, 1.442695
      %v618 = vpow.pop %v617
      %v619 = vmul.f32 %v558, 1.442695
      %v620 = vpow.pop %v619
      %v621 = vmul.f32 %v559, 1.442695
      %v622 = vpow.pop %v621
      %v623 = vmul.f32 %v560, 1.442695
      %v624 = vpow.pop %v623
      %v625 = vadd.f32 %v562, 1.0
      %v626 = vadd.f32 %v564, 1.0
      %v627 = vadd.f32 %v566, 1.0
      %v628 = vadd.f32 %v568, 1.0
      %v629 = vadd.f32 %v570, 1.0
      %v630 = vadd.f32 %v572, 1.0
      %v631 = vadd.f32 %v574, 1.0
      %v632 = vadd.f32 %v576, 1.0
      %v633 = vadd.f32 %v578, 1.0
      %v634 = vadd.f32 %v580, 1.0
      %v635 = vadd.f32 %v582, 1.0
      %v636 = vadd.f32 %v584, 1.0
      %v637 = vadd.f32 %v586, 1.0
      %v638 = vadd.f32 %v588, 1.0
      %v639 = vadd.f32 %v590, 1.0
      %v640 = vadd.f32 %v592, 1.0
      %v641 = vadd.f32 %v594, 1.0
      %v642 = vadd.f32 %v596, 1.0
      %v643 = vadd.f32 %v598, 1.0
      %v644 = vadd.f32 %v600, 1.0
      %v645 = vadd.f32 %v602, 1.0
      %v646 = vadd.f32 %v604, 1.0
      %v647 = vadd.f32 %v606, 1.0
      %v648 = vadd.f32 %v608, 1.0
      %v649 = vadd.f32 %v610, 1.0
      %v650 = vadd.f32 %v612, 1.0
      %v651 = vadd.f32 %v614, 1.0
      %v652 = vadd.f32 %v616, 1.0
      %v653 = vadd.f32 %v618, 1.0
      %v654 = vadd.f32 %v620, 1.0
      %v655 = vadd.f32 %v622, 1.0
      %v656 = vadd.f32 %v624, 1.0
      %v657 = vrcp.pop %v625
      %v658 = vmul.f32 %v625, %v657
      %v659 = vsub.f32 1.0, %v658
      %v660 = vmul.f32 %v657, %v659
      %v661 = vadd.f32 %v657, %v660
      %vm662 = vweird.f32 %v625
      %vm663 = vweird.f32 %v657
      %vm664 = vmor %vm662, %vm663
      %v665 = vsel %vm664, %v657, %v661
      %v666 = vand.u32 2147483647, %v625
      %vm667 = vcmp.eq.f32.partialorder %v666, 8.507059e+37
      %v668 = vand.u32 %v625, 2147483648
      %v669 = vor.u32 1.1754944e-38, %v668
      %v670 = vsel %vm667, %v669, %v665
      %v671 = vmul.f32 1.0, %v670
      %v672 = vrcp.pop %v626
      %v673 = vmul.f32 %v626, %v672
      %v674 = vsub.f32 1.0, %v673
      %v675 = vmul.f32 %v672, %v674
      %v676 = vadd.f32 %v672, %v675
      %vm677 = vweird.f32 %v626
      %vm678 = vweird.f32 %v672
      %vm679 = vmor %vm677, %vm678
      %v680 = vsel %vm679, %v672, %v676
      %v681 = vand.u32 2147483647, %v626
      %vm682 = vcmp.eq.f32.partialorder %v681, 8.507059e+37
      %v683 = vand.u32 %v626, 2147483648
      %v684 = vor.u32 1.1754944e-38, %v683
      %v685 = vsel %vm682, %v684, %v680
      %v686 = vmul.f32 1.0, %v685
      %v687 = vrcp.pop %v627
      %v688 = vmul.f32 %v627, %v687
      %v689 = vsub.f32 1.0, %v688
      %v690 = vmul.f32 %v687, %v689
      %v691 = vadd.f32 %v687, %v690
      %vm692 = vweird.f32 %v627
      %vm693 = vweird.f32 %v687
      %vm694 = vmor %vm692, %vm693
      %v695 = vsel %vm694, %v687, %v691
      %v696 = vand.u32 2147483647, %v627
      %vm697 = vcmp.eq.f32.partialorder %v696, 8.507059e+37
      %v698 = vand.u32 %v627, 2147483648
      %v699 = vor.u32 1.1754944e-38, %v698
      %v700 = vsel %vm697, %v699, %v695
      %v701 = vmul.f32 1.0, %v700
      %v702 = vrcp.pop %v628
      %v703 = vmul.f32 %v628, %v702
      %v704 = vsub.f32 1.0, %v703
      %v705 = vmul.f32 %v702, %v704
      %v706 = vadd.f32 %v702, %v705
      %vm707 = vweird.f32 %v628
      %vm708 = vweird.f32 %v702
      %vm709 = vmor %vm707, %vm708
      %v710 = vsel %vm709, %v702, %v706
      %v711 = vand.u32 2147483647, %v628
      %vm712 = vcmp.eq.f32.partialorder %v711, 8.507059e+37
      %v713 = vand.u32 %v628, 2147483648
      %v714 = vor.u32 1.1754944e-38, %v713
      %v715 = vsel %vm712, %v714, %v710
      %v716 = vmul.f32 1.0, %v715
      %v717 = vrcp.pop %v629
      %v718 = vmul.f32 %v629, %v717
      %v719 = vsub.f32 1.0, %v718
      %v720 = vmul.f32 %v717, %v719
      %v721 = vadd.f32 %v717, %v720
      %vm722 = vweird.f32 %v629
      %vm723 = vweird.f32 %v717
      %vm724 = vmor %vm722, %vm723
      %v725 = vsel %vm724, %v717, %v721
      %v726 = vand.u32 2147483647, %v629
      %vm727 = vcmp.eq.f32.partialorder %v726, 8.507059e+37
      %v728 = vand.u32 %v629, 2147483648
      %v729 = vor.u32 1.1754944e-38, %v728
      %v730 = vsel %vm727, %v729, %v725
      %v731 = vmul.f32 1.0, %v730
      %v732 = vrcp.pop %v630
      %v733 = vmul.f32 %v630, %v732
      %v734 = vsub.f32 1.0, %v733
      %v735 = vmul.f32 %v732, %v734
      %v736 = vadd.f32 %v732, %v735
      %vm737 = vweird.f32 %v630
      %vm738 = vweird.f32 %v732
      %vm739 = vmor %vm737, %vm738
      %v740 = vsel %vm739, %v732, %v736
      %v741 = vand.u32 2147483647, %v630
      %vm742 = vcmp.eq.f32.partialorder %v741, 8.507059e+37
      %v743 = vand.u32 %v630, 2147483648
      %v744 = vor.u32 1.1754944e-38, %v743
      %v745 = vsel %vm742, %v744, %v740
      %v746 = vmul.f32 1.0, %v745
      %v747 = vrcp.pop %v631
      %v748 = vmul.f32 %v631, %v747
      %v749 = vsub.f32 1.0, %v748
      %v750 = vmul.f32 %v747, %v749
      %v751 = vadd.f32 %v747, %v750
      %vm752 = vweird.f32 %v631
      %vm753 = vweird.f32 %v747
      %vm754 = vmor %vm752, %vm753
      %v755 = vsel %vm754, %v747, %v751
      %v756 = vand.u32 2147483647, %v631
      %vm757 = vcmp.eq.f32.partialorder %v756, 8.507059e+37
      %v758 = vand.u32 %v631, 2147483648
      %v759 = vor.u32 1.1754944e-38, %v758
      %v760 = vsel %vm757, %v759, %v755
      %v761 = vmul.f32 1.0, %v760
      %v762 = vrcp.pop %v632
      %v763 = vmul.f32 %v632, %v762
      %v764 = vsub.f32 1.0, %v763
      %v765 = vmul.f32 %v762, %v764
      %v766 = vadd.f32 %v762, %v765
      %vm767 = vweird.f32 %v632
      %vm768 = vweird.f32 %v762
      %vm769 = vmor %vm767, %vm768
      %v770 = vsel %vm769, %v762, %v766
      %v771 = vand.u32 2147483647, %v632
      %vm772 = vcmp.eq.f32.partialorder %v771, 8.507059e+37
      %v773 = vand.u32 %v632, 2147483648
      %v774 = vor.u32 1.1754944e-38, %v773
      %v775 = vsel %vm772, %v774, %v770
      %v776 = vmul.f32 1.0, %v775
      %v777 = vrcp.pop %v633
      %v778 = vmul.f32 %v633, %v777
      %v779 = vsub.f32 1.0, %v778
      %v780 = vmul.f32 %v777, %v779
      %v781 = vadd.f32 %v777, %v780
      %vm782 = vweird.f32 %v633
      %vm783 = vweird.f32 %v777
      %vm784 = vmor %vm782, %vm783
      %v785 = vsel %vm784, %v777, %v781
      %v786 = vand.u32 2147483647, %v633
      %vm787 = vcmp.eq.f32.partialorder %v786, 8.507059e+37
      %v788 = vand.u32 %v633, 2147483648
      %v789 = vor.u32 1.1754944e-38, %v788
      %v790 = vsel %vm787, %v789, %v785
      %v791 = vmul.f32 1.0, %v790
      %v792 = vrcp.pop %v634
      %v793 = vmul.f32 %v634, %v792
      %v794 = vsub.f32 1.0, %v793
      %v795 = vmul.f32 %v792, %v794
      %v796 = vadd.f32 %v792, %v795
      %vm797 = vweird.f32 %v634
      %vm798 = vweird.f32 %v792
      %vm799 = vmor %vm797, %vm798
      %v800 = vsel %vm799, %v792, %v796
      %v801 = vand.u32 2147483647, %v634
      %vm802 = vcmp.eq.f32.partialorder %v801, 8.507059e+37
      %v803 = vand.u32 %v634, 2147483648
      %v804 = vor.u32 1.1754944e-38, %v803
      %v805 = vsel %vm802, %v804, %v800
      %v806 = vmul.f32 1.0, %v805
      %v807 = vrcp.pop %v635
      %v808 = vmul.f32 %v635, %v807
      %v809 = vsub.f32 1.0, %v808
      %v810 = vmul.f32 %v807, %v809
      %v811 = vadd.f32 %v807, %v810
      %vm812 = vweird.f32 %v635
      %vm813 = vweird.f32 %v807
      %vm814 = vmor %vm812, %vm813
      %v815 = vsel %vm814, %v807, %v811
      %v816 = vand.u32 2147483647, %v635
      %vm817 = vcmp.eq.f32.partialorder %v816, 8.507059e+37
      %v818 = vand.u32 %v635, 2147483648
      %v819 = vor.u32 1.1754944e-38, %v818
      %v820 = vsel %vm817, %v819, %v815
      %v821 = vmul.f32 1.0, %v820
      %v822 = vrcp.pop %v636
      %v823 = vmul.f32 %v636, %v822
      %v824 = vsub.f32 1.0, %v823
      %v825 = vmul.f32 %v822, %v824
      %v826 = vadd.f32 %v822, %v825
      %vm827 = vweird.f32 %v636
      %vm828 = vweird.f32 %v822
      %vm829 = vmor %vm827, %vm828
      %v830 = vsel %vm829, %v822, %v826
      %v831 = vand.u32 2147483647, %v636
      %vm832 = vcmp.eq.f32.partialorder %v831, 8.507059e+37
      %v833 = vand.u32 %v636, 2147483648
      %v834 = vor.u32 1.1754944e-38, %v833
      %v835 = vsel %vm832, %v834, %v830
      %v836 = vmul.f32 1.0, %v835
      %v837 = vrcp.pop %v637
      %v838 = vmul.f32 %v637, %v837
      %v839 = vsub.f32 1.0, %v838
      %v840 = vmul.f32 %v837, %v839
      %v841 = vadd.f32 %v837, %v840
      %vm842 = vweird.f32 %v637
      %vm843 = vweird.f32 %v837
      %vm844 = vmor %vm842, %vm843
      %v845 = vsel %vm844, %v837, %v841
      %v846 = vand.u32 2147483647, %v637
      %vm847 = vcmp.eq.f32.partialorder %v846, 8.507059e+37
      %v848 = vand.u32 %v637, 2147483648
      %v849 = vor.u32 1.1754944e-38, %v848
      %v850 = vsel %vm847, %v849, %v845
      %v851 = vmul.f32 1.0, %v850
      %v852 = vrcp.pop %v638
      %v853 = vmul.f32 %v638, %v852
      %v854 = vsub.f32 1.0, %v853
      %v855 = vmul.f32 %v852, %v854
      %v856 = vadd.f32 %v852, %v855
      %vm857 = vweird.f32 %v638
      %vm858 = vweird.f32 %v852
      %vm859 = vmor %vm857, %vm858
      %v860 = vsel %vm859, %v852, %v856
      %v861 = vand.u32 2147483647, %v638
      %vm862 = vcmp.eq.f32.partialorder %v861, 8.507059e+37
      %v863 = vand.u32 %v638, 2147483648
      %v864 = vor.u32 1.1754944e-38, %v863
      %v865 = vsel %vm862, %v864, %v860
      %v866 = vmul.f32 1.0, %v865
      %v867 = vrcp.pop %v639
      %v868 = vmul.f32 %v639, %v867
      %v869 = vsub.f32 1.0, %v868
      %v870 = vmul.f32 %v867, %v869
      %v871 = vadd.f32 %v867, %v870
      %vm872 = vweird.f32 %v639
      %vm873 = vweird.f32 %v867
      %vm874 = vmor %vm872, %vm873
      %v875 = vsel %vm874, %v867, %v871
      %v876 = vand.u32 2147483647, %v639
      %vm877 = vcmp.eq.f32.partialorder %v876, 8.507059e+37
      %v878 = vand.u32 %v639, 2147483648
      %v879 = vor.u32 1.1754944e-38, %v878
      %v880 = vsel %vm877, %v879, %v875
      %v881 = vmul.f32 1.0, %v880
      %v882 = vrcp.pop %v640
      %v883 = vmul.f32 %v640, %v882
      %v884 = vsub.f32 1.0, %v883
      %v885 = vmul.f32 %v882, %v884
      %v886 = vadd.f32 %v882, %v885
      %vm887 = vweird.f32 %v640
      %vm888 = vweird.f32 %v882
      %vm889 = vmor %vm887, %vm888
      %v890 = vsel %vm889, %v882, %v886
      %v891 = vand.u32 2147483647, %v640
      %vm892 = vcmp.eq.f32.partialorder %v891, 8.507059e+37
      %v893 = vand.u32 %v640, 2147483648
      %v894 = vor.u32 1.1754944e-38, %v893
      %v895 = vsel %vm892, %v894, %v890
      %v896 = vmul.f32 1.0, %v895
      %v897 = vrcp.pop %v641
      %v898 = vmul.f32 %v641, %v897
      %v899 = vsub.f32 1.0, %v898
      %v900 = vmul.f32 %v897, %v899
      %v901 = vadd.f32 %v897, %v900
      %vm902 = vweird.f32 %v641
      %vm903 = vweird.f32 %v897
      %vm904 = vmor %vm902, %vm903
      %v905 = vsel %vm904, %v897, %v901
      %v906 = vand.u32 2147483647, %v641
      %vm907 = vcmp.eq.f32.partialorder %v906, 8.507059e+37
      %v908 = vand.u32 %v641, 2147483648
      %v909 = vor.u32 1.1754944e-38, %v908
      %v910 = vsel %vm907, %v909, %v905
      %v911 = vmul.f32 1.0, %v910
      %v912 = vrcp.pop %v642
      %v913 = vmul.f32 %v642, %v912
      %v914 = vsub.f32 1.0, %v913
      %v915 = vmul.f32 %v912, %v914
      %v916 = vadd.f32 %v912, %v915
      %vm917 = vweird.f32 %v642
      %vm918 = vweird.f32 %v912
      %vm919 = vmor %vm917, %vm918
      %v920 = vsel %vm919, %v912, %v916
      %v921 = vand.u32 2147483647, %v642
      %vm922 = vcmp.eq.f32.partialorder %v921, 8.507059e+37
      %v923 = vand.u32 %v642, 2147483648
      %v924 = vor.u32 1.1754944e-38, %v923
      %v925 = vsel %vm922, %v924, %v920
      %v926 = vmul.f32 1.0, %v925
      %v927 = vrcp.pop %v643
      %v928 = vmul.f32 %v643, %v927
      %v929 = vsub.f32 1.0, %v928
      %v930 = vmul.f32 %v927, %v929
      %v931 = vadd.f32 %v927, %v930
      %vm932 = vweird.f32 %v643
      %vm933 = vweird.f32 %v927
      %vm934 = vmor %vm932, %vm933
      %v935 = vsel %vm934, %v927, %v931
      %v936 = vand.u32 2147483647, %v643
      %vm937 = vcmp.eq.f32.partialorder %v936, 8.507059e+37
      %v938 = vand.u32 %v643, 2147483648
      %v939 = vor.u32 1.1754944e-38, %v938
      %v940 = vsel %vm937, %v939, %v935
      %v941 = vmul.f32 1.0, %v940
      %v942 = vrcp.pop %v644
      %v943 = vmul.f32 %v644, %v942
      %v944 = vsub.f32 1.0, %v943
      %v945 = vmul.f32 %v942, %v944
      %v946 = vadd.f32 %v942, %v945
      %vm947 = vweird.f32 %v644
      %vm948 = vweird.f32 %v942
      %vm949 = vmor %vm947, %vm948
      %v950 = vsel %vm949, %v942, %v946
      %v951 = vand.u32 2147483647, %v644
      %vm952 = vcmp.eq.f32.partialorder %v951, 8.507059e+37
      %v953 = vand.u32 %v644, 2147483648
      %v954 = vor.u32 1.1754944e-38, %v953
      %v955 = vsel %vm952, %v954, %v950
      %v956 = vmul.f32 1.0, %v955
      %v957 = vrcp.pop %v645
      %v958 = vmul.f32 %v645, %v957
      %v959 = vsub.f32 1.0, %v958
      %v960 = vmul.f32 %v957, %v959
      %v961 = vadd.f32 %v957, %v960
      %vm962 = vweird.f32 %v645
      %vm963 = vweird.f32 %v957
      %vm964 = vmor %vm962, %vm963
      %v965 = vsel %vm964, %v957, %v961
      %v966 = vand.u32 2147483647, %v645
      %vm967 = vcmp.eq.f32.partialorder %v966, 8.507059e+37
      %v968 = vand.u32 %v645, 2147483648
      %v969 = vor.u32 1.1754944e-38, %v968
      %v970 = vsel %vm967, %v969, %v965
      %v971 = vmul.f32 1.0, %v970
      %v972 = vrcp.pop %v646
      %v973 = vmul.f32 %v646, %v972
      %v974 = vsub.f32 1.0, %v973
      %v975 = vmul.f32 %v972, %v974
      %v976 = vadd.f32 %v972, %v975
      %vm977 = vweird.f32 %v646
      %vm978 = vweird.f32 %v972
      %vm979 = vmor %vm977, %vm978
      %v980 = vsel %vm979, %v972, %v976
      %v981 = vand.u32 2147483647, %v646
      %vm982 = vcmp.eq.f32.partialorder %v981, 8.507059e+37
      %v983 = vand.u32 %v646, 2147483648
      %v984 = vor.u32 1.1754944e-38, %v983
      %v985 = vsel %vm982, %v984, %v980
      %v986 = vmul.f32 1.0, %v985
      %v987 = vrcp.pop %v647
      %v988 = vmul.f32 %v647, %v987
      %v989 = vsub.f32 1.0, %v988
      %v990 = vmul.f32 %v987, %v989
      %v991 = vadd.f32 %v987, %v990
      %vm992 = vweird.f32 %v647
      %vm993 = vweird.f32 %v987
      %vm994 = vmor %vm992, %vm993
      %v995 = vsel %vm994, %v987, %v991
      %v996 = vand.u32 2147483647, %v647
      %vm997 = vcmp.eq.f32.partialorder %v996, 8.507059e+37
      %v998 = vand.u32 %v647, 2147483648
      %v999 = vor.u32 1.1754944e-38, %v998
      %v1000 = vsel %vm997, %v999, %v995
      %v1001 = vmul.f32 1.0, %v1000
      %v1002 = vrcp.pop %v648
      %v1003 = vmul.f32 %v648, %v1002
      %v1004 = vsub.f32 1.0, %v1003
      %v1005 = vmul.f32 %v1002, %v1004
      %v1006 = vadd.f32 %v1002, %v1005
      %vm1007 = vweird.f32 %v648
      %vm1008 = vweird.f32 %v1002
      %vm1009 = vmor %vm1007, %vm1008
      %v1010 = vsel %vm1009, %v1002, %v1006
      %v1011 = vand.u32 2147483647, %v648
      %vm1012 = vcmp.eq.f32.partialorder %v1011, 8.507059e+37
      %v1013 = vand.u32 %v648, 2147483648
      %v1014 = vor.u32 1.1754944e-38, %v1013
      %v1015 = vsel %vm1012, %v1014, %v1010
      %v1016 = vmul.f32 1.0, %v1015
      %v1017 = vrcp.pop %v649
      %v1018 = vmul.f32 %v649, %v1017
      %v1019 = vsub.f32 1.0, %v1018
      %v1020 = vmul.f32 %v1017, %v1019
      %v1021 = vadd.f32 %v1017, %v1020
      %vm1022 = vweird.f32 %v649
      %vm1023 = vweird.f32 %v1017
      %vm1024 = vmor %vm1022, %vm1023
      %v1025 = vsel %vm1024, %v1017, %v1021
      %v1026 = vand.u32 2147483647, %v649
      %vm1027 = vcmp.eq.f32.partialorder %v1026, 8.507059e+37
      %v1028 = vand.u32 %v649, 2147483648
      %v1029 = vor.u32 1.1754944e-38, %v1028
      %v1030 = vsel %vm1027, %v1029, %v1025
      %v1031 = vmul.f32 1.0, %v1030
      %v1032 = vrcp.pop %v650
      %v1033 = vmul.f32 %v650, %v1032
      %v1034 = vsub.f32 1.0, %v1033
      %v1035 = vmul.f32 %v1032, %v1034
      %v1036 = vadd.f32 %v1032, %v1035
      %vm1037 = vweird.f32 %v650
      %vm1038 = vweird.f32 %v1032
      %vm1039 = vmor %vm1037, %vm1038
      %v1040 = vsel %vm1039, %v1032, %v1036
      %v1041 = vand.u32 2147483647, %v650
      %vm1042 = vcmp.eq.f32.partialorder %v1041, 8.507059e+37
      %v1043 = vand.u32 %v650, 2147483648
      %v1044 = vor.u32 1.1754944e-38, %v1043
      %v1045 = vsel %vm1042, %v1044, %v1040
      %v1046 = vmul.f32 1.0, %v1045
      %v1047 = vrcp.pop %v651
      %v1048 = vmul.f32 %v651, %v1047
      %v1049 = vsub.f32 1.0, %v1048
      %v1050 = vmul.f32 %v1047, %v1049
      %v1051 = vadd.f32 %v1047, %v1050
      %vm1052 = vweird.f32 %v651
      %vm1053 = vweird.f32 %v1047
      %vm1054 = vmor %vm1052, %vm1053
      %v1055 = vsel %vm1054, %v1047, %v1051
      %v1056 = vand.u32 2147483647, %v651
      %vm1057 = vcmp.eq.f32.partialorder %v1056, 8.507059e+37
      %v1058 = vand.u32 %v651, 2147483648
      %v1059 = vor.u32 1.1754944e-38, %v1058
      %v1060 = vsel %vm1057, %v1059, %v1055
      %v1061 = vmul.f32 1.0, %v1060
      %v1062 = vrcp.pop %v652
      %v1063 = vmul.f32 %v652, %v1062
      %v1064 = vsub.f32 1.0, %v1063
      %v1065 = vmul.f32 %v1062, %v1064
      %v1066 = vadd.f32 %v1062, %v1065
      %vm1067 = vweird.f32 %v652
      %vm1068 = vweird.f32 %v1062
      %vm1069 = vmor %vm1067, %vm1068
      %v1070 = vsel %vm1069, %v1062, %v1066
      %v1071 = vand.u32 2147483647, %v652
      %vm1072 = vcmp.eq.f32.partialorder %v1071, 8.507059e+37
      %v1073 = vand.u32 %v652, 2147483648
      %v1074 = vor.u32 1.1754944e-38, %v1073
      %v1075 = vsel %vm1072, %v1074, %v1070
      %v1076 = vmul.f32 1.0, %v1075
      %v1077 = vrcp.pop %v653
      %v1078 = vmul.f32 %v653, %v1077
      %v1079 = vsub.f32 1.0, %v1078
      %v1080 = vmul.f32 %v1077, %v1079
      %v1081 = vadd.f32 %v1077, %v1080
      %vm1082 = vweird.f32 %v653
      %vm1083 = vweird.f32 %v1077
      %vm1084 = vmor %vm1082, %vm1083
      %v1085 = vsel %vm1084, %v1077, %v1081
      %v1086 = vand.u32 2147483647, %v653
      %vm1087 = vcmp.eq.f32.partialorder %v1086, 8.507059e+37
      %v1088 = vand.u32 %v653, 2147483648
      %v1089 = vor.u32 1.1754944e-38, %v1088
      %v1090 = vsel %vm1087, %v1089, %v1085
      %v1091 = vmul.f32 1.0, %v1090
      %v1092 = vrcp.pop %v654
      %v1093 = vmul.f32 %v654, %v1092
      %v1094 = vsub.f32 1.0, %v1093
      %v1095 = vmul.f32 %v1092, %v1094
      %v1096 = vadd.f32 %v1092, %v1095
      %vm1097 = vweird.f32 %v654
      %vm1098 = vweird.f32 %v1092
      %vm1099 = vmor %vm1097, %vm1098
      %v1100 = vsel %vm1099, %v1092, %v1096
      %v1101 = vand.u32 2147483647, %v654
      %vm1102 = vcmp.eq.f32.partialorder %v1101, 8.507059e+37
      %v1103 = vand.u32 %v654, 2147483648
      %v1104 = vor.u32 1.1754944e-38, %v1103
      %v1105 = vsel %vm1102, %v1104, %v1100
      %v1106 = vmul.f32 1.0, %v1105
      %v1107 = vrcp.pop %v655
      %v1108 = vmul.f32 %v655, %v1107
      %v1109 = vsub.f32 1.0, %v1108
      %v1110 = vmul.f32 %v1107, %v1109
      %v1111 = vadd.f32 %v1107, %v1110
      %vm1112 = vweird.f32 %v655
      %vm1113 = vweird.f32 %v1107
      %vm1114 = vmor %vm1112, %vm1113
      %v1115 = vsel %vm1114, %v1107, %v1111
      %v1116 = vand.u32 2147483647, %v655
      %vm1117 = vcmp.eq.f32.partialorder %v1116, 8.507059e+37
      %v1118 = vand.u32 %v655, 2147483648
      %v1119 = vor.u32 1.1754944e-38, %v1118
      %v1120 = vsel %vm1117, %v1119, %v1115
      %v1121 = vmul.f32 1.0, %v1120
      %v1122 = vrcp.pop %v656
      %v1123 = vmul.f32 %v656, %v1122
      %v1124 = vsub.f32 1.0, %v1123
      %v1125 = vmul.f32 %v1122, %v1124
      %v1126 = vadd.f32 %v1122, %v1125
      %vm1127 = vweird.f32 %v656
      %vm1128 = vweird.f32 %v1122
      %vm1129 = vmor %vm1127, %vm1128
      %v1130 = vsel %vm1129, %v1122, %v1126
      %v1131 = vand.u32 2147483647, %v656
      %vm1132 = vcmp.eq.f32.partialorder %v1131, 8.507059e+37
      %v1133 = vand.u32 %v656, 2147483648
      %v1134 = vor.u32 1.1754944e-38, %v1133
      %v1135 = vsel %vm1132, %v1134, %v1130
      %v1136 = vmul.f32 1.0, %v1135
      %v1137 = vmul.f32 %v497, %v671
      %v1138 = vmul.f32 %v498, %v686
      %v1139 = vmul.f32 %v499, %v701
      %v1140 = vmul.f32 %v500, %v716
      %v1141 = vmul.f32 %v501, %v731
      %v1142 = vmul.f32 %v502, %v746
      %v1143 = vmul.f32 %v503, %v761
      %v1144 = vmul.f32 %v504, %v776
      %v1145 = vmul.f32 %v505, %v791
      %v1146 = vmul.f32 %v506, %v806
      %v1147 = vmul.f32 %v507, %v821
      %v1148 = vmul.f32 %v508, %v836
      %v1149 = vmul.f32 %v509, %v851
      %v1150 = vmul.f32 %v510, %v866
      %v1151 = vmul.f32 %v511, %v881
      %v1152 = vmul.f32 %v512, %v896
      %v1153 = vmul.f32 %v513, %v911
      %v1154 = vmul.f32 %v514, %v926
      %v1155 = vmul.f32 %v515, %v941
      %v1156 = vmul.f32 %v516, %v956
      %v1157 = vmul.f32 %v517, %v971
      %v1158 = vmul.f32 %v518, %v986
      %v1159 = vmul.f32 %v519, %v1001
      %v1160 = vmul.f32 %v520, %v1016
      %v1161 = vmul.f32 %v521, %v1031
      %v1162 = vmul.f32 %v522, %v1046
      %v1163 = vmul.f32 %v523, %v1061
      %v1164 = vmul.f32 %v524, %v1076
      %v1165 = vmul.f32 %v525, %v1091
      %v1166 = vmul.f32 %v526, %v1106
      %v1167 = vmul.f32 %v527, %v1121
      %v1168 = vmul.f32 %v528, %v1136
      %v1169 = vpack.c.bf16 %v1137, %v1137
      %v1170 = vpack.c.bf16 %v1138, %v1138
      %v1171 = vpack.c.bf16 %v1139, %v1139
      %v1172 = vpack.c.bf16 %v1140, %v1140
      %v1173 = vpack.c.bf16 %v1141, %v1141
      %v1174 = vpack.c.bf16 %v1142, %v1142
      %v1175 = vpack.c.bf16 %v1143, %v1143
      %v1176 = vpack.c.bf16 %v1144, %v1144
      %v1177 = vpack.c.bf16 %v1145, %v1145
      %v1178 = vpack.c.bf16 %v1146, %v1146
      %v1179 = vpack.c.bf16 %v1147, %v1147
      %v1180 = vpack.c.bf16 %v1148, %v1148
      %v1181 = vpack.c.bf16 %v1149, %v1149
      %v1182 = vpack.c.bf16 %v1150, %v1150
      %v1183 = vpack.c.bf16 %v1151, %v1151
      %v1184 = vpack.c.bf16 %v1152, %v1152
      %v1185 = vpack.c.bf16 %v1153, %v1153
      %v1186 = vpack.c.bf16 %v1154, %v1154
      %v1187 = vpack.c.bf16 %v1155, %v1155
      %v1188 = vpack.c.bf16 %v1156, %v1156
      %v1189 = vpack.c.bf16 %v1157, %v1157
      %v1190 = vpack.c.bf16 %v1158, %v1158
      %v1191 = vpack.c.bf16 %v1159, %v1159
      %v1192 = vpack.c.bf16 %v1160, %v1160
      %v1193 = vpack.c.bf16 %v1161, %v1161
      %v1194 = vpack.c.bf16 %v1162, %v1162
      %v1195 = vpack.c.bf16 %v1163, %v1163
      %v1196 = vpack.c.bf16 %v1164, %v1164
      %v1197 = vpack.c.bf16 %v1165, %v1165
      %v1198 = vpack.c.bf16 %v1166, %v1166
      %v1199 = vpack.c.bf16 %v1167, %v1167
      %v1200 = vpack.c.bf16 %v1168, %v1168
      %vm1201 = vcmask 257024
      %1202 = vst.msk [vmem:[%s199] sm:$0xf] %vm1201, %v1169
      %1203 = vst.msk [vmem:[%s199 + $0x4] sm:$0xf] %vm1201, %v1170
      %1204 = vst.msk [vmem:[%s199 + $0x8] sm:$0xf] %vm1201, %v1171
      %1205 = vst.msk [vmem:[%s199 + $0xc] sm:$0xf] %vm1201, %v1172
      %1206 = vst.msk [vmem:[%s199 + $0x10] sm:$0xf] %vm1201, %v1173
      %1207 = vst.msk [vmem:[%s199 + $0x14] sm:$0xf] %vm1201, %v1174
      %1208 = vst.msk [vmem:[%s199 + $0x18] sm:$0xf] %vm1201, %v1175
      %1209 = vst.msk [vmem:[%s199 + $0x1c] sm:$0xf] %vm1201, %v1176
      %1210 = vst.msk [vmem:[%s199 + $0x20] sm:$0xf] %vm1201, %v1177
      %1211 = vst.msk [vmem:[%s199 + $0x24] sm:$0xf] %vm1201, %v1178
      %1212 = vst.msk [vmem:[%s199 + $0x28] sm:$0xf] %vm1201, %v1179
      %1213 = vst.msk [vmem:[%s199 + $0x2c] sm:$0xf] %vm1201, %v1180
      %1214 = vst.msk [vmem:[%s199 + $0x30] sm:$0xf] %vm1201, %v1181
      %1215 = vst.msk [vmem:[%s199 + $0x34] sm:$0xf] %vm1201, %v1182
      %1216 = vst.msk [vmem:[%s199 + $0x38] sm:$0xf] %vm1201, %v1183
      %1217 = vst.msk [vmem:[%s199 + $0x3c] sm:$0xf] %vm1201, %v1184
      %1218 = vst.msk [vmem:[%s199 + $0x40] sm:$0xf] %vm1201, %v1185
      %1219 = vst.msk [vmem:[%s199 + $0x44] sm:$0xf] %vm1201, %v1186
      %1220 = vst.msk [vmem:[%s199 + $0x48] sm:$0xf] %vm1201, %v1187
      %1221 = vst.msk [vmem:[%s199 + $0x4c] sm:$0xf] %vm1201, %v1188
      %1222 = vst.msk [vmem:[%s199 + $0x50] sm:$0xf] %vm1201, %v1189
      %1223 = vst.msk [vmem:[%s199 + $0x54] sm:$0xf] %vm1201, %v1190
      %1224 = vst.msk [vmem:[%s199 + $0x58] sm:$0xf] %vm1201, %v1191
      %1225 = vst.msk [vmem:[%s199 + $0x5c] sm:$0xf] %vm1201, %v1192
      %1226 = vst.msk [vmem:[%s199 + $0x60] sm:$0xf] %vm1201, %v1193
      %1227 = vst.msk [vmem:[%s199 + $0x64] sm:$0xf] %vm1201, %v1194
      %1228 = vst.msk [vmem:[%s199 + $0x68] sm:$0xf] %vm1201, %v1195
      %1229 = vst.msk [vmem:[%s199 + $0x6c] sm:$0xf] %vm1201, %v1196
      %1230 = vst.msk [vmem:[%s199 + $0x70] sm:$0xf] %vm1201, %v1197
      %1231 = vst.msk [vmem:[%s199 + $0x74] sm:$0xf] %vm1201, %v1198
      %1232 = vst.msk [vmem:[%s199 + $0x78] sm:$0xf] %vm1201, %v1199
      %1233 = vst.msk [vmem:[%s199 + $0x7c] sm:$0xf] %vm1201, %v1200
      %s1234 = smul.u32 32, %s15
      %p1235 = scmp.lt.s32.totalorder %s1234, 63
      %s1236 = scalar_select %p1235, %s1234, 63
      %s1237 = smul.addr %s1236, 4
      %s1238 = scalar_lea.vmem %s4, %s1237
      // Predicated region
      $region37: #{_lambda_.3} parent=35 // pred_check
        %p1239 = pneg %p122
      $region38: #{_lambda_.3} parent=35 // pred_check_branch
        %1241 = sbr.rel (%p1239) target = $region40
      $region39: #{_lambda_.3} parent=35 // pred_region
        %s1242 = smul.u32 32, %s15
      $region40: #{_lambda_.3} parent=35 // pred_fallthru
        _
    $region36: #{_lambda_.3} parent=5 // pred_fallthru
      _
    %p1243 = scmp.le.s32.totalorder 2, %s10
    // Predicated region
    $region41: #{_lambda_.3} parent=5 // pred_check
      %p1244 = pneg %p1243
    $region42: #{_lambda_.3} parent=5 // pred_check_branch
      %1246 = sbr.rel (%p1244) target = $region44
    $region43: #{_lambda_.3} parent=5 // pred_region
      %s1247 = ssub.s32 %s10, 2
      // Predicated region
      $region45: #{_lambda_.3} parent=43 // pred_check
        %p1248 = pneg %p128
      $region46: #{_lambda_.3} parent=43 // pred_check_branch
        %1250 = sbr.rel (%p1248) target = $region48
      $region47: #{_lambda_.3} parent=43 // pred_region
        %s1251 = smul.u32 32, %s16
        %p1252 = scmp.lt.s32.totalorder %s1251, 63
        %s1253 = scalar_select %p1252, %s1251, 63
        %s1254 = smul.addr %s1253, 4
        %s1255 = scalar_lea.vmem %s4, %s1254
      $region48: #{_lambda_.3} parent=43 // pred_fallthru
        _
    $region44: #{_lambda_.3} parent=5 // pred_fallthru
      _
  $region6: #{_lambda_.3} parent=0 // loop_footer
    %s14 = sadd.s32 1, %s10
  $region7: #{_lambda_.3} parent=0 // loop_footer_branch
    %9 = sbr.rel target = $region3
  $region8: #{_lambda_.3} parent=0 // loop_exit
    _

// kernel: _lambda_.4
$region0: #{_lambda_.4}
  #allocation0 [shape = 'u32[]', space=smem, size = 0x4, offset = 0x4, fixed_abs, tag = 'smem constant byte address 0x4 - core index']
  #allocation1 [shape = 'u32[72,128]{1,0:T(1,128)}', space=vmem, size = 0x9000, scoped, tag = 'internal scratch']
  %s0 = inlined_call_operand.vmem [shape: bf16[2,16,18,96], index: 0, kind: input, shape index: {}]
  %s1 = inlined_call_operand.vmem [shape: bf16[3,96,64], index: 1, kind: input, shape index: {}]
  %s2 = inlined_call_operand.vmem [shape: f32[1,64], index: 2, kind: input, shape index: {}]
  %s3 = inlined_call_operand.vmem [shape: f32[1,64], index: 3, kind: input, shape index: {}]
  %s4 = inlined_call_operand.vmem [shape: bf16[2,16,16,64], index: 4, kind: output, shape index: {}]
  %s5 = sld [smem:[#allocation0]]
  $region49: #{_lambda_.4} parent=0
    _
  %s7 = ssub.s32 1, %s5
  %s8 = scalar_select 0, %s7, %s5
  loop: start=0, step=1, limit=6
  $region2: #{_lambda_.4} parent=0 // loop_pre_header
    _
  $region3: #{_lambda_.4} parent=0 // loop_header
    %s10 = sphi 0, %s14
    %p11 = scmp.ge.s32.totalorder %s10, 6
    %s17 = sphi 0, %s29
    %s18 = sphi 0, %s25
    %s19 = sphi 0, %s17
    %s20 = sphi 0, %s18
    %s21 = sphi 0, %s19
    %s22 = sphi 0, %s20
    %s34 = sphi 0, %s36
    %s37 = sphi 0, %s34
    %s38 = sphi 0, %s37
    %s54 = sphi 0, %s38
    %s58 = sphi 0, %s58
    %s60 = sphi 0, %s58
    %s61 = sphi 0, %s60
    %s75 = sphi 0, %s61
    %s79 = sphi 0, %s79
    %s81 = sphi 0, %s79
    %s82 = sphi 0, %s81
    %s96 = sphi 0, %s82
    %s100 = sphi 0, %s100
    %s102 = sphi 0, %s100
    %s103 = sphi 0, %s102
    %s117 = sphi 0, %s103
    %s125 = sphi 0, %s127
    %s128 = sphi 0, %s125
    %s129 = sphi 0, %s128
    %s145 = sphi 0, %s129
  $region4: #{_lambda_.4} parent=0 // loop_header_branch
    %13 = sbr.rel (%p11) target = $region8
  $region5: #{_lambda_.4} parent=0 // loop_body
    %s15 = ssub.s32 %s10, 1
    %s16 = ssub.s32 %s10, 2
    %s23 = sadd.s32 1, %s18
    %p24 = scmp.ge.s32.totalorder %s23, 2
    %s25 = scalar_select %p24, 0, %s23
    %s26 = sadd.s32 1, %s17
    %s27 = scalar_select %p24, %s26, %s17
    %p28 = scmp.ge.s32.totalorder %s27, 2
    %s29 = scalar_select %p28, 0, %s27
    %s30 = ssub.s32 %s17, %s29
    %s31 = ssub.s32 %s18, %s25
    %s32 = sor.u32 %s30, %s31
    %p33 = scmp.eq.s32.totalorder %s32, 0
    %s35 = sadd.s32 %s34, 1
    %s36 = scalar_select %p33, %s34, %s35
    %p39 = pneg %p33
    %p40 = scmp.eq.s32.totalorder %s10, 3
    %p41 = por %p39, %p40
    %p42 = scmp.ne.s32.totalorder %s34, %s37
    %p43 = scmp.eq.s32.totalorder %s10, 0
    %p44 = por %p42, %p43
    %p45 = scmp.ne.s32.totalorder %s34, %s37
    %p46 = scmp.eq.s32.totalorder %s15, 3
    %p47 = por %p45, %p46
    %p48 = scmp.ne.s32.totalorder %s37, %s38
    %p49 = scmp.eq.s32.totalorder %s15, 0
    %p50 = por %p48, %p49
    %p51 = scmp.ne.s32.totalorder %s37, %s38
    %p52 = scmp.eq.s32.totalorder %s16, 3
    %p53 = por %p51, %p52
    %p55 = scmp.ne.s32.totalorder %s38, %s54
    %p56 = scmp.eq.s32.totalorder %s16, 0
    %p57 = por %p55, %p56
    %s59 = sadd.s32 %s58, 1
    %p62 = scmp.eq.s32.totalorder %s10, 3
    %p63 = scmp.ne.s32.totalorder %s58, %s60
    %p64 = scmp.eq.s32.totalorder %s10, 0
    %p65 = por %p63, %p64
    %p66 = scmp.ne.s32.totalorder %s58, %s60
    %p67 = scmp.eq.s32.totalorder %s15, 3
    %p68 = por %p66, %p67
    %p69 = scmp.ne.s32.totalorder %s60, %s61
    %p70 = scmp.eq.s32.totalorder %s15, 0
    %p71 = por %p69, %p70
    %p72 = scmp.ne.s32.totalorder %s60, %s61
    %p73 = scmp.eq.s32.totalorder %s16, 3
    %p74 = por %p72, %p73
    %p76 = scmp.ne.s32.totalorder %s61, %s75
    %p77 = scmp.eq.s32.totalorder %s16, 0
    %p78 = por %p76, %p77
    %s80 = sadd.s32 %s79, 1
    %p83 = scmp.eq.s32.totalorder %s10, 3
    %p84 = scmp.ne.s32.totalorder %s79, %s81
    %p85 = scmp.eq.s32.totalorder %s10, 0
    %p86 = por %p84, %p85
    %p87 = scmp.ne.s32.totalorder %s79, %s81
    %p88 = scmp.eq.s32.totalorder %s15, 3
    %p89 = por %p87, %p88
    %p90 = scmp.ne.s32.totalorder %s81, %s82
    %p91 = scmp.eq.s32.totalorder %s15, 0
    %p92 = por %p90, %p91
    %p93 = scmp.ne.s32.totalorder %s81, %s82
    %p94 = scmp.eq.s32.totalorder %s16, 3
    %p95 = por %p93, %p94
    %p97 = scmp.ne.s32.totalorder %s82, %s96
    %p98 = scmp.eq.s32.totalorder %s16, 0
    %p99 = por %p97, %p98
    %s101 = sadd.s32 %s100, 1
    %p104 = scmp.eq.s32.totalorder %s10, 3
    %p105 = scmp.ne.s32.totalorder %s100, %s102
    %p106 = scmp.eq.s32.totalorder %s10, 0
    %p107 = por %p105, %p106
    %p108 = scmp.ne.s32.totalorder %s100, %s102
    %p109 = scmp.eq.s32.totalorder %s15, 3
    %p110 = por %p108, %p109
    %p111 = scmp.ne.s32.totalorder %s102, %s103
    %p112 = scmp.eq.s32.totalorder %s15, 0
    %p113 = por %p111, %p112
    %p114 = scmp.ne.s32.totalorder %s102, %s103
    %p115 = scmp.eq.s32.totalorder %s16, 3
    %p116 = por %p114, %p115
    %p118 = scmp.ne.s32.totalorder %s103, %s117
    %p119 = scmp.eq.s32.totalorder %s16, 0
    %p120 = por %p118, %p119
    %s121 = ssub.s32 %s17, %s29
    %s122 = ssub.s32 %s18, %s25
    %s123 = sor.u32 %s121, %s122
    %p124 = scmp.eq.s32.totalorder %s123, 0
    %s126 = sadd.s32 %s125, 1
    %s127 = scalar_select %p124, %s125, %s126
    %p130 = pneg %p124
    %p131 = scmp.eq.s32.totalorder %s10, 3
    %p132 = por %p130, %p131
    %p133 = scmp.ne.s32.totalorder %s125, %s128
    %p134 = scmp.eq.s32.totalorder %s10, 0
    %p135 = por %p133, %p134
    %p136 = scmp.ne.s32.totalorder %s125, %s128
    %p137 = scmp.eq.s32.totalorder %s15, 3
    %p138 = por %p136, %p137
    %p139 = scmp.ne.s32.totalorder %s128, %s129
    %p140 = scmp.eq.s32.totalorder %s15, 0
    %p141 = por %p139, %p140
    %p142 = scmp.ne.s32.totalorder %s128, %s129
    %p143 = scmp.eq.s32.totalorder %s16, 3
    %p144 = por %p142, %p143
    %p146 = scmp.ne.s32.totalorder %s129, %s145
    %p147 = scmp.eq.s32.totalorder %s16, 0
    %p148 = por %p146, %p147
    %p149 = scmp.le.s32.totalorder 1, %s10
    %p150 = scmp.lt.s32.totalorder %s10, 5
    %p151 = pnand %p149, %p150
    %p152 = pneg %p151
    // Predicated region
    $region9: #{_lambda_.4} parent=5 // pred_check
      _
    $region10: #{_lambda_.4} parent=5 // pred_check_branch
      %154 = sbr.rel (%p151) target = $region12
    $region11: #{_lambda_.4} parent=5 // pred_region
      %s155 = ssub.s32 %s10, 1
      // Predicated region
      $region13: #{_lambda_.4} parent=11 // pred_check
        %p156 = pneg %p71
      $region14: #{_lambda_.4} parent=11 // pred_check_branch
        %158 = sbr.rel (%p156) target = $region16
      $region15: #{_lambda_.4} parent=11 // pred_region
        _
      $region16: #{_lambda_.4} parent=11 // pred_fallthru
        _
      // Predicated region
      $region17: #{_lambda_.4} parent=11 // pred_check
        %p159 = pneg %p92
      $region18: #{_lambda_.4} parent=11 // pred_check_branch
        %161 = sbr.rel (%p159) target = $region20
      $region19: #{_lambda_.4} parent=11 // pred_region
        _
      $region20: #{_lambda_.4} parent=11 // pred_fallthru
        _
      // Predicated region
      $region21: #{_lambda_.4} parent=11 // pred_check
        %p162 = pneg %p113
      $region22: #{_lambda_.4} parent=11 // pred_check_branch
        %164 = sbr.rel (%p162) target = $region24
      $region23: #{_lambda_.4} parent=11 // pred_region
        _
      $region24: #{_lambda_.4} parent=11 // pred_fallthru
        _
    $region12: #{_lambda_.4} parent=5 // pred_fallthru
      _
    %p165 = scmp.lt.s32.totalorder %s10, 4
    // Predicated region
    $region25: #{_lambda_.4} parent=5 // pred_check
      %p166 = pneg %p165
    $region26: #{_lambda_.4} parent=5 // pred_check_branch
      %168 = sbr.rel (%p166) target = $region28
    $region27: #{_lambda_.4} parent=5 // pred_region
      // Predicated region
      $region29: #{_lambda_.4} parent=27 // pred_check
        %p169 = pneg %p44
      $region30: #{_lambda_.4} parent=27 // pred_check_branch
        %171 = sbr.rel (%p169) target = $region32
      $region31: #{_lambda_.4} parent=27 // pred_region
        %s172 = smul.u32 8, %s18
        %p173 = scmp.lt.s32.totalorder %s17, 1
        %s174 = scalar_select %p173, %s17, 1
        %p175 = scmp.lt.s32.totalorder %s172, 15
        %s176 = scalar_select %p175, %s172, 15
        %s177 = smul.addr %s176, 3
        %s178 = smul.addr %s174, 48
        %s179 = sadd.s32 %s177, %s178
        %s180 = smul.addr %s179, 4
        %s181 = scalar_lea.vmem %s0, %s180
        %s182 = smul.u32 8, %s18
      $region32: #{_lambda_.4} parent=27 // pred_fallthru
        _
    $region28: #{_lambda_.4} parent=5 // pred_fallthru
      _
    %p183 = scmp.le.s32.totalorder 1, %s10
    %p184 = scmp.lt.s32.totalorder %s10, 5
    %p185 = pnand %p183, %p184
    %p186 = pneg %p185
    // Predicated region
    $region33: #{_lambda_.4} parent=5 // pred_check
      _
    $region34: #{_lambda_.4} parent=5 // pred_check_branch
      %188 = sbr.rel (%p185) target = $region36
    $region35: #{_lambda_.4} parent=5 // pred_region
      %s189 = ssub.s32 %s10, 1
      %s190 = smul.u32 8, %s20
      %p191 = scmp.lt.s32.totalorder %s19, 1
      %s192 = scalar_select %p191, %s19, 1
      %p193 = scmp.lt.s32.totalorder %s190, 15
      %s194 = scalar_select %p193, %s190, 15
      %s195 = smul.addr %s194, 3
      %s196 = smul.addr %s192, 48
      %s197 = sadd.s32 %s195, %s196
      %s198 = smul.addr %s197, 4
      %s199 = scalar_lea.vmem %s0, %s198
      %p200 = pneg %p50
      %p201 = pneg %p47
      %p202 = pneg %p71
      %p203 = pneg %p68
      %p204 = pneg %p92
      %p205 = pneg %p89
      %p206 = pneg %p113
      %p207 = pneg %p110
      %p208 = pneg %p141
      %p209 = pneg %p138
      %s210 = smul.u32 8, %s20
      %p211 = scmp.lt.s32.totalorder %s19, 1
      %s212 = scalar_select %p211, %s19, 1
      %p213 = scmp.lt.s32.totalorder %s210, 15
      %s214 = scalar_select %p213, %s210, 15
      %s215 = smul.addr %s214, 2
      %s216 = smul.addr %s212, 32
      %s217 = sadd.s32 %s215, %s216
      %s218 = smul.addr %s217, 4
      %s219 = scalar_lea.vmem %s4, %s218
      %s220 = smul.u32 8, %s20
      %p221 = scmp.lt.s32.totalorder %s19, 1
      %s222 = scalar_select %p221, %s19, 1
      %p223 = scmp.lt.s32.totalorder %s220, 15
      %s224 = scalar_select %p223, %s220, 15
      %s225 = smul.addr %s224, 3
      %s226 = smul.addr %s222, 48
      %s227 = sadd.s32 %s225, %s226
      %s228 = smul.addr %s227, 4
      %s229 = scalar_lea.vmem %s0, %s228
      %s230 = smul.u32 8, %s20
      %s231 = smul.u32 8, %s20
      %p232 = scmp.lt.s32.totalorder %s19, 1
      %s233 = scalar_select %p232, %s19, 1
      %p234 = scmp.lt.s32.totalorder %s231, 15
      %s235 = scalar_select %p234, %s231, 15
      %s236 = smul.addr %s235, 2
      %s237 = smul.addr %s233, 32
      %s238 = sadd.s32 %s236, %s237
      %s239 = smul.addr %s238, 4
      %s240 = scalar_lea.vmem %s4, %s239
      %s241 = smul.u32 8, %s20
      %v243 = vld [vmem:[%s229] sm:$0xf]
      %v244 = vld [vmem:[%s229 + $0x4] sm:$0xf]
      %v245 = vld [vmem:[%s229 + $0x8] sm:$0x1]
      %v246 = vld [vmem:[%s229 + $0xc] sm:$0xf]
      %v247 = vld [vmem:[%s229 + $0x10] sm:$0xf]
      %v248 = vld [vmem:[%s229 + $0x14] sm:$0x1]
      %v249 = vld [vmem:[%s229 + $0x18] sm:$0xf]
      %v250 = vld [vmem:[%s229 + $0x1c] sm:$0xf]
      %v251 = vld [vmem:[%s229 + $0x20] sm:$0x1]
      %v252 = vld [vmem:[%s229 + $0x24] sm:$0xf]
      %v253 = vld [vmem:[%s229 + $0x28] sm:$0xf]
      %v254 = vld [vmem:[%s229 + $0x2c] sm:$0x1]
      %v255 = vld [vmem:[%s229 + $0x30] sm:$0xf]
      %v256 = vld [vmem:[%s229 + $0x34] sm:$0xf]
      %v257 = vld [vmem:[%s229 + $0x38] sm:$0x1]
      %v258 = vld [vmem:[%s229 + $0x3c] sm:$0xf]
      %v259 = vld [vmem:[%s229 + $0x40] sm:$0xf]
      %v260 = vld [vmem:[%s229 + $0x44] sm:$0x1]
      %v261 = vld [vmem:[%s229 + $0x48] sm:$0xf]
      %v262 = vld [vmem:[%s229 + $0x4c] sm:$0xf]
      %v263 = vld [vmem:[%s229 + $0x50] sm:$0x1]
      %v264 = vld [vmem:[%s229 + $0x54] sm:$0xf]
      %v265 = vld [vmem:[%s229 + $0x58] sm:$0xf]
      %v266 = vld [vmem:[%s229 + $0x5c] sm:$0x1]
      %v267 = vld [vmem:[%s1] sm:$0xf]
      %v268 = vld [vmem:[%s1 + $0x4] sm:$0xf]
      %v269 = vld [vmem:[%s1 + $0x8] sm:$0xf]
      %v270 = vld [vmem:[%s1 + $0xc] sm:$0xf]
      %v271 = vld [vmem:[%s1 + $0x10] sm:$0xf]
      %v272 = vld [vmem:[%s1 + $0x14] sm:$0xf]
      %v273 = vld [vmem:[%s1 + $0x18] sm:$0xf]
      %v274 = vld [vmem:[%s1 + $0x1c] sm:$0xf]
      %v275 = vld [vmem:[%s1 + $0x20] sm:$0xf]
      %v276 = vld [vmem:[%s1 + $0x24] sm:$0xf]
      %v277 = vld [vmem:[%s1 + $0x28] sm:$0xf]
      %v278 = vld [vmem:[%s1 + $0x2c] sm:$0xf]
      %vm279 = vsmask.f32 3328
      %vm280 = vsmask.f32 7440
      %vm281 = vmor %vm279, %vm280
      %v283 = vshrl.u32 %v243, 16
      %v285 = vrot.slane %v283, 4
      %v286 = vshll.u32 %v243, 16
      %v288 = vrot.slane %v286, 5
      %v289 = vor.u32 %v285, %v288
      %v290 = vrot.slane %v289, 4
      %v292 = vshll.u32 %v244, 16
      %v294 = vrot.slane %v292, 5
      %v295 = vsel %vm281, %v290, %v294
      %v296 = vshrl.u32 %v244, 16
      %v298 = vrot.slane %v296, 4
      %v299 = vor.u32 %v298, %v294
      %v300 = vrot.slane %v299, 4
      %v302 = vshll.u32 %v245, 16
      %v304 = vrot.slane %v302, 5
      %v305 = vsel %vm281, %v300, %v304
      %v307 = vshrl.u32 %v246, 16
      %v309 = vrot.slane %v307, 4
      %v310 = vshll.u32 %v246, 16
      %v312 = vrot.slane %v310, 5
      %v313 = vor.u32 %v309, %v312
      %v314 = vrot.slane %v313, 4
      %v316 = vshll.u32 %v247, 16
      %v318 = vrot.slane %v316, 5
      %v319 = vsel %vm281, %v314, %v318
      %v320 = vshrl.u32 %v247, 16
      %v322 = vrot.slane %v320, 4
      %v323 = vor.u32 %v322, %v318
      %v324 = vrot.slane %v323, 4
      %v326 = vshll.u32 %v248, 16
      %v328 = vrot.slane %v326, 5
      %v329 = vsel %vm281, %v324, %v328
      %v331 = vshrl.u32 %v249, 16
      %v333 = vrot.slane %v331, 4
      %v334 = vshll.u32 %v249, 16
      %v336 = vrot.slane %v334, 5
      %v337 = vor.u32 %v333, %v336
      %v338 = vrot.slane %v337, 4
      %v340 = vshll.u32 %v250, 16
      %v342 = vrot.slane %v340, 5
      %v343 = vsel %vm281, %v338, %v342
      %v344 = vshrl.u32 %v250, 16
      %v346 = vrot.slane %v344, 4
      %v347 = vor.u32 %v346, %v342
      %v348 = vrot.slane %v347, 4
      %v350 = vshll.u32 %v251, 16
      %v352 = vrot.slane %v350, 5
      %v353 = vsel %vm281, %v348, %v352
      %v355 = vshrl.u32 %v252, 16
      %v357 = vrot.slane %v355, 4
      %v358 = vshll.u32 %v252, 16
      %v360 = vrot.slane %v358, 5
      %v361 = vor.u32 %v357, %v360
      %v362 = vrot.slane %v361, 4
      %v364 = vshll.u32 %v253, 16
      %v366 = vrot.slane %v364, 5
      %v367 = vsel %vm281, %v362, %v366
      %v368 = vshrl.u32 %v253, 16
      %v370 = vrot.slane %v368, 4
      %v371 = vor.u32 %v370, %v366
      %v372 = vrot.slane %v371, 4
      %v374 = vshll.u32 %v254, 16
      %v376 = vrot.slane %v374, 5
      %v377 = vsel %vm281, %v372, %v376
      %v379 = vshrl.u32 %v255, 16
      %v381 = vrot.slane %v379, 4
      %v382 = vshll.u32 %v255, 16
      %v384 = vrot.slane %v382, 5
      %v385 = vor.u32 %v381, %v384
      %v386 = vrot.slane %v385, 4
      %v388 = vshll.u32 %v256, 16
      %v390 = vrot.slane %v388, 5
      %v391 = vsel %vm281, %v386, %v390
      %v392 = vshrl.u32 %v256, 16
      %v394 = vrot.slane %v392, 4
      %v395 = vor.u32 %v394, %v390
      %v396 = vrot.slane %v395, 4
      %v398 = vshll.u32 %v257, 16
      %v400 = vrot.slane %v398, 5
      %v401 = vsel %vm281, %v396, %v400
      %v403 = vshrl.u32 %v258, 16
      %v405 = vrot.slane %v403, 4
      %v406 = vshll.u32 %v258, 16
      %v408 = vrot.slane %v406, 5
      %v409 = vor.u32 %v405, %v408
      %v410 = vrot.slane %v409, 4
      %v412 = vshll.u32 %v259, 16
      %v414 = vrot.slane %v412, 5
      %v415 = vsel %vm281, %v410, %v414
      %v416 = vshrl.u32 %v259, 16
      %v418 = vrot.slane %v416, 4
      %v419 = vor.u32 %v418, %v414
      %v420 = vrot.slane %v419, 4
      %v422 = vshll.u32 %v260, 16
      %v424 = vrot.slane %v422, 5
      %v425 = vsel %vm281, %v420, %v424
      %v427 = vshrl.u32 %v261, 16
      %v429 = vrot.slane %v427, 4
      %v430 = vshll.u32 %v261, 16
      %v432 = vrot.slane %v430, 5
      %v433 = vor.u32 %v429, %v432
      %v434 = vrot.slane %v433, 4
      %v436 = vshll.u32 %v262, 16
      %v438 = vrot.slane %v436, 5
      %v439 = vsel %vm281, %v434, %v438
      %v440 = vshrl.u32 %v262, 16
      %v442 = vrot.slane %v440, 4
      %v443 = vor.u32 %v442, %v438
      %v444 = vrot.slane %v443, 4
      %v446 = vshll.u32 %v263, 16
      %v448 = vrot.slane %v446, 5
      %v449 = vsel %vm281, %v444, %v448
      %v451 = vshrl.u32 %v264, 16
      %v453 = vrot.slane %v451, 4
      %v454 = vshll.u32 %v264, 16
      %v456 = vrot.slane %v454, 5
      %v457 = vor.u32 %v453, %v456
      %v458 = vrot.slane %v457, 4
      %v460 = vshll.u32 %v265, 16
      %v462 = vrot.slane %v460, 5
      %v463 = vsel %vm281, %v458, %v462
      %v464 = vshrl.u32 %v265, 16
      %v466 = vrot.slane %v464, 4
      %v467 = vor.u32 %v466, %v462
      %v468 = vrot.slane %v467, 4
      %v470 = vshll.u32 %v266, 16
      %v472 = vrot.slane %v470, 5
      %v473 = vsel %vm281, %v468, %v472
      %s474 = scalar_lea.vmem %s1, 48
      %v475 = vld [vmem:[%s474] sm:$0xf]
      %v476 = vld [vmem:[%s474 + $0x4] sm:$0xf]
      %v477 = vld [vmem:[%s474 + $0x8] sm:$0xf]
      %v478 = vld [vmem:[%s474 + $0xc] sm:$0xf]
      %v479 = vld [vmem:[%s474 + $0x10] sm:$0xf]
      %v480 = vld [vmem:[%s474 + $0x14] sm:$0xf]
      %v481 = vld [vmem:[%s474 + $0x18] sm:$0xf]
      %v482 = vld [vmem:[%s474 + $0x1c] sm:$0xf]
      %v483 = vld [vmem:[%s474 + $0x20] sm:$0xf]
      %v484 = vld [vmem:[%s474 + $0x24] sm:$0xf]
      %v485 = vld [vmem:[%s474 + $0x28] sm:$0xf]
      %v486 = vld [vmem:[%s474 + $0x2c] sm:$0xf]
      %v487 = vunpack.c.l.b16 %v295
      %v488 = vunpack.c.l.b16 %v305
      %v489 = vunpack.c.l.b16 %v319
      %v490 = vunpack.c.l.b16 %v329
      %v491 = vunpack.c.l.b16 %v343
      %v492 = vunpack.c.l.b16 %v353
      %v493 = vunpack.c.l.b16 %v367
      %v494 = vunpack.c.l.b16 %v377
      %v495 = vunpack.c.l.b16 %v391
      %v496 = vunpack.c.l.b16 %v401
      %v497 = vunpack.c.l.b16 %v415
      %v498 = vunpack.c.l.b16 %v425
      %v499 = vunpack.c.l.b16 %v439
      %v500 = vunpack.c.l.b16 %v449
      %v501 = vunpack.c.l.b16 %v463
      %v502 = vunpack.c.l.b16 %v473
      %v503 = vpack.c.b16 %v488, %v487
      %v504 = vpack.c.b16 %v490, %v489
      %v505 = vpack.c.b16 %v492, %v491
      %v506 = vpack.c.b16 %v494, %v493
      %v507 = vpack.c.b16 %v496, %v495
      %v508 = vpack.c.b16 %v498, %v497
      %v509 = vpack.c.b16 %v500, %v499
      %v510 = vpack.c.b16 %v502, %v501
      %v523 = vunpack.c.l.b16 %v475
      %v524 = vunpack.c.l.b16 %v476
      %v525 = vunpack.c.l.b16 %v477
      %v526 = vunpack.c.l.b16 %v478
      %v527 = vunpack.c.l.b16 %v479
      %v528 = vunpack.c.l.b16 %v480
      %v529 = vunpack.c.l.b16 %v481
      %v530 = vunpack.c.l.b16 %v482
      %v531 = vunpack.c.l.b16 %v483
      %v532 = vunpack.c.l.b16 %v484
      %v533 = vunpack.c.l.b16 %v485
      %v534 = vunpack.c.l.b16 %v486
      %v535 = vpack.c.b16 %v524, %v523
      %v536 = vpack.c.b16 %v526, %v525
      %v537 = vpack.c.b16 %v528, %v527
      %v538 = vpack.c.b16 %v530, %v529
      %v539 = vpack.c.b16 %v532, %v531
      %v540 = vpack.c.b16 %v534, %v533
      %vm547 = vcmask 785408
      %v549 = vsel %vm547, %v503, 0
      %v552 = vsel %vm547, %v504, 0
      %v555 = vsel %vm547, %v505, 0
      %v558 = vsel %vm547, %v506, 0
      %v561 = vsel %vm547, %v507, 0
      %v564 = vsel %vm547, %v508, 0
      %v567 = vsel %vm547, %v509, 0
      %v570 = vsel %vm547, %v510, 0
      %572 = vmatpush.bf16.msra.mxu0 0
      %573 = vmatpush.bf16.msra.mxu0 0
      %574 = vmatpush.bf16.msra.mxu0 %v540
      %575 = vmatpush.bf16.msra.mxu0 %v539
      %576 = vmatpush.bf16.msra.mxu0 %v538
      %577 = vmatpush.bf16.msra.mxu0 %v537
      %578 = vmatpush.bf16.msra.mxu0 %v536
      %579 = vmatpush.bf16.msra.mxu0 %v535
      %580 = vmatmul.bf16.gmra.mxu0 %v549
      %v581 = vpop.f32.mrf.mxu0
      %v582 = vadd.f32 0.0, %v581
      %v583 = vpop.f32.mrf.mxu0
      %v584 = vadd.f32 0.0, %v583
      %585 = vmatmul.bf16.gmra.mxu0 %v552
      %v586 = vpop.f32.mrf.mxu0
      %v587 = vadd.f32 0.0, %v586
      %v588 = vpop.f32.mrf.mxu0
      %v589 = vadd.f32 0.0, %v588
      %590 = vmatmul.bf16.gmra.mxu0 %v555
      %v591 = vpop.f32.mrf.mxu0
      %v592 = vadd.f32 0.0, %v591
      %v593 = vpop.f32.mrf.mxu0
      %v594 = vadd.f32 0.0, %v593
      %595 = vmatmul.bf16.gmra.mxu0 %v558
      %v596 = vpop.f32.mrf.mxu0
      %v597 = vadd.f32 0.0, %v596
      %v598 = vpop.f32.mrf.mxu0
      %v599 = vadd.f32 0.0, %v598
      %600 = vmatmul.bf16.gmra.mxu0 %v561
      %v601 = vpop.f32.mrf.mxu0
      %v602 = vadd.f32 0.0, %v601
      %v603 = vpop.f32.mrf.mxu0
      %v604 = vadd.f32 0.0, %v603
      %605 = vmatmul.bf16.gmra.mxu0 %v564
      %v606 = vpop.f32.mrf.mxu0
      %v607 = vadd.f32 0.0, %v606
      %v608 = vpop.f32.mrf.mxu0
      %v609 = vadd.f32 0.0, %v608
      %610 = vmatmul.bf16.gmra.mxu0 %v567
      %v611 = vpop.f32.mrf.mxu0
      %v612 = vadd.f32 0.0, %v611
      %v613 = vpop.f32.mrf.mxu0
      %v614 = vadd.f32 0.0, %v613
      %615 = vmatmul.bf16.gmra.mxu0 %v570
      %v616 = vpop.f32.mrf.mxu0
      %v617 = vadd.f32 0.0, %v616
      %v618 = vpop.f32.mrf.mxu0
      %v619 = vadd.f32 0.0, %v618
      %620 = vdwg.mxu0
      %v637 = vunpack.c.l.b16 %v243
      %v638 = vunpack.c.l.b16 %v244
      %v639 = vunpack.c.l.b16 %v246
      %v640 = vunpack.c.l.b16 %v247
      %v641 = vunpack.c.l.b16 %v249
      %v642 = vunpack.c.l.b16 %v250
      %v643 = vunpack.c.l.b16 %v252
      %v644 = vunpack.c.l.b16 %v253
      %v645 = vunpack.c.l.b16 %v255
      %v646 = vunpack.c.l.b16 %v256
      %v647 = vunpack.c.l.b16 %v258
      %v648 = vunpack.c.l.b16 %v259
      %v649 = vunpack.c.l.b16 %v261
      %v650 = vunpack.c.l.b16 %v262
      %v651 = vunpack.c.l.b16 %v264
      %v652 = vunpack.c.l.b16 %v265
      %v653 = vpack.c.b16 %v638, %v637
      %v654 = vpack.c.b16 %v640, %v639
      %v655 = vpack.c.b16 %v642, %v641
      %v656 = vpack.c.b16 %v644, %v643
      %v657 = vpack.c.b16 %v646, %v645
      %v658 = vpack.c.b16 %v648, %v647
      %v659 = vpack.c.b16 %v650, %v649
      %v660 = vpack.c.b16 %v652, %v651
      %v673 = vunpack.c.l.b16 %v267
      %v674 = vunpack.c.l.b16 %v268
      %v675 = vunpack.c.l.b16 %v269
      %v676 = vunpack.c.l.b16 %v270
      %v677 = vunpack.c.l.b16 %v271
      %v678 = vunpack.c.l.b16 %v272
      %v679 = vunpack.c.l.b16 %v273
      %v680 = vunpack.c.l.b16 %v274
      %v681 = vunpack.c.l.b16 %v275
      %v682 = vunpack.c.l.b16 %v276
      %v683 = vunpack.c.l.b16 %v277
      %v684 = vunpack.c.l.b16 %v278
      %v685 = vpack.c.b16 %v674, %v673
      %v686 = vpack.c.b16 %v676, %v675
      %v687 = vpack.c.b16 %v678, %v677
      %v688 = vpack.c.b16 %v680, %v679
      %v689 = vpack.c.b16 %v682, %v681
      %v690 = vpack.c.b16 %v684, %v683
      %v698 = vsel %vm547, %v653, 0
      %v701 = vsel %vm547, %v654, 0
      %v704 = vsel %vm547, %v655, 0
      %v707 = vsel %vm547, %v656, 0
      %v710 = vsel %vm547, %v657, 0
      %v713 = vsel %vm547, %v658, 0
      %v716 = vsel %vm547, %v659, 0
      %v719 = vsel %vm547, %v660, 0
      %721 = vmatpush.bf16.msra.mxu0 0
      %722 = vmatpush.bf16.msra.mxu0 0
      %723 = vmatpush.bf16.msra.mxu0 %v690
      %724 = vmatpush.bf16.msra.mxu0 %v689
      %725 = vmatpush.bf16.msra.mxu0 %v688
      %726 = vmatpush.bf16.msra.mxu0 %v687
      %727 = vmatpush.bf16.msra.mxu0 %v686
      %728 = vmatpush.bf16.msra.mxu0 %v685
      %729 = vmatmul.bf16.gmra.mxu0 %v698
      %v730 = vpop.f32.mrf.mxu0
      %v731 = vadd.f32 %v582, %v730
      %v732 = vpop.f32.mrf.mxu0
      %v733 = vadd.f32 %v584, %v732
      %734 = vmatmul.bf16.gmra.mxu0 %v701
      %v735 = vpop.f32.mrf.mxu0
      %v736 = vadd.f32 %v587, %v735
      %v737 = vpop.f32.mrf.mxu0
      %v738 = vadd.f32 %v589, %v737
      %739 = vmatmul.bf16.gmra.mxu0 %v704
      %v740 = vpop.f32.mrf.mxu0
      %v741 = vadd.f32 %v592, %v740
      %v742 = vpop.f32.mrf.mxu0
      %v743 = vadd.f32 %v594, %v742
      %744 = vmatmul.bf16.gmra.mxu0 %v707
      %v745 = vpop.f32.mrf.mxu0
      %v746 = vadd.f32 %v597, %v745
      %v747 = vpop.f32.mrf.mxu0
      %v748 = vadd.f32 %v599, %v747
      %749 = vmatmul.bf16.gmra.mxu0 %v710
      %v750 = vpop.f32.mrf.mxu0
      %v751 = vadd.f32 %v602, %v750
      %v752 = vpop.f32.mrf.mxu0
      %v753 = vadd.f32 %v604, %v752
      %754 = vmatmul.bf16.gmra.mxu0 %v713
      %v755 = vpop.f32.mrf.mxu0
      %v756 = vadd.f32 %v607, %v755
      %v757 = vpop.f32.mrf.mxu0
      %v758 = vadd.f32 %v609, %v757
      %759 = vmatmul.bf16.gmra.mxu0 %v716
      %v760 = vpop.f32.mrf.mxu0
      %v761 = vadd.f32 %v612, %v760
      %v762 = vpop.f32.mrf.mxu0
      %v763 = vadd.f32 %v614, %v762
      %764 = vmatmul.bf16.gmra.mxu0 %v719
      %v765 = vpop.f32.mrf.mxu0
      %v766 = vadd.f32 %v617, %v765
      %v767 = vpop.f32.mrf.mxu0
      %v768 = vadd.f32 %v619, %v767
      %769 = vdwg.mxu0
      %vm778 = vcmask 1042432
      %vm779 = vcmask 1046532
      %vm780 = vmor %vm778, %vm779
      %v781 = vrot.slane %v243, 5
      %v782 = vrot.slane %v781, 4
      %v783 = vrot.slane %v244, 5
      %v784 = vsel %vm780, %v782, %v783
      %v785 = vrot.slane %v783, 4
      %v786 = vrot.slane %v245, 5
      %v787 = vsel %vm780, %v785, %v786
      %v788 = vrot.slane %v246, 5
      %v789 = vrot.slane %v788, 4
      %v790 = vrot.slane %v247, 5
      %v791 = vsel %vm780, %v789, %v790
      %v792 = vrot.slane %v790, 4
      %v793 = vrot.slane %v248, 5
      %v794 = vsel %vm780, %v792, %v793
      %v795 = vrot.slane %v249, 5
      %v796 = vrot.slane %v795, 4
      %v797 = vrot.slane %v250, 5
      %v798 = vsel %vm780, %v796, %v797
      %v799 = vrot.slane %v797, 4
      %v800 = vrot.slane %v251, 5
      %v801 = vsel %vm780, %v799, %v800
      %v802 = vrot.slane %v252, 5
      %v803 = vrot.slane %v802, 4
      %v804 = vrot.slane %v253, 5
      %v805 = vsel %vm780, %v803, %v804
      %v806 = vrot.slane %v804, 4
      %v807 = vrot.slane %v254, 5
      %v808 = vsel %vm780, %v806, %v807
      %v809 = vrot.slane %v255, 5
      %v810 = vrot.slane %v809, 4
      %v811 = vrot.slane %v256, 5
      %v812 = vsel %vm780, %v810, %v811
      %v813 = vrot.slane %v811, 4
      %v814 = vrot.slane %v257, 5
      %v815 = vsel %vm780, %v813, %v814
      %v816 = vrot.slane %v258, 5
      %v817 = vrot.slane %v816, 4
      %v818 = vrot.slane %v259, 5
      %v819 = vsel %vm780, %v817, %v818
      %v820 = vrot.slane %v818, 4
      %v821 = vrot.slane %v260, 5
      %v822 = vsel %vm780, %v820, %v821
      %v823 = vrot.slane %v261, 5
      %v824 = vrot.slane %v823, 4
      %v825 = vrot.slane %v262, 5
      %v826 = vsel %vm780, %v824, %v825
      %v827 = vrot.slane %v825, 4
      %v828 = vrot.slane %v263, 5
      %v829 = vsel %vm780, %v827, %v828
      %v830 = vrot.slane %v264, 5
      %v831 = vrot.slane %v830, 4
      %v832 = vrot.slane %v265, 5
      %v833 = vsel %vm780, %v831, %v832
      %v834 = vrot.slane %v832, 4
      %v835 = vrot.slane %v266, 5
      %v836 = vsel %vm780, %v834, %v835
      %s837 = scalar_lea.vmem %s1, 96
      %v838 = vld [vmem:[%s837] sm:$0xf]
      %v839 = vld [vmem:[%s837 + $0x4] sm:$0xf]
      %v840 = vld [vmem:[%s837 + $0x8] sm:$0xf]
      %v841 = vld [vmem:[%s837 + $0xc] sm:$0xf]
      %v842 = vld [vmem:[%s837 + $0x10] sm:$0xf]
      %v843 = vld [vmem:[%s837 + $0x14] sm:$0xf]
      %v844 = vld [vmem:[%s837 + $0x18] sm:$0xf]
      %v845 = vld [vmem:[%s837 + $0x1c] sm:$0xf]
      %v846 = vld [vmem:[%s837 + $0x20] sm:$0xf]
      %v847 = vld [vmem:[%s837 + $0x24] sm:$0xf]
      %v848 = vld [vmem:[%s837 + $0x28] sm:$0xf]
      %v849 = vld [vmem:[%s837 + $0x2c] sm:$0xf]
      %v850 = vunpack.c.l.b16 %v784
      %v851 = vunpack.c.l.b16 %v787
      %v852 = vunpack.c.l.b16 %v791
      %v853 = vunpack.c.l.b16 %v794
      %v854 = vunpack.c.l.b16 %v798
      %v855 = vunpack.c.l.b16 %v801
      %v856 = vunpack.c.l.b16 %v805
      %v857 = vunpack.c.l.b16 %v808
      %v858 = vunpack.c.l.b16 %v812
      %v859 = vunpack.c.l.b16 %v815
      %v860 = vunpack.c.l.b16 %v819
      %v861 = vunpack.c.l.b16 %v822
      %v862 = vunpack.c.l.b16 %v826
      %v863 = vunpack.c.l.b16 %v829
      %v864 = vunpack.c.l.b16 %v833
      %v865 = vunpack.c.l.b16 %v836
      %v866 = vpack.c.b16 %v851, %v850
      %v867 = vpack.c.b16 %v853, %v852
      %v868 = vpack.c.b16 %v855, %v854
      %v869 = vpack.c.b16 %v857, %v856
      %v870 = vpack.c.b16 %v859, %v858
      %v871 = vpack.c.b16 %v861, %v860
      %v872 = vpack.c.b16 %v863, %v862
      %v873 = vpack.c.b16 %v865, %v864
      %v886 = vunpack.c.l.b16 %v838
      %v887 = vunpack.c.l.b16 %v839
      %v888 = vunpack.c.l.b16 %v840
      %v889 = vunpack.c.l.b16 %v841
      %v890 = vunpack.c.l.b16 %v842
      %v891 = vunpack.c.l.b16 %v843
      %v892 = vunpack.c.l.b16 %v844
      %v893 = vunpack.c.l.b16 %v845
      %v894 = vunpack.c.l.b16 %v846
      %v895 = vunpack.c.l.b16 %v847
      %v896 = vunpack.c.l.b16 %v848
      %v897 = vunpack.c.l.b16 %v849
      %v898 = vpack.c.b16 %v887, %v886
      %v899 = vpack.c.b16 %v889, %v888
      %v900 = vpack.c.b16 %v891, %v890
      %v901 = vpack.c.b16 %v893, %v892
      %v902 = vpack.c.b16 %v895, %v894
      %v903 = vpack.c.b16 %v897, %v896
      %v911 = vsel %vm547, %v866, 0
      %v914 = vsel %vm547, %v867, 0
      %v917 = vsel %vm547, %v868, 0
      %v920 = vsel %vm547, %v869, 0
      %v923 = vsel %vm547, %v870, 0
      %v926 = vsel %vm547, %v871, 0
      %v929 = vsel %vm547, %v872, 0
      %v932 = vsel %vm547, %v873, 0
      %934 = vmatpush.bf16.msra.mxu0 0
      %935 = vmatpush.bf16.msra.mxu0 0
      %936 = vmatpush.bf16.msra.mxu0 %v903
      %937 = vmatpush.bf16.msra.mxu0 %v902
      %938 = vmatpush.bf16.msra.mxu0 %v901
      %939 = vmatpush.bf16.msra.mxu0 %v900
      %940 = vmatpush.bf16.msra.mxu0 %v899
      %941 = vmatpush.bf16.msra.mxu0 %v898
      %942 = vmatmul.bf16.gmra.mxu0 %v911
      %v943 = vpop.f32.mrf.mxu0
      %v944 = vadd.f32 0.0, %v943
      %v945 = vpop.f32.mrf.mxu0
      %v946 = vadd.f32 0.0, %v945
      %947 = vmatmul.bf16.gmra.mxu0 %v914
      %v948 = vpop.f32.mrf.mxu0
      %v949 = vadd.f32 0.0, %v948
      %v950 = vpop.f32.mrf.mxu0
      %v951 = vadd.f32 0.0, %v950
      %952 = vmatmul.bf16.gmra.mxu0 %v917
      %v953 = vpop.f32.mrf.mxu0
      %v954 = vadd.f32 0.0, %v953
      %v955 = vpop.f32.mrf.mxu0
      %v956 = vadd.f32 0.0, %v955
      %957 = vmatmul.bf16.gmra.mxu0 %v920
      %v958 = vpop.f32.mrf.mxu0
      %v959 = vadd.f32 0.0, %v958
      %v960 = vpop.f32.mrf.mxu0
      %v961 = vadd.f32 0.0, %v960
      %962 = vmatmul.bf16.gmra.mxu0 %v923
      %v963 = vpop.f32.mrf.mxu0
      %v964 = vadd.f32 0.0, %v963
      %v965 = vpop.f32.mrf.mxu0
      %v966 = vadd.f32 0.0, %v965
      %967 = vmatmul.bf16.gmra.mxu0 %v926
      %v968 = vpop.f32.mrf.mxu0
      %v969 = vadd.f32 0.0, %v968
      %v970 = vpop.f32.mrf.mxu0
      %v971 = vadd.f32 0.0, %v970
      %972 = vmatmul.bf16.gmra.mxu0 %v929
      %v973 = vpop.f32.mrf.mxu0
      %v974 = vadd.f32 0.0, %v973
      %v975 = vpop.f32.mrf.mxu0
      %v976 = vadd.f32 0.0, %v975
      %977 = vmatmul.bf16.gmra.mxu0 %v932
      %v978 = vpop.f32.mrf.mxu0
      %v979 = vadd.f32 0.0, %v978
      %v980 = vpop.f32.mrf.mxu0
      %v981 = vadd.f32 0.0, %v980
      %982 = vdwg.mxu0
      %v983 = vadd.f32 %v731, %v944
      %v984 = vadd.f32 %v733, %v946
      %v985 = vadd.f32 %v736, %v949
      %v986 = vadd.f32 %v738, %v951
      %v987 = vadd.f32 %v741, %v954
      %v988 = vadd.f32 %v743, %v956
      %v989 = vadd.f32 %v746, %v959
      %v990 = vadd.f32 %v748, %v961
      %v991 = vadd.f32 %v751, %v964
      %v992 = vadd.f32 %v753, %v966
      %v993 = vadd.f32 %v756, %v969
      %v994 = vadd.f32 %v758, %v971
      %v995 = vadd.f32 %v761, %v974
      %v996 = vadd.f32 %v763, %v976
      %v997 = vadd.f32 %v766, %v979
      %v998 = vadd.f32 %v768, %v981
      %v999 = vld [vmem:[%s2] sm:$0x1]
      %v1001 = vperm.slane %v999, 0
      %v1003 = vmul.f32 %v983, %v1001
      %v1004 = vmul.f32 %v984, %v1001
      %v1005 = vmul.f32 %v985, %v1001
      %v1006 = vmul.f32 %v986, %v1001
      %v1007 = vmul.f32 %v987, %v1001
      %v1008 = vmul.f32 %v988, %v1001
      %v1009 = vmul.f32 %v989, %v1001
      %v1010 = vmul.f32 %v990, %v1001
      %v1011 = vmul.f32 %v991, %v1001
      %v1012 = vmul.f32 %v992, %v1001
      %v1013 = vmul.f32 %v993, %v1001
      %v1014 = vmul.f32 %v994, %v1001
      %v1015 = vmul.f32 %v995, %v1001
      %v1016 = vmul.f32 %v996, %v1001
      %v1017 = vmul.f32 %v997, %v1001
      %v1018 = vmul.f32 %v998, %v1001
      %v1019 = vld [vmem:[%s3] sm:$0x1]
      %v1021 = vperm.slane %v1019, 0
      %v1023 = vadd.f32 %v1003, %v1021
      %v1024 = vadd.f32 %v1004, %v1021
      %v1025 = vadd.f32 %v1005, %v1021
      %v1026 = vadd.f32 %v1006, %v1021
      %v1027 = vadd.f32 %v1007, %v1021
      %v1028 = vadd.f32 %v1008, %v1021
      %v1029 = vadd.f32 %v1009, %v1021
      %v1030 = vadd.f32 %v1010, %v1021
      %v1031 = vadd.f32 %v1011, %v1021
      %v1032 = vadd.f32 %v1012, %v1021
      %v1033 = vadd.f32 %v1013, %v1021
      %v1034 = vadd.f32 %v1014, %v1021
      %v1035 = vadd.f32 %v1015, %v1021
      %v1036 = vadd.f32 %v1016, %v1021
      %v1037 = vadd.f32 %v1017, %v1021
      %v1038 = vadd.f32 %v1018, %v1021
      %v1039 = vxor.u32 %v1023, 2147483648
      %v1040 = vxor.u32 %v1024, 2147483648
      %v1041 = vxor.u32 %v1025, 2147483648
      %v1042 = vxor.u32 %v1026, 2147483648
      %v1043 = vxor.u32 %v1027, 2147483648
      %v1044 = vxor.u32 %v1028, 2147483648
      %v1045 = vxor.u32 %v1029, 2147483648
      %v1046 = vxor.u32 %v1030, 2147483648
      %v1047 = vxor.u32 %v1031, 2147483648
      %v1048 = vxor.u32 %v1032, 2147483648
      %v1049 = vxor.u32 %v1033, 2147483648
      %v1050 = vxor.u32 %v1034, 2147483648
      %v1051 = vxor.u32 %v1035, 2147483648
      %v1052 = vxor.u32 %v1036, 2147483648
      %v1053 = vxor.u32 %v1037, 2147483648
      %v1054 = vxor.u32 %v1038, 2147483648
      %v1055 = vmul.f32 %v1039, 1.442695
      %v1056 = vpow.pop %v1055
      %v1057 = vmul.f32 %v1040, 1.442695
      %v1058 = vpow.pop %v1057
      %v1059 = vmul.f32 %v1041, 1.442695
      %v1060 = vpow.pop %v1059
      %v1061 = vmul.f32 %v1042, 1.442695
      %v1062 = vpow.pop %v1061
      %v1063 = vmul.f32 %v1043, 1.442695
      %v1064 = vpow.pop %v1063
      %v1065 = vmul.f32 %v1044, 1.442695
      %v1066 = vpow.pop %v1065
      %v1067 = vmul.f32 %v1045, 1.442695
      %v1068 = vpow.pop %v1067
      %v1069 = vmul.f32 %v1046, 1.442695
      %v1070 = vpow.pop %v1069
      %v1071 = vmul.f32 %v1047, 1.442695
      %v1072 = vpow.pop %v1071
      %v1073 = vmul.f32 %v1048, 1.442695
      %v1074 = vpow.pop %v1073
      %v1075 = vmul.f32 %v1049, 1.442695
      %v1076 = vpow.pop %v1075
      %v1077 = vmul.f32 %v1050, 1.442695
      %v1078 = vpow.pop %v1077
      %v1079 = vmul.f32 %v1051, 1.442695
      %v1080 = vpow.pop %v1079
      %v1081 = vmul.f32 %v1052, 1.442695
      %v1082 = vpow.pop %v1081
      %v1083 = vmul.f32 %v1053, 1.442695
      %v1084 = vpow.pop %v1083
      %v1085 = vmul.f32 %v1054, 1.442695
      %v1086 = vpow.pop %v1085
      %v1087 = vadd.f32 %v1056, 1.0
      %v1088 = vadd.f32 %v1058, 1.0
      %v1089 = vadd.f32 %v1060, 1.0
      %v1090 = vadd.f32 %v1062, 1.0
      %v1091 = vadd.f32 %v1064, 1.0
      %v1092 = vadd.f32 %v1066, 1.0
      %v1093 = vadd.f32 %v1068, 1.0
      %v1094 = vadd.f32 %v1070, 1.0
      %v1095 = vadd.f32 %v1072, 1.0
      %v1096 = vadd.f32 %v1074, 1.0
      %v1097 = vadd.f32 %v1076, 1.0
      %v1098 = vadd.f32 %v1078, 1.0
      %v1099 = vadd.f32 %v1080, 1.0
      %v1100 = vadd.f32 %v1082, 1.0
      %v1101 = vadd.f32 %v1084, 1.0
      %v1102 = vadd.f32 %v1086, 1.0
      %v1103 = vrcp.pop %v1087
      %v1104 = vmul.f32 %v1087, %v1103
      %v1105 = vsub.f32 1.0, %v1104
      %v1106 = vmul.f32 %v1103, %v1105
      %v1107 = vadd.f32 %v1103, %v1106
      %vm1108 = vweird.f32 %v1087
      %vm1109 = vweird.f32 %v1103
      %vm1110 = vmor %vm1108, %vm1109
      %v1111 = vsel %vm1110, %v1103, %v1107
      %v1112 = vand.u32 2147483647, %v1087
      %vm1113 = vcmp.eq.f32.partialorder %v1112, 8.507059e+37
      %v1114 = vand.u32 %v1087, 2147483648
      %v1115 = vor.u32 1.1754944e-38, %v1114
      %v1116 = vsel %vm1113, %v1115, %v1111
      %v1117 = vmul.f32 1.0, %v1116
      %v1118 = vrcp.pop %v1088
      %v1119 = vmul.f32 %v1088, %v1118
      %v1120 = vsub.f32 1.0, %v1119
      %v1121 = vmul.f32 %v1118, %v1120
      %v1122 = vadd.f32 %v1118, %v1121
      %vm1123 = vweird.f32 %v1088
      %vm1124 = vweird.f32 %v1118
      %vm1125 = vmor %vm1123, %vm1124
      %v1126 = vsel %vm1125, %v1118, %v1122
      %v1127 = vand.u32 2147483647, %v1088
      %vm1128 = vcmp.eq.f32.partialorder %v1127, 8.507059e+37
      %v1129 = vand.u32 %v1088, 2147483648
      %v1130 = vor.u32 1.1754944e-38, %v1129
      %v1131 = vsel %vm1128, %v1130, %v1126
      %v1132 = vmul.f32 1.0, %v1131
      %v1133 = vrcp.pop %v1089
      %v1134 = vmul.f32 %v1089, %v1133
      %v1135 = vsub.f32 1.0, %v1134
      %v1136 = vmul.f32 %v1133, %v1135
      %v1137 = vadd.f32 %v1133, %v1136
      %vm1138 = vweird.f32 %v1089
      %vm1139 = vweird.f32 %v1133
      %vm1140 = vmor %vm1138, %vm1139
      %v1141 = vsel %vm1140, %v1133, %v1137
      %v1142 = vand.u32 2147483647, %v1089
      %vm1143 = vcmp.eq.f32.partialorder %v1142, 8.507059e+37
      %v1144 = vand.u32 %v1089, 2147483648
      %v1145 = vor.u32 1.1754944e-38, %v1144
      %v1146 = vsel %vm1143, %v1145, %v1141
      %v1147 = vmul.f32 1.0, %v1146
      %v1148 = vrcp.pop %v1090
      %v1149 = vmul.f32 %v1090, %v1148
      %v1150 = vsub.f32 1.0, %v1149
      %v1151 = vmul.f32 %v1148, %v1150
      %v1152 = vadd.f32 %v1148, %v1151
      %vm1153 = vweird.f32 %v1090
      %vm1154 = vweird.f32 %v1148
      %vm1155 = vmor %vm1153, %vm1154
      %v1156 = vsel %vm1155, %v1148, %v1152
      %v1157 = vand.u32 2147483647, %v1090
      %vm1158 = vcmp.eq.f32.partialorder %v1157, 8.507059e+37
      %v1159 = vand.u32 %v1090, 2147483648
      %v1160 = vor.u32 1.1754944e-38, %v1159
      %v1161 = vsel %vm1158, %v1160, %v1156
      %v1162 = vmul.f32 1.0, %v1161
      %v1163 = vrcp.pop %v1091
      %v1164 = vmul.f32 %v1091, %v1163
      %v1165 = vsub.f32 1.0, %v1164
      %v1166 = vmul.f32 %v1163, %v1165
      %v1167 = vadd.f32 %v1163, %v1166
      %vm1168 = vweird.f32 %v1091
      %vm1169 = vweird.f32 %v1163
      %vm1170 = vmor %vm1168, %vm1169
      %v1171 = vsel %vm1170, %v1163, %v1167
      %v1172 = vand.u32 2147483647, %v1091
      %vm1173 = vcmp.eq.f32.partialorder %v1172, 8.507059e+37
      %v1174 = vand.u32 %v1091, 2147483648
      %v1175 = vor.u32 1.1754944e-38, %v1174
      %v1176 = vsel %vm1173, %v1175, %v1171
      %v1177 = vmul.f32 1.0, %v1176
      %v1178 = vrcp.pop %v1092
      %v1179 = vmul.f32 %v1092, %v1178
      %v1180 = vsub.f32 1.0, %v1179
      %v1181 = vmul.f32 %v1178, %v1180
      %v1182 = vadd.f32 %v1178, %v1181
      %vm1183 = vweird.f32 %v1092
      %vm1184 = vweird.f32 %v1178
      %vm1185 = vmor %vm1183, %vm1184
      %v1186 = vsel %vm1185, %v1178, %v1182
      %v1187 = vand.u32 2147483647, %v1092
      %vm1188 = vcmp.eq.f32.partialorder %v1187, 8.507059e+37
      %v1189 = vand.u32 %v1092, 2147483648
      %v1190 = vor.u32 1.1754944e-38, %v1189
      %v1191 = vsel %vm1188, %v1190, %v1186
      %v1192 = vmul.f32 1.0, %v1191
      %v1193 = vrcp.pop %v1093
      %v1194 = vmul.f32 %v1093, %v1193
      %v1195 = vsub.f32 1.0, %v1194
      %v1196 = vmul.f32 %v1193, %v1195
      %v1197 = vadd.f32 %v1193, %v1196
      %vm1198 = vweird.f32 %v1093
      %vm1199 = vweird.f32 %v1193
      %vm1200 = vmor %vm1198, %vm1199
      %v1201 = vsel %vm1200, %v1193, %v1197
      %v1202 = vand.u32 2147483647, %v1093
      %vm1203 = vcmp.eq.f32.partialorder %v1202, 8.507059e+37
      %v1204 = vand.u32 %v1093, 2147483648
      %v1205 = vor.u32 1.1754944e-38, %v1204
      %v1206 = vsel %vm1203, %v1205, %v1201
      %v1207 = vmul.f32 1.0, %v1206
      %v1208 = vrcp.pop %v1094
      %v1209 = vmul.f32 %v1094, %v1208
      %v1210 = vsub.f32 1.0, %v1209
      %v1211 = vmul.f32 %v1208, %v1210
      %v1212 = vadd.f32 %v1208, %v1211
      %vm1213 = vweird.f32 %v1094
      %vm1214 = vweird.f32 %v1208
      %vm1215 = vmor %vm1213, %vm1214
      %v1216 = vsel %vm1215, %v1208, %v1212
      %v1217 = vand.u32 2147483647, %v1094
      %vm1218 = vcmp.eq.f32.partialorder %v1217, 8.507059e+37
      %v1219 = vand.u32 %v1094, 2147483648
      %v1220 = vor.u32 1.1754944e-38, %v1219
      %v1221 = vsel %vm1218, %v1220, %v1216
      %v1222 = vmul.f32 1.0, %v1221
      %v1223 = vrcp.pop %v1095
      %v1224 = vmul.f32 %v1095, %v1223
      %v1225 = vsub.f32 1.0, %v1224
      %v1226 = vmul.f32 %v1223, %v1225
      %v1227 = vadd.f32 %v1223, %v1226
      %vm1228 = vweird.f32 %v1095
      %vm1229 = vweird.f32 %v1223
      %vm1230 = vmor %vm1228, %vm1229
      %v1231 = vsel %vm1230, %v1223, %v1227
      %v1232 = vand.u32 2147483647, %v1095
      %vm1233 = vcmp.eq.f32.partialorder %v1232, 8.507059e+37
      %v1234 = vand.u32 %v1095, 2147483648
      %v1235 = vor.u32 1.1754944e-38, %v1234
      %v1236 = vsel %vm1233, %v1235, %v1231
      %v1237 = vmul.f32 1.0, %v1236
      %v1238 = vrcp.pop %v1096
      %v1239 = vmul.f32 %v1096, %v1238
      %v1240 = vsub.f32 1.0, %v1239
      %v1241 = vmul.f32 %v1238, %v1240
      %v1242 = vadd.f32 %v1238, %v1241
      %vm1243 = vweird.f32 %v1096
      %vm1244 = vweird.f32 %v1238
      %vm1245 = vmor %vm1243, %vm1244
      %v1246 = vsel %vm1245, %v1238, %v1242
      %v1247 = vand.u32 2147483647, %v1096
      %vm1248 = vcmp.eq.f32.partialorder %v1247, 8.507059e+37
      %v1249 = vand.u32 %v1096, 2147483648
      %v1250 = vor.u32 1.1754944e-38, %v1249
      %v1251 = vsel %vm1248, %v1250, %v1246
      %v1252 = vmul.f32 1.0, %v1251
      %v1253 = vrcp.pop %v1097
      %v1254 = vmul.f32 %v1097, %v1253
      %v1255 = vsub.f32 1.0, %v1254
      %v1256 = vmul.f32 %v1253, %v1255
      %v1257 = vadd.f32 %v1253, %v1256
      %vm1258 = vweird.f32 %v1097
      %vm1259 = vweird.f32 %v1253
      %vm1260 = vmor %vm1258, %vm1259
      %v1261 = vsel %vm1260, %v1253, %v1257
      %v1262 = vand.u32 2147483647, %v1097
      %vm1263 = vcmp.eq.f32.partialorder %v1262, 8.507059e+37
      %v1264 = vand.u32 %v1097, 2147483648
      %v1265 = vor.u32 1.1754944e-38, %v1264
      %v1266 = vsel %vm1263, %v1265, %v1261
      %v1267 = vmul.f32 1.0, %v1266
      %v1268 = vrcp.pop %v1098
      %v1269 = vmul.f32 %v1098, %v1268
      %v1270 = vsub.f32 1.0, %v1269
      %v1271 = vmul.f32 %v1268, %v1270
      %v1272 = vadd.f32 %v1268, %v1271
      %vm1273 = vweird.f32 %v1098
      %vm1274 = vweird.f32 %v1268
      %vm1275 = vmor %vm1273, %vm1274
      %v1276 = vsel %vm1275, %v1268, %v1272
      %v1277 = vand.u32 2147483647, %v1098
      %vm1278 = vcmp.eq.f32.partialorder %v1277, 8.507059e+37
      %v1279 = vand.u32 %v1098, 2147483648
      %v1280 = vor.u32 1.1754944e-38, %v1279
      %v1281 = vsel %vm1278, %v1280, %v1276
      %v1282 = vmul.f32 1.0, %v1281
      %v1283 = vrcp.pop %v1099
      %v1284 = vmul.f32 %v1099, %v1283
      %v1285 = vsub.f32 1.0, %v1284
      %v1286 = vmul.f32 %v1283, %v1285
      %v1287 = vadd.f32 %v1283, %v1286
      %vm1288 = vweird.f32 %v1099
      %vm1289 = vweird.f32 %v1283
      %vm1290 = vmor %vm1288, %vm1289
      %v1291 = vsel %vm1290, %v1283, %v1287
      %v1292 = vand.u32 2147483647, %v1099
      %vm1293 = vcmp.eq.f32.partialorder %v1292, 8.507059e+37
      %v1294 = vand.u32 %v1099, 2147483648
      %v1295 = vor.u32 1.1754944e-38, %v1294
      %v1296 = vsel %vm1293, %v1295, %v1291
      %v1297 = vmul.f32 1.0, %v1296
      %v1298 = vrcp.pop %v1100
      %v1299 = vmul.f32 %v1100, %v1298
      %v1300 = vsub.f32 1.0, %v1299
      %v1301 = vmul.f32 %v1298, %v1300
      %v1302 = vadd.f32 %v1298, %v1301
      %vm1303 = vweird.f32 %v1100
      %vm1304 = vweird.f32 %v1298
      %vm1305 = vmor %vm1303, %vm1304
      %v1306 = vsel %vm1305, %v1298, %v1302
      %v1307 = vand.u32 2147483647, %v1100
      %vm1308 = vcmp.eq.f32.partialorder %v1307, 8.507059e+37
      %v1309 = vand.u32 %v1100, 2147483648
      %v1310 = vor.u32 1.1754944e-38, %v1309
      %v1311 = vsel %vm1308, %v1310, %v1306
      %v1312 = vmul.f32 1.0, %v1311
      %v1313 = vrcp.pop %v1101
      %v1314 = vmul.f32 %v1101, %v1313
      %v1315 = vsub.f32 1.0, %v1314
      %v1316 = vmul.f32 %v1313, %v1315
      %v1317 = vadd.f32 %v1313, %v1316
      %vm1318 = vweird.f32 %v1101
      %vm1319 = vweird.f32 %v1313
      %vm1320 = vmor %vm1318, %vm1319
      %v1321 = vsel %vm1320, %v1313, %v1317
      %v1322 = vand.u32 2147483647, %v1101
      %vm1323 = vcmp.eq.f32.partialorder %v1322, 8.507059e+37
      %v1324 = vand.u32 %v1101, 2147483648
      %v1325 = vor.u32 1.1754944e-38, %v1324
      %v1326 = vsel %vm1323, %v1325, %v1321
      %v1327 = vmul.f32 1.0, %v1326
      %v1328 = vrcp.pop %v1102
      %v1329 = vmul.f32 %v1102, %v1328
      %v1330 = vsub.f32 1.0, %v1329
      %v1331 = vmul.f32 %v1328, %v1330
      %v1332 = vadd.f32 %v1328, %v1331
      %vm1333 = vweird.f32 %v1102
      %vm1334 = vweird.f32 %v1328
      %vm1335 = vmor %vm1333, %vm1334
      %v1336 = vsel %vm1335, %v1328, %v1332
      %v1337 = vand.u32 2147483647, %v1102
      %vm1338 = vcmp.eq.f32.partialorder %v1337, 8.507059e+37
      %v1339 = vand.u32 %v1102, 2147483648
      %v1340 = vor.u32 1.1754944e-38, %v1339
      %v1341 = vsel %vm1338, %v1340, %v1336
      %v1342 = vmul.f32 1.0, %v1341
      %v1343 = vmul.f32 %v1023, %v1117
      %v1344 = vmul.f32 %v1024, %v1132
      %v1345 = vmul.f32 %v1025, %v1147
      %v1346 = vmul.f32 %v1026, %v1162
      %v1347 = vmul.f32 %v1027, %v1177
      %v1348 = vmul.f32 %v1028, %v1192
      %v1349 = vmul.f32 %v1029, %v1207
      %v1350 = vmul.f32 %v1030, %v1222
      %v1351 = vmul.f32 %v1031, %v1237
      %v1352 = vmul.f32 %v1032, %v1252
      %v1353 = vmul.f32 %v1033, %v1267
      %v1354 = vmul.f32 %v1034, %v1282
      %v1355 = vmul.f32 %v1035, %v1297
      %v1356 = vmul.f32 %v1036, %v1312
      %v1357 = vmul.f32 %v1037, %v1327
      %v1358 = vmul.f32 %v1038, %v1342
      %v1359 = vpack.c.bf16 %v1343, %v1343
      %v1360 = vpack.c.bf16 %v1344, %v1344
      %v1361 = vpack.c.bf16 %v1345, %v1345
      %v1362 = vpack.c.bf16 %v1346, %v1346
      %v1363 = vpack.c.bf16 %v1347, %v1347
      %v1364 = vpack.c.bf16 %v1348, %v1348
      %v1365 = vpack.c.bf16 %v1349, %v1349
      %v1366 = vpack.c.bf16 %v1350, %v1350
      %v1367 = vpack.c.bf16 %v1351, %v1351
      %v1368 = vpack.c.bf16 %v1352, %v1352
      %v1369 = vpack.c.bf16 %v1353, %v1353
      %v1370 = vpack.c.bf16 %v1354, %v1354
      %v1371 = vpack.c.bf16 %v1355, %v1355
      %v1372 = vpack.c.bf16 %v1356, %v1356
      %v1373 = vpack.c.bf16 %v1357, %v1357
      %v1374 = vpack.c.bf16 %v1358, %v1358
      %vm1375 = vcmask 519168
      %1376 = vst.msk [vmem:[%s240] sm:$0xf] %vm1375, %v1359
      %1377 = vst.msk [vmem:[%s240 + $0x4] sm:$0xf] %vm1375, %v1360
      %1378 = vst.msk [vmem:[%s240 + $0x8] sm:$0xf] %vm1375, %v1361
      %1379 = vst.msk [vmem:[%s240 + $0xc] sm:$0xf] %vm1375, %v1362
      %1380 = vst.msk [vmem:[%s240 + $0x10] sm:$0xf] %vm1375, %v1363
      %1381 = vst.msk [vmem:[%s240 + $0x14] sm:$0xf] %vm1375, %v1364
      %1382 = vst.msk [vmem:[%s240 + $0x18] sm:$0xf] %vm1375, %v1365
      %1383 = vst.msk [vmem:[%s240 + $0x1c] sm:$0xf] %vm1375, %v1366
      %1384 = vst.msk [vmem:[%s240 + $0x20] sm:$0xf] %vm1375, %v1367
      %1385 = vst.msk [vmem:[%s240 + $0x24] sm:$0xf] %vm1375, %v1368
      %1386 = vst.msk [vmem:[%s240 + $0x28] sm:$0xf] %vm1375, %v1369
      %1387 = vst.msk [vmem:[%s240 + $0x2c] sm:$0xf] %vm1375, %v1370
      %1388 = vst.msk [vmem:[%s240 + $0x30] sm:$0xf] %vm1375, %v1371
      %1389 = vst.msk [vmem:[%s240 + $0x34] sm:$0xf] %vm1375, %v1372
      %1390 = vst.msk [vmem:[%s240 + $0x38] sm:$0xf] %vm1375, %v1373
      %1391 = vst.msk [vmem:[%s240 + $0x3c] sm:$0xf] %vm1375, %v1374
      %s1392 = smul.u32 8, %s20
      %p1393 = scmp.lt.s32.totalorder %s19, 1
      %s1394 = scalar_select %p1393, %s19, 1
      %p1395 = scmp.lt.s32.totalorder %s1392, 15
      %s1396 = scalar_select %p1395, %s1392, 15
      %s1397 = smul.addr %s1396, 2
      %s1398 = smul.addr %s1394, 32
      %s1399 = sadd.s32 %s1397, %s1398
      %s1400 = smul.addr %s1399, 4
      %s1401 = scalar_lea.vmem %s4, %s1400
      // Predicated region
      $region37: #{_lambda_.4} parent=35 // pred_check
        %p1402 = pneg %p138
      $region38: #{_lambda_.4} parent=35 // pred_check_branch
        %1404 = sbr.rel (%p1402) target = $region40
      $region39: #{_lambda_.4} parent=35 // pred_region
        %s1405 = smul.u32 8, %s20
      $region40: #{_lambda_.4} parent=35 // pred_fallthru
        _
    $region36: #{_lambda_.4} parent=5 // pred_fallthru
      _
    %p1406 = scmp.le.s32.totalorder 2, %s10
    // Predicated region
    $region41: #{_lambda_.4} parent=5 // pred_check
      %p1407 = pneg %p1406
    $region42: #{_lambda_.4} parent=5 // pred_check_branch
      %1409 = sbr.rel (%p1407) target = $region44
    $region43: #{_lambda_.4} parent=5 // pred_region
      %s1410 = ssub.s32 %s10, 2
      // Predicated region
      $region45: #{_lambda_.4} parent=43 // pred_check
        %p1411 = pneg %p144
      $region46: #{_lambda_.4} parent=43 // pred_check_branch
        %1413 = sbr.rel (%p1411) target = $region48
      $region47: #{_lambda_.4} parent=43 // pred_region
        %s1414 = smul.u32 8, %s22
        %p1415 = scmp.lt.s32.totalorder %s21, 1
        %s1416 = scalar_select %p1415, %s21, 1
        %p1417 = scmp.lt.s32.totalorder %s1414, 15
        %s1418 = scalar_select %p1417, %s1414, 15
        %s1419 = smul.addr %s1418, 2
        %s1420 = smul.addr %s1416, 32
        %s1421 = sadd.s32 %s1419, %s1420
        %s1422 = smul.addr %s1421, 4
        %s1423 = scalar_lea.vmem %s4, %s1422
      $region48: #{_lambda_.4} parent=43 // pred_fallthru
        _
    $region44: #{_lambda_.4} parent=5 // pred_fallthru
      _
  $region6: #{_lambda_.4} parent=0 // loop_footer
    %s14 = sadd.s32 1, %s10
  $region7: #{_lambda_.4} parent=0 // loop_footer_branch
    %9 = sbr.rel target = $region3
  $region8: #{_lambda_.4} parent=0 // loop_exit
    _

// kernel: _lambda_.5
$region0: #{_lambda_.5}
  #allocation0 [shape = 'u32[]', space=smem, size = 0x4, offset = 0x4, fixed_abs, tag = 'smem constant byte address 0x4 - core index']
  #allocation1 [shape = 'u32[72,128]{1,0:T(1,128)}', space=vmem, size = 0x9000, scoped, tag = 'internal scratch']
  %s0 = inlined_call_operand.vmem [shape: bf16[2,16,18,192], index: 0, kind: input, shape index: {}]
  %s1 = inlined_call_operand.vmem [shape: bf16[3,192,64], index: 1, kind: input, shape index: {}]
  %s2 = inlined_call_operand.vmem [shape: f32[1,64], index: 2, kind: input, shape index: {}]
  %s3 = inlined_call_operand.vmem [shape: f32[1,64], index: 3, kind: input, shape index: {}]
  %s4 = inlined_call_operand.vmem [shape: bf16[64,128], index: 4, kind: input, shape index: {}]
  %s5 = inlined_call_operand.vmem [shape: f32[1,128], index: 5, kind: input, shape index: {}]
  %s6 = inlined_call_operand.vmem [shape: f32[2,16,16,128], index: 6, kind: output, shape index: {}]
  %s7 = sld [smem:[#allocation0]]
  $region57: #{_lambda_.5} parent=0
    _
  %s9 = ssub.s32 1, %s7
  %s10 = scalar_select 0, %s9, %s7
  loop: start=0, step=1, limit=6
  $region2: #{_lambda_.5} parent=0 // loop_pre_header
    _
  $region3: #{_lambda_.5} parent=0 // loop_header
    %s12 = sphi 0, %s16
    %p13 = scmp.ge.s32.totalorder %s12, 6
    %s19 = sphi 0, %s31
    %s20 = sphi 0, %s27
    %s21 = sphi 0, %s19
    %s22 = sphi 0, %s20
    %s23 = sphi 0, %s21
    %s24 = sphi 0, %s22
    %s36 = sphi 0, %s38
    %s39 = sphi 0, %s36
    %s40 = sphi 0, %s39
    %s56 = sphi 0, %s40
    %s60 = sphi 0, %s60
    %s62 = sphi 0, %s60
    %s63 = sphi 0, %s62
    %s77 = sphi 0, %s63
    %s81 = sphi 0, %s81
    %s83 = sphi 0, %s81
    %s84 = sphi 0, %s83
    %s98 = sphi 0, %s84
    %s102 = sphi 0, %s102
    %s104 = sphi 0, %s102
    %s105 = sphi 0, %s104
    %s119 = sphi 0, %s105
    %s123 = sphi 0, %s123
    %s125 = sphi 0, %s123
    %s126 = sphi 0, %s125
    %s140 = sphi 0, %s126
    %s144 = sphi 0, %s144
    %s146 = sphi 0, %s144
    %s147 = sphi 0, %s146
    %s161 = sphi 0, %s147
    %s169 = sphi 0, %s171
    %s172 = sphi 0, %s169
    %s173 = sphi 0, %s172
    %s189 = sphi 0, %s173
  $region4: #{_lambda_.5} parent=0 // loop_header_branch
    %15 = sbr.rel (%p13) target = $region8
  $region5: #{_lambda_.5} parent=0 // loop_body
    %s17 = ssub.s32 %s12, 1
    %s18 = ssub.s32 %s12, 2
    %s25 = sadd.s32 1, %s20
    %p26 = scmp.ge.s32.totalorder %s25, 2
    %s27 = scalar_select %p26, 0, %s25
    %s28 = sadd.s32 1, %s19
    %s29 = scalar_select %p26, %s28, %s19
    %p30 = scmp.ge.s32.totalorder %s29, 2
    %s31 = scalar_select %p30, 0, %s29
    %s32 = ssub.s32 %s19, %s31
    %s33 = ssub.s32 %s20, %s27
    %s34 = sor.u32 %s32, %s33
    %p35 = scmp.eq.s32.totalorder %s34, 0
    %s37 = sadd.s32 %s36, 1
    %s38 = scalar_select %p35, %s36, %s37
    %p41 = pneg %p35
    %p42 = scmp.eq.s32.totalorder %s12, 3
    %p43 = por %p41, %p42
    %p44 = scmp.ne.s32.totalorder %s36, %s39
    %p45 = scmp.eq.s32.totalorder %s12, 0
    %p46 = por %p44, %p45
    %p47 = scmp.ne.s32.totalorder %s36, %s39
    %p48 = scmp.eq.s32.totalorder %s17, 3
    %p49 = por %p47, %p48
    %p50 = scmp.ne.s32.totalorder %s39, %s40
    %p51 = scmp.eq.s32.totalorder %s17, 0
    %p52 = por %p50, %p51
    %p53 = scmp.ne.s32.totalorder %s39, %s40
    %p54 = scmp.eq.s32.totalorder %s18, 3
    %p55 = por %p53, %p54
    %p57 = scmp.ne.s32.totalorder %s40, %s56
    %p58 = scmp.eq.s32.totalorder %s18, 0
    %p59 = por %p57, %p58
    %s61 = sadd.s32 %s60, 1
    %p64 = scmp.eq.s32.totalorder %s12, 3
    %p65 = scmp.ne.s32.totalorder %s60, %s62
    %p66 = scmp.eq.s32.totalorder %s12, 0
    %p67 = por %p65, %p66
    %p68 = scmp.ne.s32.totalorder %s60, %s62
    %p69 = scmp.eq.s32.totalorder %s17, 3
    %p70 = por %p68, %p69
    %p71 = scmp.ne.s32.totalorder %s62, %s63
    %p72 = scmp.eq.s32.totalorder %s17, 0
    %p73 = por %p71, %p72
    %p74 = scmp.ne.s32.totalorder %s62, %s63
    %p75 = scmp.eq.s32.totalorder %s18, 3
    %p76 = por %p74, %p75
    %p78 = scmp.ne.s32.totalorder %s63, %s77
    %p79 = scmp.eq.s32.totalorder %s18, 0
    %p80 = por %p78, %p79
    %s82 = sadd.s32 %s81, 1
    %p85 = scmp.eq.s32.totalorder %s12, 3
    %p86 = scmp.ne.s32.totalorder %s81, %s83
    %p87 = scmp.eq.s32.totalorder %s12, 0
    %p88 = por %p86, %p87
    %p89 = scmp.ne.s32.totalorder %s81, %s83
    %p90 = scmp.eq.s32.totalorder %s17, 3
    %p91 = por %p89, %p90
    %p92 = scmp.ne.s32.totalorder %s83, %s84
    %p93 = scmp.eq.s32.totalorder %s17, 0
    %p94 = por %p92, %p93
    %p95 = scmp.ne.s32.totalorder %s83, %s84
    %p96 = scmp.eq.s32.totalorder %s18, 3
    %p97 = por %p95, %p96
    %p99 = scmp.ne.s32.totalorder %s84, %s98
    %p100 = scmp.eq.s32.totalorder %s18, 0
    %p101 = por %p99, %p100
    %s103 = sadd.s32 %s102, 1
    %p106 = scmp.eq.s32.totalorder %s12, 3
    %p107 = scmp.ne.s32.totalorder %s102, %s104
    %p108 = scmp.eq.s32.totalorder %s12, 0
    %p109 = por %p107, %p108
    %p110 = scmp.ne.s32.totalorder %s102, %s104
    %p111 = scmp.eq.s32.totalorder %s17, 3
    %p112 = por %p110, %p111
    %p113 = scmp.ne.s32.totalorder %s104, %s105
    %p114 = scmp.eq.s32.totalorder %s17, 0
    %p115 = por %p113, %p114
    %p116 = scmp.ne.s32.totalorder %s104, %s105
    %p117 = scmp.eq.s32.totalorder %s18, 3
    %p118 = por %p116, %p117
    %p120 = scmp.ne.s32.totalorder %s105, %s119
    %p121 = scmp.eq.s32.totalorder %s18, 0
    %p122 = por %p120, %p121
    %s124 = sadd.s32 %s123, 1
    %p127 = scmp.eq.s32.totalorder %s12, 3
    %p128 = scmp.ne.s32.totalorder %s123, %s125
    %p129 = scmp.eq.s32.totalorder %s12, 0
    %p130 = por %p128, %p129
    %p131 = scmp.ne.s32.totalorder %s123, %s125
    %p132 = scmp.eq.s32.totalorder %s17, 3
    %p133 = por %p131, %p132
    %p134 = scmp.ne.s32.totalorder %s125, %s126
    %p135 = scmp.eq.s32.totalorder %s17, 0
    %p136 = por %p134, %p135
    %p137 = scmp.ne.s32.totalorder %s125, %s126
    %p138 = scmp.eq.s32.totalorder %s18, 3
    %p139 = por %p137, %p138
    %p141 = scmp.ne.s32.totalorder %s126, %s140
    %p142 = scmp.eq.s32.totalorder %s18, 0
    %p143 = por %p141, %p142
    %s145 = sadd.s32 %s144, 1
    %p148 = scmp.eq.s32.totalorder %s12, 3
    %p149 = scmp.ne.s32.totalorder %s144, %s146
    %p150 = scmp.eq.s32.totalorder %s12, 0
    %p151 = por %p149, %p150
    %p152 = scmp.ne.s32.totalorder %s144, %s146
    %p153 = scmp.eq.s32.totalorder %s17, 3
    %p154 = por %p152, %p153
    %p155 = scmp.ne.s32.totalorder %s146, %s147
    %p156 = scmp.eq.s32.totalorder %s17, 0
    %p157 = por %p155, %p156
    %p158 = scmp.ne.s32.totalorder %s146, %s147
    %p159 = scmp.eq.s32.totalorder %s18, 3
    %p160 = por %p158, %p159
    %p162 = scmp.ne.s32.totalorder %s147, %s161
    %p163 = scmp.eq.s32.totalorder %s18, 0
    %p164 = por %p162, %p163
    %s165 = ssub.s32 %s19, %s31
    %s166 = ssub.s32 %s20, %s27
    %s167 = sor.u32 %s165, %s166
    %p168 = scmp.eq.s32.totalorder %s167, 0
    %s170 = sadd.s32 %s169, 1
    %s171 = scalar_select %p168, %s169, %s170
    %p174 = pneg %p168
    %p175 = scmp.eq.s32.totalorder %s12, 3
    %p176 = por %p174, %p175
    %p177 = scmp.ne.s32.totalorder %s169, %s172
    %p178 = scmp.eq.s32.totalorder %s12, 0
    %p179 = por %p177, %p178
    %p180 = scmp.ne.s32.totalorder %s169, %s172
    %p181 = scmp.eq.s32.totalorder %s17, 3
    %p182 = por %p180, %p181
    %p183 = scmp.ne.s32.totalorder %s172, %s173
    %p184 = scmp.eq.s32.totalorder %s17, 0
    %p185 = por %p183, %p184
    %p186 = scmp.ne.s32.totalorder %s172, %s173
    %p187 = scmp.eq.s32.totalorder %s18, 3
    %p188 = por %p186, %p187
    %p190 = scmp.ne.s32.totalorder %s173, %s189
    %p191 = scmp.eq.s32.totalorder %s18, 0
    %p192 = por %p190, %p191
    %p193 = scmp.le.s32.totalorder 1, %s12
    %p194 = scmp.lt.s32.totalorder %s12, 5
    %p195 = pnand %p193, %p194
    %p196 = pneg %p195
    // Predicated region
    $region9: #{_lambda_.5} parent=5 // pred_check
      _
    $region10: #{_lambda_.5} parent=5 // pred_check_branch
      %198 = sbr.rel (%p195) target = $region12
    $region11: #{_lambda_.5} parent=5 // pred_region
      %s199 = ssub.s32 %s12, 1
      // Predicated region
      $region13: #{_lambda_.5} parent=11 // pred_check
        %p200 = pneg %p73
      $region14: #{_lambda_.5} parent=11 // pred_check_branch
        %202 = sbr.rel (%p200) target = $region16
      $region15: #{_lambda_.5} parent=11 // pred_region
        _
      $region16: #{_lambda_.5} parent=11 // pred_fallthru
        _
      // Predicated region
      $region17: #{_lambda_.5} parent=11 // pred_check
        %p203 = pneg %p94
      $region18: #{_lambda_.5} parent=11 // pred_check_branch
        %205 = sbr.rel (%p203) target = $region20
      $region19: #{_lambda_.5} parent=11 // pred_region
        _
      $region20: #{_lambda_.5} parent=11 // pred_fallthru
        _
      // Predicated region
      $region21: #{_lambda_.5} parent=11 // pred_check
        %p206 = pneg %p115
      $region22: #{_lambda_.5} parent=11 // pred_check_branch
        %208 = sbr.rel (%p206) target = $region24
      $region23: #{_lambda_.5} parent=11 // pred_region
        _
      $region24: #{_lambda_.5} parent=11 // pred_fallthru
        _
      // Predicated region
      $region25: #{_lambda_.5} parent=11 // pred_check
        %p209 = pneg %p136
      $region26: #{_lambda_.5} parent=11 // pred_check_branch
        %211 = sbr.rel (%p209) target = $region28
      $region27: #{_lambda_.5} parent=11 // pred_region
        _
      $region28: #{_lambda_.5} parent=11 // pred_fallthru
        _
      // Predicated region
      $region29: #{_lambda_.5} parent=11 // pred_check
        %p212 = pneg %p157
      $region30: #{_lambda_.5} parent=11 // pred_check_branch
        %214 = sbr.rel (%p212) target = $region32
      $region31: #{_lambda_.5} parent=11 // pred_region
        _
      $region32: #{_lambda_.5} parent=11 // pred_fallthru
        _
    $region12: #{_lambda_.5} parent=5 // pred_fallthru
      _
    %p215 = scmp.lt.s32.totalorder %s12, 4
    // Predicated region
    $region33: #{_lambda_.5} parent=5 // pred_check
      %p216 = pneg %p215
    $region34: #{_lambda_.5} parent=5 // pred_check_branch
      %218 = sbr.rel (%p216) target = $region36
    $region35: #{_lambda_.5} parent=5 // pred_region
      // Predicated region
      $region37: #{_lambda_.5} parent=35 // pred_check
        %p219 = pneg %p46
      $region38: #{_lambda_.5} parent=35 // pred_check_branch
        %221 = sbr.rel (%p219) target = $region40
      $region39: #{_lambda_.5} parent=35 // pred_region
        %s222 = smul.u32 8, %s20
        %p223 = scmp.lt.s32.totalorder %s19, 1
        %s224 = scalar_select %p223, %s19, 1
        %p225 = scmp.lt.s32.totalorder %s222, 15
        %s226 = scalar_select %p225, %s222, 15
        %s227 = smul.addr %s226, 6
        %s228 = smul.addr %s224, 96
        %s229 = sadd.s32 %s227, %s228
        %s230 = smul.addr %s229, 4
        %s231 = scalar_lea.vmem %s0, %s230
        %s232 = smul.u32 8, %s20
      $region40: #{_lambda_.5} parent=35 // pred_fallthru
        _
    $region36: #{_lambda_.5} parent=5 // pred_fallthru
      _
    %p233 = scmp.le.s32.totalorder 1, %s12
    %p234 = scmp.lt.s32.totalorder %s12, 5
    %p235 = pnand %p233, %p234
    %p236 = pneg %p235
    // Predicated region
    $region41: #{_lambda_.5} parent=5 // pred_check
      _
    $region42: #{_lambda_.5} parent=5 // pred_check_branch
      %238 = sbr.rel (%p235) target = $region44
    $region43: #{_lambda_.5} parent=5 // pred_region
      %s239 = ssub.s32 %s12, 1
      %s240 = smul.u32 8, %s22
      %p241 = scmp.lt.s32.totalorder %s21, 1
      %s242 = scalar_select %p241, %s21, 1
      %p243 = scmp.lt.s32.totalorder %s240, 15
      %s244 = scalar_select %p243, %s240, 15
      %s245 = smul.addr %s244, 6
      %s246 = smul.addr %s242, 96
      %s247 = sadd.s32 %s245, %s246
      %s248 = smul.addr %s247, 4
      %s249 = scalar_lea.vmem %s0, %s248
      %p250 = pneg %p52
      %p251 = pneg %p49
      %p252 = pneg %p73
      %p253 = pneg %p70
      %p254 = pneg %p94
      %p255 = pneg %p91
      %p256 = pneg %p115
      %p257 = pneg %p112
      %p258 = pneg %p136
      %p259 = pneg %p133
      %p260 = pneg %p157
      %p261 = pneg %p154
      %p262 = pneg %p185
      %p263 = pneg %p182
      %s264 = smul.u32 8, %s22
      %p265 = scmp.lt.s32.totalorder %s21, 1
      %s266 = scalar_select %p265, %s21, 1
      %p267 = scmp.lt.s32.totalorder %s264, 15
      %s268 = scalar_select %p267, %s264, 15
      %s269 = smul.addr %s268, 2
      %s270 = smul.addr %s266, 32
      %s271 = sadd.s32 %s269, %s270
      %s272 = smul.addr %s271, 8
      %s273 = scalar_lea.vmem %s6, %s272
      %s274 = smul.u32 8, %s22
      %p275 = scmp.lt.s32.totalorder %s21, 1
      %s276 = scalar_select %p275, %s21, 1
      %p277 = scmp.lt.s32.totalorder %s274, 15
      %s278 = scalar_select %p277, %s274, 15
      %s279 = smul.addr %s278, 6
      %s280 = smul.addr %s276, 96
      %s281 = sadd.s32 %s279, %s280
      %s282 = smul.addr %s281, 4
      %s283 = scalar_lea.vmem %s0, %s282
      %s284 = smul.u32 8, %s22
      %s285 = smul.u32 8, %s22
      %p286 = scmp.lt.s32.totalorder %s21, 1
      %s287 = scalar_select %p286, %s21, 1
      %p288 = scmp.lt.s32.totalorder %s285, 15
      %s289 = scalar_select %p288, %s285, 15
      %s290 = smul.addr %s289, 2
      %s291 = smul.addr %s287, 32
      %s292 = sadd.s32 %s290, %s291
      %s293 = smul.addr %s292, 8
      %s294 = scalar_lea.vmem %s6, %s293
      %s295 = smul.u32 8, %s22
      %v297 = vld [vmem:[%s283] sm:$0xff]
      %v298 = vld [vmem:[%s283 + $0x8] sm:$0xff]
      %v299 = vld [vmem:[%s283 + $0x10] sm:$0x11]
      %v300 = vld [vmem:[%s283 + $0x18] sm:$0xff]
      %v301 = vld [vmem:[%s283 + $0x20] sm:$0xff]
      %v302 = vld [vmem:[%s283 + $0x28] sm:$0x11]
      %v303 = vld [vmem:[%s283 + $0x30] sm:$0xff]
      %v304 = vld [vmem:[%s283 + $0x38] sm:$0xff]
      %v305 = vld [vmem:[%s283 + $0x40] sm:$0x11]
      %v306 = vld [vmem:[%s283 + $0x48] sm:$0xff]
      %v307 = vld [vmem:[%s283 + $0x50] sm:$0xff]
      %v308 = vld [vmem:[%s283 + $0x58] sm:$0x11]
      %v309 = vld [vmem:[%s283 + $0x60] sm:$0xff]
      %v310 = vld [vmem:[%s283 + $0x68] sm:$0xff]
      %v311 = vld [vmem:[%s283 + $0x70] sm:$0x11]
      %v312 = vld [vmem:[%s283 + $0x78] sm:$0xff]
      %v313 = vld [vmem:[%s283 + $0x80] sm:$0xff]
      %v314 = vld [vmem:[%s283 + $0x88] sm:$0x11]
      %v315 = vld [vmem:[%s283 + $0x90] sm:$0xff]
      %v316 = vld [vmem:[%s283 + $0x98] sm:$0xff]
      %v317 = vld [vmem:[%s283 + $0xa0] sm:$0x11]
      %v318 = vld [vmem:[%s283 + $0xa8] sm:$0xff]
      %v319 = vld [vmem:[%s283 + $0xb0] sm:$0xff]
      %v320 = vld [vmem:[%s283 + $0xb8] sm:$0x11]
      %v321 = vld [vmem:[%s1] sm:$0xf]
      %v322 = vld [vmem:[%s1 + $0x4] sm:$0xf]
      %v323 = vld [vmem:[%s1 + $0x8] sm:$0xf]
      %v324 = vld [vmem:[%s1 + $0xc] sm:$0xf]
      %v325 = vld [vmem:[%s1 + $0x10] sm:$0xf]
      %v326 = vld [vmem:[%s1 + $0x14] sm:$0xf]
      %v327 = vld [vmem:[%s1 + $0x18] sm:$0xf]
      %v328 = vld [vmem:[%s1 + $0x1c] sm:$0xf]
      %v329 = vld [vmem:[%s1 + $0x20] sm:$0xf]
      %v330 = vld [vmem:[%s1 + $0x24] sm:$0xf]
      %v331 = vld [vmem:[%s1 + $0x28] sm:$0xf]
      %v332 = vld [vmem:[%s1 + $0x2c] sm:$0xf]
      %v333 = vld [vmem:[%s1 + $0x30] sm:$0xf]
      %v334 = vld [vmem:[%s1 + $0x34] sm:$0xf]
      %v335 = vld [vmem:[%s1 + $0x38] sm:$0xf]
      %v336 = vld [vmem:[%s1 + $0x3c] sm:$0xf]
      %v337 = vld [vmem:[%s1 + $0x40] sm:$0xf]
      %v338 = vld [vmem:[%s1 + $0x44] sm:$0xf]
      %v339 = vld [vmem:[%s1 + $0x48] sm:$0xf]
      %v340 = vld [vmem:[%s1 + $0x4c] sm:$0xf]
      %v341 = vld [vmem:[%s1 + $0x50] sm:$0xf]
      %v342 = vld [vmem:[%s1 + $0x54] sm:$0xf]
      %v343 = vld [vmem:[%s1 + $0x58] sm:$0xf]
      %v344 = vld [vmem:[%s1 + $0x5c] sm:$0xf]
      %vm345 = vsmask.f32 3328
      %vm346 = vsmask.f32 7440
      %vm347 = vmor %vm345, %vm346
      %v349 = vshrl.u32 %v297, 16
      %v351 = vrot.slane %v349, 4
      %v352 = vshll.u32 %v297, 16
      %v354 = vrot.slane %v352, 5
      %v355 = vor.u32 %v351, %v354
      %v356 = vrot.slane %v355, 4
      %v358 = vshll.u32 %v298, 16
      %v360 = vrot.slane %v358, 5
      %v361 = vsel %vm347, %v356, %v360
      %v362 = vshrl.u32 %v298, 16
      %v364 = vrot.slane %v362, 4
      %v365 = vor.u32 %v364, %v360
      %v366 = vrot.slane %v365, 4
      %v368 = vshll.u32 %v299, 16
      %v370 = vrot.slane %v368, 5
      %v371 = vsel %vm347, %v366, %v370
      %v373 = vshrl.u32 %v300, 16
      %v375 = vrot.slane %v373, 4
      %v376 = vshll.u32 %v300, 16
      %v378 = vrot.slane %v376, 5
      %v379 = vor.u32 %v375, %v378
      %v380 = vrot.slane %v379, 4
      %v382 = vshll.u32 %v301, 16
      %v384 = vrot.slane %v382, 5
      %v385 = vsel %vm347, %v380, %v384
      %v386 = vshrl.u32 %v301, 16
      %v388 = vrot.slane %v386, 4
      %v389 = vor.u32 %v388, %v384
      %v390 = vrot.slane %v389, 4
      %v392 = vshll.u32 %v302, 16
      %v394 = vrot.slane %v392, 5
      %v395 = vsel %vm347, %v390, %v394
      %v397 = vshrl.u32 %v303, 16
      %v399 = vrot.slane %v397, 4
      %v400 = vshll.u32 %v303, 16
      %v402 = vrot.slane %v400, 5
      %v403 = vor.u32 %v399, %v402
      %v404 = vrot.slane %v403, 4
      %v406 = vshll.u32 %v304, 16
      %v408 = vrot.slane %v406, 5
      %v409 = vsel %vm347, %v404, %v408
      %v410 = vshrl.u32 %v304, 16
      %v412 = vrot.slane %v410, 4
      %v413 = vor.u32 %v412, %v408
      %v414 = vrot.slane %v413, 4
      %v416 = vshll.u32 %v305, 16
      %v418 = vrot.slane %v416, 5
      %v419 = vsel %vm347, %v414, %v418
      %v421 = vshrl.u32 %v306, 16
      %v423 = vrot.slane %v421, 4
      %v424 = vshll.u32 %v306, 16
      %v426 = vrot.slane %v424, 5
      %v427 = vor.u32 %v423, %v426
      %v428 = vrot.slane %v427, 4
      %v430 = vshll.u32 %v307, 16
      %v432 = vrot.slane %v430, 5
      %v433 = vsel %vm347, %v428, %v432
      %v434 = vshrl.u32 %v307, 16
      %v436 = vrot.slane %v434, 4
      %v437 = vor.u32 %v436, %v432
      %v438 = vrot.slane %v437, 4
      %v440 = vshll.u32 %v308, 16
      %v442 = vrot.slane %v440, 5
      %v443 = vsel %vm347, %v438, %v442
      %v445 = vshrl.u32 %v309, 16
      %v447 = vrot.slane %v445, 4
      %v448 = vshll.u32 %v309, 16
      %v450 = vrot.slane %v448, 5
      %v451 = vor.u32 %v447, %v450
      %v452 = vrot.slane %v451, 4
      %v454 = vshll.u32 %v310, 16
      %v456 = vrot.slane %v454, 5
      %v457 = vsel %vm347, %v452, %v456
      %v458 = vshrl.u32 %v310, 16
      %v460 = vrot.slane %v458, 4
      %v461 = vor.u32 %v460, %v456
      %v462 = vrot.slane %v461, 4
      %v464 = vshll.u32 %v311, 16
      %v466 = vrot.slane %v464, 5
      %v467 = vsel %vm347, %v462, %v466
      %v469 = vshrl.u32 %v312, 16
      %v471 = vrot.slane %v469, 4
      %v472 = vshll.u32 %v312, 16
      %v474 = vrot.slane %v472, 5
      %v475 = vor.u32 %v471, %v474
      %v476 = vrot.slane %v475, 4
      %v478 = vshll.u32 %v313, 16
      %v480 = vrot.slane %v478, 5
      %v481 = vsel %vm347, %v476, %v480
      %v482 = vshrl.u32 %v313, 16
      %v484 = vrot.slane %v482, 4
      %v485 = vor.u32 %v484, %v480
      %v486 = vrot.slane %v485, 4
      %v488 = vshll.u32 %v314, 16
      %v490 = vrot.slane %v488, 5
      %v491 = vsel %vm347, %v486, %v490
      %v493 = vshrl.u32 %v315, 16
      %v495 = vrot.slane %v493, 4
      %v496 = vshll.u32 %v315, 16
      %v498 = vrot.slane %v496, 5
      %v499 = vor.u32 %v495, %v498
      %v500 = vrot.slane %v499, 4
      %v502 = vshll.u32 %v316, 16
      %v504 = vrot.slane %v502, 5
      %v505 = vsel %vm347, %v500, %v504
      %v506 = vshrl.u32 %v316, 16
      %v508 = vrot.slane %v506, 4
      %v509 = vor.u32 %v508, %v504
      %v510 = vrot.slane %v509, 4
      %v512 = vshll.u32 %v317, 16
      %v514 = vrot.slane %v512, 5
      %v515 = vsel %vm347, %v510, %v514
      %v517 = vshrl.u32 %v318, 16
      %v519 = vrot.slane %v517, 4
      %v520 = vshll.u32 %v318, 16
      %v522 = vrot.slane %v520, 5
      %v523 = vor.u32 %v519, %v522
      %v524 = vrot.slane %v523, 4
      %v526 = vshll.u32 %v319, 16
      %v528 = vrot.slane %v526, 5
      %v529 = vsel %vm347, %v524, %v528
      %v530 = vshrl.u32 %v319, 16
      %v532 = vrot.slane %v530, 4
      %v533 = vor.u32 %v532, %v528
      %v534 = vrot.slane %v533, 4
      %v536 = vshll.u32 %v320, 16
      %v538 = vrot.slane %v536, 5
      %v539 = vsel %vm347, %v534, %v538
      %s540 = scalar_lea.vmem %s1, 96
      %v541 = vld [vmem:[%s540] sm:$0xf]
      %v542 = vld [vmem:[%s540 + $0x4] sm:$0xf]
      %v543 = vld [vmem:[%s540 + $0x8] sm:$0xf]
      %v544 = vld [vmem:[%s540 + $0xc] sm:$0xf]
      %v545 = vld [vmem:[%s540 + $0x10] sm:$0xf]
      %v546 = vld [vmem:[%s540 + $0x14] sm:$0xf]
      %v547 = vld [vmem:[%s540 + $0x18] sm:$0xf]
      %v548 = vld [vmem:[%s540 + $0x1c] sm:$0xf]
      %v549 = vld [vmem:[%s540 + $0x20] sm:$0xf]
      %v550 = vld [vmem:[%s540 + $0x24] sm:$0xf]
      %v551 = vld [vmem:[%s540 + $0x28] sm:$0xf]
      %v552 = vld [vmem:[%s540 + $0x2c] sm:$0xf]
      %v553 = vld [vmem:[%s540 + $0x30] sm:$0xf]
      %v554 = vld [vmem:[%s540 + $0x34] sm:$0xf]
      %v555 = vld [vmem:[%s540 + $0x38] sm:$0xf]
      %v556 = vld [vmem:[%s540 + $0x3c] sm:$0xf]
      %v557 = vld [vmem:[%s540 + $0x40] sm:$0xf]
      %v558 = vld [vmem:[%s540 + $0x44] sm:$0xf]
      %v559 = vld [vmem:[%s540 + $0x48] sm:$0xf]
      %v560 = vld [vmem:[%s540 + $0x4c] sm:$0xf]
      %v561 = vld [vmem:[%s540 + $0x50] sm:$0xf]
      %v562 = vld [vmem:[%s540 + $0x54] sm:$0xf]
      %v563 = vld [vmem:[%s540 + $0x58] sm:$0xf]
      %v564 = vld [vmem:[%s540 + $0x5c] sm:$0xf]
      %v565 = vunpack.c.l.b16 %v361
      %v566 = vunpack.c.h.b16 %v361
      %v567 = vunpack.c.l.b16 %v371
      %v568 = vunpack.c.h.b16 %v371
      %v569 = vunpack.c.l.b16 %v385
      %v570 = vunpack.c.h.b16 %v385
      %v571 = vunpack.c.l.b16 %v395
      %v572 = vunpack.c.h.b16 %v395
      %v573 = vunpack.c.l.b16 %v409
      %v574 = vunpack.c.h.b16 %v409
      %v575 = vunpack.c.l.b16 %v419
      %v576 = vunpack.c.h.b16 %v419
      %v577 = vunpack.c.l.b16 %v433
      %v578 = vunpack.c.h.b16 %v433
      %v579 = vunpack.c.l.b16 %v443
      %v580 = vunpack.c.h.b16 %v443
      %v581 = vunpack.c.l.b16 %v457
      %v582 = vunpack.c.h.b16 %v457
      %v583 = vunpack.c.l.b16 %v467
      %v584 = vunpack.c.h.b16 %v467
      %v585 = vunpack.c.l.b16 %v481
      %v586 = vunpack.c.h.b16 %v481
      %v587 = vunpack.c.l.b16 %v491
      %v588 = vunpack.c.h.b16 %v491
      %v589 = vunpack.c.l.b16 %v505
      %v590 = vunpack.c.h.b16 %v505
      %v591 = vunpack.c.l.b16 %v515
      %v592 = vunpack.c.h.b16 %v515
      %v593 = vunpack.c.l.b16 %v529
      %v594 = vunpack.c.h.b16 %v529
      %v595 = vunpack.c.l.b16 %v539
      %v596 = vunpack.c.h.b16 %v539
      %v597 = vpack.c.b16 %v567, %v565
      %v598 = vpack.c.b16 %v568, %v566
      %v599 = vpack.c.b16 %v571, %v569
      %v600 = vpack.c.b16 %v572, %v570
      %v601 = vpack.c.b16 %v575, %v573
      %v602 = vpack.c.b16 %v576, %v574
      %v603 = vpack.c.b16 %v579, %v577
      %v604 = vpack.c.b16 %v580, %v578
      %v605 = vpack.c.b16 %v583, %v581
      %v606 = vpack.c.b16 %v584, %v582
      %v607 = vpack.c.b16 %v587, %v585
      %v608 = vpack.c.b16 %v588, %v586
      %v609 = vpack.c.b16 %v591, %v589
      %v610 = vpack.c.b16 %v592, %v590
      %v611 = vpack.c.b16 %v595, %v593
      %v612 = vpack.c.b16 %v596, %v594
      %v645 = vunpack.c.l.b16 %v541
      %v646 = vunpack.c.l.b16 %v542
      %v647 = vunpack.c.l.b16 %v543
      %v648 = vunpack.c.l.b16 %v544
      %v649 = vunpack.c.l.b16 %v545
      %v650 = vunpack.c.l.b16 %v546
      %v651 = vunpack.c.l.b16 %v547
      %v652 = vunpack.c.l.b16 %v548
      %v653 = vunpack.c.l.b16 %v549
      %v654 = vunpack.c.l.b16 %v550
      %v655 = vunpack.c.l.b16 %v551
      %v656 = vunpack.c.l.b16 %v552
      %v657 = vunpack.c.l.b16 %v553
      %v658 = vunpack.c.l.b16 %v554
      %v659 = vunpack.c.l.b16 %v555
      %v660 = vunpack.c.l.b16 %v556
      %v661 = vunpack.c.l.b16 %v557
      %v662 = vunpack.c.l.b16 %v558
      %v663 = vunpack.c.l.b16 %v559
      %v664 = vunpack.c.l.b16 %v560
      %v665 = vunpack.c.l.b16 %v561
      %v666 = vunpack.c.l.b16 %v562
      %v667 = vunpack.c.l.b16 %v563
      %v668 = vunpack.c.l.b16 %v564
      %v669 = vpack.c.b16 %v646, %v645
      %v670 = vpack.c.b16 %v648, %v647
      %v671 = vpack.c.b16 %v650, %v649
      %v672 = vpack.c.b16 %v652, %v651
      %v673 = vpack.c.b16 %v654, %v653
      %v674 = vpack.c.b16 %v656, %v655
      %v675 = vpack.c.b16 %v658, %v657
      %v676 = vpack.c.b16 %v660, %v659
      %v677 = vpack.c.b16 %v662, %v661
      %v678 = vpack.c.b16 %v664, %v663
      %v679 = vpack.c.b16 %v666, %v665
      %v680 = vpack.c.b16 %v668, %v667
      %vm693 = vcmask 523264
      %v695 = vsel %vm693, %v598, 0
      %v698 = vsel %vm693, %v600, 0
      %v701 = vsel %vm693, %v602, 0
      %v704 = vsel %vm693, %v604, 0
      %v707 = vsel %vm693, %v606, 0
      %v710 = vsel %vm693, %v608, 0
      %v713 = vsel %vm693, %v610, 0
      %v716 = vsel %vm693, %v612, 0
      %718 = vmatpush.bf16.msra.mxu0 %v676
      %719 = vmatpush.bf16.msra.mxu0 %v675
      %720 = vmatpush.bf16.msra.mxu0 %v674
      %721 = vmatpush.bf16.msra.mxu0 %v673
      %722 = vmatpush.bf16.msra.mxu0 %v672
      %723 = vmatpush.bf16.msra.mxu0 %v671
      %724 = vmatpush.bf16.msra.mxu0 %v670
      %725 = vmatpush.bf16.msra.mxu0 %v669
      %726 = vmatmul.bf16.gmra.mxu0 %v597
      %v727 = vpop.f32.mrf.mxu0
      %v728 = vadd.f32 0.0, %v727
      %v729 = vpop.f32.mrf.mxu0
      %v730 = vadd.f32 0.0, %v729
      %731 = vmatmul.bf16.gmra.mxu0 %v599
      %v732 = vpop.f32.mrf.mxu0
      %v733 = vadd.f32 0.0, %v732
      %v734 = vpop.f32.mrf.mxu0
      %v735 = vadd.f32 0.0, %v734
      %736 = vmatmul.bf16.gmra.mxu0 %v601
      %v737 = vpop.f32.mrf.mxu0
      %v738 = vadd.f32 0.0, %v737
      %v739 = vpop.f32.mrf.mxu0
      %v740 = vadd.f32 0.0, %v739
      %741 = vmatmul.bf16.gmra.mxu0 %v603
      %v742 = vpop.f32.mrf.mxu0
      %v743 = vadd.f32 0.0, %v742
      %v744 = vpop.f32.mrf.mxu0
      %v745 = vadd.f32 0.0, %v744
      %746 = vmatmul.bf16.gmra.mxu0 %v605
      %v747 = vpop.f32.mrf.mxu0
      %v748 = vadd.f32 0.0, %v747
      %v749 = vpop.f32.mrf.mxu0
      %v750 = vadd.f32 0.0, %v749
      %751 = vmatmul.bf16.gmra.mxu0 %v607
      %v752 = vpop.f32.mrf.mxu0
      %v753 = vadd.f32 0.0, %v752
      %v754 = vpop.f32.mrf.mxu0
      %v755 = vadd.f32 0.0, %v754
      %756 = vmatmul.bf16.gmra.mxu0 %v609
      %v757 = vpop.f32.mrf.mxu0
      %v758 = vadd.f32 0.0, %v757
      %v759 = vpop.f32.mrf.mxu0
      %v760 = vadd.f32 0.0, %v759
      %761 = vmatmul.bf16.gmra.mxu0 %v611
      %v762 = vpop.f32.mrf.mxu0
      %v763 = vadd.f32 0.0, %v762
      %v764 = vpop.f32.mrf.mxu0
      %v765 = vadd.f32 0.0, %v764
      %766 = vdwg.mxu0
      %767 = vmatpush.bf16.msra.mxu0 0
      %768 = vmatpush.bf16.msra.mxu0 0
      %769 = vmatpush.bf16.msra.mxu0 0
      %770 = vmatpush.bf16.msra.mxu0 0
      %771 = vmatpush.bf16.msra.mxu0 %v680
      %772 = vmatpush.bf16.msra.mxu0 %v679
      %773 = vmatpush.bf16.msra.mxu0 %v678
      %774 = vmatpush.bf16.msra.mxu0 %v677
      %775 = vmatmul.bf16.gmra.mxu0 %v695
      %v776 = vpop.f32.mrf.mxu0
      %v777 = vadd.f32 %v728, %v776
      %v778 = vpop.f32.mrf.mxu0
      %v779 = vadd.f32 %v730, %v778
      %780 = vmatmul.bf16.gmra.mxu0 %v698
      %v781 = vpop.f32.mrf.mxu0
      %v782 = vadd.f32 %v733, %v781
      %v783 = vpop.f32.mrf.mxu0
      %v784 = vadd.f32 %v735, %v783
      %785 = vmatmul.bf16.gmra.mxu0 %v701
      %v786 = vpop.f32.mrf.mxu0
      %v787 = vadd.f32 %v738, %v786
      %v788 = vpop.f32.mrf.mxu0
      %v789 = vadd.f32 %v740, %v788
      %790 = vmatmul.bf16.gmra.mxu0 %v704
      %v791 = vpop.f32.mrf.mxu0
      %v792 = vadd.f32 %v743, %v791
      %v793 = vpop.f32.mrf.mxu0
      %v794 = vadd.f32 %v745, %v793
      %795 = vmatmul.bf16.gmra.mxu0 %v707
      %v796 = vpop.f32.mrf.mxu0
      %v797 = vadd.f32 %v748, %v796
      %v798 = vpop.f32.mrf.mxu0
      %v799 = vadd.f32 %v750, %v798
      %800 = vmatmul.bf16.gmra.mxu0 %v710
      %v801 = vpop.f32.mrf.mxu0
      %v802 = vadd.f32 %v753, %v801
      %v803 = vpop.f32.mrf.mxu0
      %v804 = vadd.f32 %v755, %v803
      %805 = vmatmul.bf16.gmra.mxu0 %v713
      %v806 = vpop.f32.mrf.mxu0
      %v807 = vadd.f32 %v758, %v806
      %v808 = vpop.f32.mrf.mxu0
      %v809 = vadd.f32 %v760, %v808
      %810 = vmatmul.bf16.gmra.mxu0 %v716
      %v811 = vpop.f32.mrf.mxu0
      %v812 = vadd.f32 %v763, %v811
      %v813 = vpop.f32.mrf.mxu0
      %v814 = vadd.f32 %v765, %v813
      %815 = vdwg.mxu0
      %v832 = vunpack.c.l.b16 %v297
      %v833 = vunpack.c.h.b16 %v297
      %v834 = vunpack.c.l.b16 %v298
      %v835 = vunpack.c.h.b16 %v298
      %v836 = vunpack.c.l.b16 %v300
      %v837 = vunpack.c.h.b16 %v300
      %v838 = vunpack.c.l.b16 %v301
      %v839 = vunpack.c.h.b16 %v301
      %v840 = vunpack.c.l.b16 %v303
      %v841 = vunpack.c.h.b16 %v303
      %v842 = vunpack.c.l.b16 %v304
      %v843 = vunpack.c.h.b16 %v304
      %v844 = vunpack.c.l.b16 %v306
      %v845 = vunpack.c.h.b16 %v306
      %v846 = vunpack.c.l.b16 %v307
      %v847 = vunpack.c.h.b16 %v307
      %v848 = vunpack.c.l.b16 %v309
      %v849 = vunpack.c.h.b16 %v309
      %v850 = vunpack.c.l.b16 %v310
      %v851 = vunpack.c.h.b16 %v310
      %v852 = vunpack.c.l.b16 %v312
      %v853 = vunpack.c.h.b16 %v312
      %v854 = vunpack.c.l.b16 %v313
      %v855 = vunpack.c.h.b16 %v313
      %v856 = vunpack.c.l.b16 %v315
      %v857 = vunpack.c.h.b16 %v315
      %v858 = vunpack.c.l.b16 %v316
      %v859 = vunpack.c.h.b16 %v316
      %v860 = vunpack.c.l.b16 %v318
      %v861 = vunpack.c.h.b16 %v318
      %v862 = vunpack.c.l.b16 %v319
      %v863 = vunpack.c.h.b16 %v319
      %v864 = vpack.c.b16 %v834, %v832
      %v865 = vpack.c.b16 %v835, %v833
      %v866 = vpack.c.b16 %v838, %v836
      %v867 = vpack.c.b16 %v839, %v837
      %v868 = vpack.c.b16 %v842, %v840
      %v869 = vpack.c.b16 %v843, %v841
      %v870 = vpack.c.b16 %v846, %v844
      %v871 = vpack.c.b16 %v847, %v845
      %v872 = vpack.c.b16 %v850, %v848
      %v873 = vpack.c.b16 %v851, %v849
      %v874 = vpack.c.b16 %v854, %v852
      %v875 = vpack.c.b16 %v855, %v853
      %v876 = vpack.c.b16 %v858, %v856
      %v877 = vpack.c.b16 %v859, %v857
      %v878 = vpack.c.b16 %v862, %v860
      %v879 = vpack.c.b16 %v863, %v861
      %v912 = vunpack.c.l.b16 %v321
      %v913 = vunpack.c.l.b16 %v322
      %v914 = vunpack.c.l.b16 %v323
      %v915 = vunpack.c.l.b16 %v324
      %v916 = vunpack.c.l.b16 %v325
      %v917 = vunpack.c.l.b16 %v326
      %v918 = vunpack.c.l.b16 %v327
      %v919 = vunpack.c.l.b16 %v328
      %v920 = vunpack.c.l.b16 %v329
      %v921 = vunpack.c.l.b16 %v330
      %v922 = vunpack.c.l.b16 %v331
      %v923 = vunpack.c.l.b16 %v332
      %v924 = vunpack.c.l.b16 %v333
      %v925 = vunpack.c.l.b16 %v334
      %v926 = vunpack.c.l.b16 %v335
      %v927 = vunpack.c.l.b16 %v336
      %v928 = vunpack.c.l.b16 %v337
      %v929 = vunpack.c.l.b16 %v338
      %v930 = vunpack.c.l.b16 %v339
      %v931 = vunpack.c.l.b16 %v340
      %v932 = vunpack.c.l.b16 %v341
      %v933 = vunpack.c.l.b16 %v342
      %v934 = vunpack.c.l.b16 %v343
      %v935 = vunpack.c.l.b16 %v344
      %v936 = vpack.c.b16 %v913, %v912
      %v937 = vpack.c.b16 %v915, %v914
      %v938 = vpack.c.b16 %v917, %v916
      %v939 = vpack.c.b16 %v919, %v918
      %v940 = vpack.c.b16 %v921, %v920
      %v941 = vpack.c.b16 %v923, %v922
      %v942 = vpack.c.b16 %v925, %v924
      %v943 = vpack.c.b16 %v927, %v926
      %v944 = vpack.c.b16 %v929, %v928
      %v945 = vpack.c.b16 %v931, %v930
      %v946 = vpack.c.b16 %v933, %v932
      %v947 = vpack.c.b16 %v935, %v934
      %v961 = vsel %vm693, %v865, 0
      %v964 = vsel %vm693, %v867, 0
      %v967 = vsel %vm693, %v869, 0
      %v970 = vsel %vm693, %v871, 0
      %v973 = vsel %vm693, %v873, 0
      %v976 = vsel %vm693, %v875, 0
      %v979 = vsel %vm693, %v877, 0
      %v982 = vsel %vm693, %v879, 0
      %984 = vmatpush.bf16.msra.mxu0 %v943
      %985 = vmatpush.bf16.msra.mxu0 %v942
      %986 = vmatpush.bf16.msra.mxu0 %v941
      %987 = vmatpush.bf16.msra.mxu0 %v940
      %988 = vmatpush.bf16.msra.mxu0 %v939
      %989 = vmatpush.bf16.msra.mxu0 %v938
      %990 = vmatpush.bf16.msra.mxu0 %v937
      %991 = vmatpush.bf16.msra.mxu0 %v936
      %992 = vmatmul.bf16.gmra.mxu0 %v864
      %v993 = vpop.f32.mrf.mxu0
      %v994 = vadd.f32 %v777, %v993
      %v995 = vpop.f32.mrf.mxu0
      %v996 = vadd.f32 %v779, %v995
      %997 = vmatmul.bf16.gmra.mxu0 %v866
      %v998 = vpop.f32.mrf.mxu0
      %v999 = vadd.f32 %v782, %v998
      %v1000 = vpop.f32.mrf.mxu0
      %v1001 = vadd.f32 %v784, %v1000
      %1002 = vmatmul.bf16.gmra.mxu0 %v868
      %v1003 = vpop.f32.mrf.mxu0
      %v1004 = vadd.f32 %v787, %v1003
      %v1005 = vpop.f32.mrf.mxu0
      %v1006 = vadd.f32 %v789, %v1005
      %1007 = vmatmul.bf16.gmra.mxu0 %v870
      %v1008 = vpop.f32.mrf.mxu0
      %v1009 = vadd.f32 %v792, %v1008
      %v1010 = vpop.f32.mrf.mxu0
      %v1011 = vadd.f32 %v794, %v1010
      %1012 = vmatmul.bf16.gmra.mxu0 %v872
      %v1013 = vpop.f32.mrf.mxu0
      %v1014 = vadd.f32 %v797, %v1013
      %v1015 = vpop.f32.mrf.mxu0
      %v1016 = vadd.f32 %v799, %v1015
      %1017 = vmatmul.bf16.gmra.mxu0 %v874
      %v1018 = vpop.f32.mrf.mxu0
      %v1019 = vadd.f32 %v802, %v1018
      %v1020 = vpop.f32.mrf.mxu0
      %v1021 = vadd.f32 %v804, %v1020
      %1022 = vmatmul.bf16.gmra.mxu0 %v876
      %v1023 = vpop.f32.mrf.mxu0
      %v1024 = vadd.f32 %v807, %v1023
      %v1025 = vpop.f32.mrf.mxu0
      %v1026 = vadd.f32 %v809, %v1025
      %1027 = vmatmul.bf16.gmra.mxu0 %v878
      %v1028 = vpop.f32.mrf.mxu0
      %v1029 = vadd.f32 %v812, %v1028
      %v1030 = vpop.f32.mrf.mxu0
      %v1031 = vadd.f32 %v814, %v1030
      %1032 = vdwg.mxu0
      %1033 = vmatpush.bf16.msra.mxu0 0
      %1034 = vmatpush.bf16.msra.mxu0 0
      %1035 = vmatpush.bf16.msra.mxu0 0
      %1036 = vmatpush.bf16.msra.mxu0 0
      %1037 = vmatpush.bf16.msra.mxu0 %v947
      %1038 = vmatpush.bf16.msra.mxu0 %v946
      %1039 = vmatpush.bf16.msra.mxu0 %v945
      %1040 = vmatpush.bf16.msra.mxu0 %v944
      %1041 = vmatmul.bf16.gmra.mxu0 %v961
      %v1042 = vpop.f32.mrf.mxu0
      %v1043 = vadd.f32 %v994, %v1042
      %v1044 = vpop.f32.mrf.mxu0
      %v1045 = vadd.f32 %v996, %v1044
      %1046 = vmatmul.bf16.gmra.mxu0 %v964
      %v1047 = vpop.f32.mrf.mxu0
      %v1048 = vadd.f32 %v999, %v1047
      %v1049 = vpop.f32.mrf.mxu0
      %v1050 = vadd.f32 %v1001, %v1049
      %1051 = vmatmul.bf16.gmra.mxu0 %v967
      %v1052 = vpop.f32.mrf.mxu0
      %v1053 = vadd.f32 %v1004, %v1052
      %v1054 = vpop.f32.mrf.mxu0
      %v1055 = vadd.f32 %v1006, %v1054
      %1056 = vmatmul.bf16.gmra.mxu0 %v970
      %v1057 = vpop.f32.mrf.mxu0
      %v1058 = vadd.f32 %v1009, %v1057
      %v1059 = vpop.f32.mrf.mxu0
      %v1060 = vadd.f32 %v1011, %v1059
      %1061 = vmatmul.bf16.gmra.mxu0 %v973
      %v1062 = vpop.f32.mrf.mxu0
      %v1063 = vadd.f32 %v1014, %v1062
      %v1064 = vpop.f32.mrf.mxu0
      %v1065 = vadd.f32 %v1016, %v1064
      %1066 = vmatmul.bf16.gmra.mxu0 %v976
      %v1067 = vpop.f32.mrf.mxu0
      %v1068 = vadd.f32 %v1019, %v1067
      %v1069 = vpop.f32.mrf.mxu0
      %v1070 = vadd.f32 %v1021, %v1069
      %1071 = vmatmul.bf16.gmra.mxu0 %v979
      %v1072 = vpop.f32.mrf.mxu0
      %v1073 = vadd.f32 %v1024, %v1072
      %v1074 = vpop.f32.mrf.mxu0
      %v1075 = vadd.f32 %v1026, %v1074
      %1076 = vmatmul.bf16.gmra.mxu0 %v982
      %v1077 = vpop.f32.mrf.mxu0
      %v1078 = vadd.f32 %v1029, %v1077
      %v1079 = vpop.f32.mrf.mxu0
      %v1080 = vadd.f32 %v1031, %v1079
      %1081 = vdwg.mxu0
      %vm1090 = vcmask 1042432
      %vm1091 = vcmask 1046532
      %vm1092 = vmor %vm1090, %vm1091
      %v1093 = vrot.slane %v297, 5
      %v1094 = vrot.slane %v1093, 4
      %v1095 = vrot.slane %v298, 5
      %v1096 = vsel %vm1092, %v1094, %v1095
      %v1097 = vrot.slane %v1095, 4
      %v1098 = vrot.slane %v299, 5
      %v1099 = vsel %vm1092, %v1097, %v1098
      %v1100 = vrot.slane %v300, 5
      %v1101 = vrot.slane %v1100, 4
      %v1102 = vrot.slane %v301, 5
      %v1103 = vsel %vm1092, %v1101, %v1102
      %v1104 = vrot.slane %v1102, 4
      %v1105 = vrot.slane %v302, 5
      %v1106 = vsel %vm1092, %v1104, %v1105
      %v1107 = vrot.slane %v303, 5
      %v1108 = vrot.slane %v1107, 4
      %v1109 = vrot.slane %v304, 5
      %v1110 = vsel %vm1092, %v1108, %v1109
      %v1111 = vrot.slane %v1109, 4
      %v1112 = vrot.slane %v305, 5
      %v1113 = vsel %vm1092, %v1111, %v1112
      %v1114 = vrot.slane %v306, 5
      %v1115 = vrot.slane %v1114, 4
      %v1116 = vrot.slane %v307, 5
      %v1117 = vsel %vm1092, %v1115, %v1116
      %v1118 = vrot.slane %v1116, 4
      %v1119 = vrot.slane %v308, 5
      %v1120 = vsel %vm1092, %v1118, %v1119
      %v1121 = vrot.slane %v309, 5
      %v1122 = vrot.slane %v1121, 4
      %v1123 = vrot.slane %v310, 5
      %v1124 = vsel %vm1092, %v1122, %v1123
      %v1125 = vrot.slane %v1123, 4
      %v1126 = vrot.slane %v311, 5
      %v1127 = vsel %vm1092, %v1125, %v1126
      %v1128 = vrot.slane %v312, 5
      %v1129 = vrot.slane %v1128, 4
      %v1130 = vrot.slane %v313, 5
      %v1131 = vsel %vm1092, %v1129, %v1130
      %v1132 = vrot.slane %v1130, 4
      %v1133 = vrot.slane %v314, 5
      %v1134 = vsel %vm1092, %v1132, %v1133
      %v1135 = vrot.slane %v315, 5
      %v1136 = vrot.slane %v1135, 4
      %v1137 = vrot.slane %v316, 5
      %v1138 = vsel %vm1092, %v1136, %v1137
      %v1139 = vrot.slane %v1137, 4
      %v1140 = vrot.slane %v317, 5
      %v1141 = vsel %vm1092, %v1139, %v1140
      %v1142 = vrot.slane %v318, 5
      %v1143 = vrot.slane %v1142, 4
      %v1144 = vrot.slane %v319, 5
      %v1145 = vsel %vm1092, %v1143, %v1144
      %v1146 = vrot.slane %v1144, 4
      %v1147 = vrot.slane %v320, 5
      %v1148 = vsel %vm1092, %v1146, %v1147
      %s1149 = scalar_lea.vmem %s1, 192
      %v1150 = vld [vmem:[%s1149] sm:$0xf]
      %v1151 = vld [vmem:[%s1149 + $0x4] sm:$0xf]
      %v1152 = vld [vmem:[%s1149 + $0x8] sm:$0xf]
      %v1153 = vld [vmem:[%s1149 + $0xc] sm:$0xf]
      %v1154 = vld [vmem:[%s1149 + $0x10] sm:$0xf]
      %v1155 = vld [vmem:[%s1149 + $0x14] sm:$0xf]
      %v1156 = vld [vmem:[%s1149 + $0x18] sm:$0xf]
      %v1157 = vld [vmem:[%s1149 + $0x1c] sm:$0xf]
      %v1158 = vld [vmem:[%s1149 + $0x20] sm:$0xf]
      %v1159 = vld [vmem:[%s1149 + $0x24] sm:$0xf]
      %v1160 = vld [vmem:[%s1149 + $0x28] sm:$0xf]
      %v1161 = vld [vmem:[%s1149 + $0x2c] sm:$0xf]
      %v1162 = vld [vmem:[%s1149 + $0x30] sm:$0xf]
      %v1163 = vld [vmem:[%s1149 + $0x34] sm:$0xf]
      %v1164 = vld [vmem:[%s1149 + $0x38] sm:$0xf]
      %v1165 = vld [vmem:[%s1149 + $0x3c] sm:$0xf]
      %v1166 = vld [vmem:[%s1149 + $0x40] sm:$0xf]
      %v1167 = vld [vmem:[%s1149 + $0x44] sm:$0xf]
      %v1168 = vld [vmem:[%s1149 + $0x48] sm:$0xf]
      %v1169 = vld [vmem:[%s1149 + $0x4c] sm:$0xf]
      %v1170 = vld [vmem:[%s1149 + $0x50] sm:$0xf]
      %v1171 = vld [vmem:[%s1149 + $0x54] sm:$0xf]
      %v1172 = vld [vmem:[%s1149 + $0x58] sm:$0xf]
      %v1173 = vld [vmem:[%s1149 + $0x5c] sm:$0xf]
      %v1174 = vunpack.c.l.b16 %v1096
      %v1175 = vunpack.c.h.b16 %v1096
      %v1176 = vunpack.c.l.b16 %v1099
      %v1177 = vunpack.c.h.b16 %v1099
      %v1178 = vunpack.c.l.b16 %v1103
      %v1179 = vunpack.c.h.b16 %v1103
      %v1180 = vunpack.c.l.b16 %v1106
      %v1181 = vunpack.c.h.b16 %v1106
      %v1182 = vunpack.c.l.b16 %v1110
      %v1183 = vunpack.c.h.b16 %v1110
      %v1184 = vunpack.c.l.b16 %v1113
      %v1185 = vunpack.c.h.b16 %v1113
      %v1186 = vunpack.c.l.b16 %v1117
      %v1187 = vunpack.c.h.b16 %v1117
      %v1188 = vunpack.c.l.b16 %v1120
      %v1189 = vunpack.c.h.b16 %v1120
      %v1190 = vunpack.c.l.b16 %v1124
      %v1191 = vunpack.c.h.b16 %v1124
      %v1192 = vunpack.c.l.b16 %v1127
      %v1193 = vunpack.c.h.b16 %v1127
      %v1194 = vunpack.c.l.b16 %v1131
      %v1195 = vunpack.c.h.b16 %v1131
      %v1196 = vunpack.c.l.b16 %v1134
      %v1197 = vunpack.c.h.b16 %v1134
      %v1198 = vunpack.c.l.b16 %v1138
      %v1199 = vunpack.c.h.b16 %v1138
      %v1200 = vunpack.c.l.b16 %v1141
      %v1201 = vunpack.c.h.b16 %v1141
      %v1202 = vunpack.c.l.b16 %v1145
      %v1203 = vunpack.c.h.b16 %v1145
      %v1204 = vunpack.c.l.b16 %v1148
      %v1205 = vunpack.c.h.b16 %v1148
      %v1206 = vpack.c.b16 %v1176, %v1174
      %v1207 = vpack.c.b16 %v1177, %v1175
      %v1208 = vpack.c.b16 %v1180, %v1178
      %v1209 = vpack.c.b16 %v1181, %v1179
      %v1210 = vpack.c.b16 %v1184, %v1182
      %v1211 = vpack.c.b16 %v1185, %v1183
      %v1212 = vpack.c.b16 %v1188, %v1186
      %v1213 = vpack.c.b16 %v1189, %v1187
      %v1214 = vpack.c.b16 %v1192, %v1190
      %v1215 = vpack.c.b16 %v1193, %v1191
      %v1216 = vpack.c.b16 %v1196, %v1194
      %v1217 = vpack.c.b16 %v1197, %v1195
      %v1218 = vpack.c.b16 %v1200, %v1198
      %v1219 = vpack.c.b16 %v1201, %v1199
      %v1220 = vpack.c.b16 %v1204, %v1202
      %v1221 = vpack.c.b16 %v1205, %v1203
      %v1254 = vunpack.c.l.b16 %v1150
      %v1255 = vunpack.c.l.b16 %v1151
      %v1256 = vunpack.c.l.b16 %v1152
      %v1257 = vunpack.c.l.b16 %v1153
      %v1258 = vunpack.c.l.b16 %v1154
      %v1259 = vunpack.c.l.b16 %v1155
      %v1260 = vunpack.c.l.b16 %v1156
      %v1261 = vunpack.c.l.b16 %v1157
      %v1262 = vunpack.c.l.b16 %v1158
      %v1263 = vunpack.c.l.b16 %v1159
      %v1264 = vunpack.c.l.b16 %v1160
      %v1265 = vunpack.c.l.b16 %v1161
      %v1266 = vunpack.c.l.b16 %v1162
      %v1267 = vunpack.c.l.b16 %v1163
      %v1268 = vunpack.c.l.b16 %v1164
      %v1269 = vunpack.c.l.b16 %v1165
      %v1270 = vunpack.c.l.b16 %v1166
      %v1271 = vunpack.c.l.b16 %v1167
      %v1272 = vunpack.c.l.b16 %v1168
      %v1273 = vunpack.c.l.b16 %v1169
      %v1274 = vunpack.c.l.b16 %v1170
      %v1275 = vunpack.c.l.b16 %v1171
      %v1276 = vunpack.c.l.b16 %v1172
      %v1277 = vunpack.c.l.b16 %v1173
      %v1278 = vpack.c.b16 %v1255, %v1254
      %v1279 = vpack.c.b16 %v1257, %v1256
      %v1280 = vpack.c.b16 %v1259, %v1258
      %v1281 = vpack.c.b16 %v1261, %v1260
      %v1282 = vpack.c.b16 %v1263, %v1262
      %v1283 = vpack.c.b16 %v1265, %v1264
      %v1284 = vpack.c.b16 %v1267, %v1266
      %v1285 = vpack.c.b16 %v1269, %v1268
      %v1286 = vpack.c.b16 %v1271, %v1270
      %v1287 = vpack.c.b16 %v1273, %v1272
      %v1288 = vpack.c.b16 %v1275, %v1274
      %v1289 = vpack.c.b16 %v1277, %v1276
      %v1303 = vsel %vm693, %v1207, 0
      %v1306 = vsel %vm693, %v1209, 0
      %v1309 = vsel %vm693, %v1211, 0
      %v1312 = vsel %vm693, %v1213, 0
      %v1315 = vsel %vm693, %v1215, 0
      %v1318 = vsel %vm693, %v1217, 0
      %v1321 = vsel %vm693, %v1219, 0
      %v1324 = vsel %vm693, %v1221, 0
      %1326 = vmatpush.bf16.msra.mxu0 %v1285
      %1327 = vmatpush.bf16.msra.mxu0 %v1284
      %1328 = vmatpush.bf16.msra.mxu0 %v1283
      %1329 = vmatpush.bf16.msra.mxu0 %v1282
      %1330 = vmatpush.bf16.msra.mxu0 %v1281
      %1331 = vmatpush.bf16.msra.mxu0 %v1280
      %1332 = vmatpush.bf16.msra.mxu0 %v1279
      %1333 = vmatpush.bf16.msra.mxu0 %v1278
      %1334 = vmatmul.bf16.gmra.mxu0 %v1206
      %v1335 = vpop.f32.mrf.mxu0
      %v1336 = vadd.f32 0.0, %v1335
      %v1337 = vpop.f32.mrf.mxu0
      %v1338 = vadd.f32 0.0, %v1337
      %1339 = vmatmul.bf16.gmra.mxu0 %v1208
      %v1340 = vpop.f32.mrf.mxu0
      %v1341 = vadd.f32 0.0, %v1340
      %v1342 = vpop.f32.mrf.mxu0
      %v1343 = vadd.f32 0.0, %v1342
      %1344 = vmatmul.bf16.gmra.mxu0 %v1210
      %v1345 = vpop.f32.mrf.mxu0
      %v1346 = vadd.f32 0.0, %v1345
      %v1347 = vpop.f32.mrf.mxu0
      %v1348 = vadd.f32 0.0, %v1347
      %1349 = vmatmul.bf16.gmra.mxu0 %v1212
      %v1350 = vpop.f32.mrf.mxu0
      %v1351 = vadd.f32 0.0, %v1350
      %v1352 = vpop.f32.mrf.mxu0
      %v1353 = vadd.f32 0.0, %v1352
      %1354 = vmatmul.bf16.gmra.mxu0 %v1214
      %v1355 = vpop.f32.mrf.mxu0
      %v1356 = vadd.f32 0.0, %v1355
      %v1357 = vpop.f32.mrf.mxu0
      %v1358 = vadd.f32 0.0, %v1357
      %1359 = vmatmul.bf16.gmra.mxu0 %v1216
      %v1360 = vpop.f32.mrf.mxu0
      %v1361 = vadd.f32 0.0, %v1360
      %v1362 = vpop.f32.mrf.mxu0
      %v1363 = vadd.f32 0.0, %v1362
      %1364 = vmatmul.bf16.gmra.mxu0 %v1218
      %v1365 = vpop.f32.mrf.mxu0
      %v1366 = vadd.f32 0.0, %v1365
      %v1367 = vpop.f32.mrf.mxu0
      %v1368 = vadd.f32 0.0, %v1367
      %1369 = vmatmul.bf16.gmra.mxu0 %v1220
      %v1370 = vpop.f32.mrf.mxu0
      %v1371 = vadd.f32 0.0, %v1370
      %v1372 = vpop.f32.mrf.mxu0
      %v1373 = vadd.f32 0.0, %v1372
      %1374 = vdwg.mxu0
      %1375 = vmatpush.bf16.msra.mxu0 0
      %1376 = vmatpush.bf16.msra.mxu0 0
      %1377 = vmatpush.bf16.msra.mxu0 0
      %1378 = vmatpush.bf16.msra.mxu0 0
      %1379 = vmatpush.bf16.msra.mxu0 %v1289
      %1380 = vmatpush.bf16.msra.mxu0 %v1288
      %1381 = vmatpush.bf16.msra.mxu0 %v1287
      %1382 = vmatpush.bf16.msra.mxu0 %v1286
      %1383 = vmatmul.bf16.gmra.mxu0 %v1303
      %v1384 = vpop.f32.mrf.mxu0
      %v1385 = vadd.f32 %v1336, %v1384
      %v1386 = vpop.f32.mrf.mxu0
      %v1387 = vadd.f32 %v1338, %v1386
      %1388 = vmatmul.bf16.gmra.mxu0 %v1306
      %v1389 = vpop.f32.mrf.mxu0
      %v1390 = vadd.f32 %v1341, %v1389
      %v1391 = vpop.f32.mrf.mxu0
      %v1392 = vadd.f32 %v1343, %v1391
      %1393 = vmatmul.bf16.gmra.mxu0 %v1309
      %v1394 = vpop.f32.mrf.mxu0
      %v1395 = vadd.f32 %v1346, %v1394
      %v1396 = vpop.f32.mrf.mxu0
      %v1397 = vadd.f32 %v1348, %v1396
      %1398 = vmatmul.bf16.gmra.mxu0 %v1312
      %v1399 = vpop.f32.mrf.mxu0
      %v1400 = vadd.f32 %v1351, %v1399
      %v1401 = vpop.f32.mrf.mxu0
      %v1402 = vadd.f32 %v1353, %v1401
      %1403 = vmatmul.bf16.gmra.mxu0 %v1315
      %v1404 = vpop.f32.mrf.mxu0
      %v1405 = vadd.f32 %v1356, %v1404
      %v1406 = vpop.f32.mrf.mxu0
      %v1407 = vadd.f32 %v1358, %v1406
      %1408 = vmatmul.bf16.gmra.mxu0 %v1318
      %v1409 = vpop.f32.mrf.mxu0
      %v1410 = vadd.f32 %v1361, %v1409
      %v1411 = vpop.f32.mrf.mxu0
      %v1412 = vadd.f32 %v1363, %v1411
      %1413 = vmatmul.bf16.gmra.mxu0 %v1321
      %v1414 = vpop.f32.mrf.mxu0
      %v1415 = vadd.f32 %v1366, %v1414
      %v1416 = vpop.f32.mrf.mxu0
      %v1417 = vadd.f32 %v1368, %v1416
      %1418 = vmatmul.bf16.gmra.mxu0 %v1324
      %v1419 = vpop.f32.mrf.mxu0
      %v1420 = vadd.f32 %v1371, %v1419
      %v1421 = vpop.f32.mrf.mxu0
      %v1422 = vadd.f32 %v1373, %v1421
      %1423 = vdwg.mxu0
      %v1424 = vadd.f32 %v1043, %v1385
      %v1425 = vadd.f32 %v1045, %v1387
      %v1426 = vadd.f32 %v1048, %v1390
      %v1427 = vadd.f32 %v1050, %v1392
      %v1428 = vadd.f32 %v1053, %v1395
      %v1429 = vadd.f32 %v1055, %v1397
      %v1430 = vadd.f32 %v1058, %v1400
      %v1431 = vadd.f32 %v1060, %v1402
      %v1432 = vadd.f32 %v1063, %v1405
      %v1433 = vadd.f32 %v1065, %v1407
      %v1434 = vadd.f32 %v1068, %v1410
      %v1435 = vadd.f32 %v1070, %v1412
      %v1436 = vadd.f32 %v1073, %v1415
      %v1437 = vadd.f32 %v1075, %v1417
      %v1438 = vadd.f32 %v1078, %v1420
      %v1439 = vadd.f32 %v1080, %v1422
      %v1440 = vld [vmem:[%s2] sm:$0x1]
      %v1442 = vperm.slane %v1440, 0
      %v1444 = vmul.f32 %v1424, %v1442
      %v1445 = vmul.f32 %v1425, %v1442
      %v1446 = vmul.f32 %v1426, %v1442
      %v1447 = vmul.f32 %v1427, %v1442
      %v1448 = vmul.f32 %v1428, %v1442
      %v1449 = vmul.f32 %v1429, %v1442
      %v1450 = vmul.f32 %v1430, %v1442
      %v1451 = vmul.f32 %v1431, %v1442
      %v1452 = vmul.f32 %v1432, %v1442
      %v1453 = vmul.f32 %v1433, %v1442
      %v1454 = vmul.f32 %v1434, %v1442
      %v1455 = vmul.f32 %v1435, %v1442
      %v1456 = vmul.f32 %v1436, %v1442
      %v1457 = vmul.f32 %v1437, %v1442
      %v1458 = vmul.f32 %v1438, %v1442
      %v1459 = vmul.f32 %v1439, %v1442
      %v1460 = vld [vmem:[%s3] sm:$0x1]
      %v1462 = vperm.slane %v1460, 0
      %v1464 = vadd.f32 %v1444, %v1462
      %v1465 = vadd.f32 %v1445, %v1462
      %v1466 = vadd.f32 %v1446, %v1462
      %v1467 = vadd.f32 %v1447, %v1462
      %v1468 = vadd.f32 %v1448, %v1462
      %v1469 = vadd.f32 %v1449, %v1462
      %v1470 = vadd.f32 %v1450, %v1462
      %v1471 = vadd.f32 %v1451, %v1462
      %v1472 = vadd.f32 %v1452, %v1462
      %v1473 = vadd.f32 %v1453, %v1462
      %v1474 = vadd.f32 %v1454, %v1462
      %v1475 = vadd.f32 %v1455, %v1462
      %v1476 = vadd.f32 %v1456, %v1462
      %v1477 = vadd.f32 %v1457, %v1462
      %v1478 = vadd.f32 %v1458, %v1462
      %v1479 = vadd.f32 %v1459, %v1462
      %v1480 = vxor.u32 %v1464, 2147483648
      %v1481 = vxor.u32 %v1465, 2147483648
      %v1482 = vxor.u32 %v1466, 2147483648
      %v1483 = vxor.u32 %v1467, 2147483648
      %v1484 = vxor.u32 %v1468, 2147483648
      %v1485 = vxor.u32 %v1469, 2147483648
      %v1486 = vxor.u32 %v1470, 2147483648
      %v1487 = vxor.u32 %v1471, 2147483648
      %v1488 = vxor.u32 %v1472, 2147483648
      %v1489 = vxor.u32 %v1473, 2147483648
      %v1490 = vxor.u32 %v1474, 2147483648
      %v1491 = vxor.u32 %v1475, 2147483648
      %v1492 = vxor.u32 %v1476, 2147483648
      %v1493 = vxor.u32 %v1477, 2147483648
      %v1494 = vxor.u32 %v1478, 2147483648
      %v1495 = vxor.u32 %v1479, 2147483648
      %v1496 = vmul.f32 %v1480, 1.442695
      %v1497 = vpow.pop %v1496
      %v1498 = vmul.f32 %v1481, 1.442695
      %v1499 = vpow.pop %v1498
      %v1500 = vmul.f32 %v1482, 1.442695
      %v1501 = vpow.pop %v1500
      %v1502 = vmul.f32 %v1483, 1.442695
      %v1503 = vpow.pop %v1502
      %v1504 = vmul.f32 %v1484, 1.442695
      %v1505 = vpow.pop %v1504
      %v1506 = vmul.f32 %v1485, 1.442695
      %v1507 = vpow.pop %v1506
      %v1508 = vmul.f32 %v1486, 1.442695
      %v1509 = vpow.pop %v1508
      %v1510 = vmul.f32 %v1487, 1.442695
      %v1511 = vpow.pop %v1510
      %v1512 = vmul.f32 %v1488, 1.442695
      %v1513 = vpow.pop %v1512
      %v1514 = vmul.f32 %v1489, 1.442695
      %v1515 = vpow.pop %v1514
      %v1516 = vmul.f32 %v1490, 1.442695
      %v1517 = vpow.pop %v1516
      %v1518 = vmul.f32 %v1491, 1.442695
      %v1519 = vpow.pop %v1518
      %v1520 = vmul.f32 %v1492, 1.442695
      %v1521 = vpow.pop %v1520
      %v1522 = vmul.f32 %v1493, 1.442695
      %v1523 = vpow.pop %v1522
      %v1524 = vmul.f32 %v1494, 1.442695
      %v1525 = vpow.pop %v1524
      %v1526 = vmul.f32 %v1495, 1.442695
      %v1527 = vpow.pop %v1526
      %v1528 = vadd.f32 %v1497, 1.0
      %v1529 = vadd.f32 %v1499, 1.0
      %v1530 = vadd.f32 %v1501, 1.0
      %v1531 = vadd.f32 %v1503, 1.0
      %v1532 = vadd.f32 %v1505, 1.0
      %v1533 = vadd.f32 %v1507, 1.0
      %v1534 = vadd.f32 %v1509, 1.0
      %v1535 = vadd.f32 %v1511, 1.0
      %v1536 = vadd.f32 %v1513, 1.0
      %v1537 = vadd.f32 %v1515, 1.0
      %v1538 = vadd.f32 %v1517, 1.0
      %v1539 = vadd.f32 %v1519, 1.0
      %v1540 = vadd.f32 %v1521, 1.0
      %v1541 = vadd.f32 %v1523, 1.0
      %v1542 = vadd.f32 %v1525, 1.0
      %v1543 = vadd.f32 %v1527, 1.0
      %v1544 = vrcp.pop %v1528
      %v1545 = vmul.f32 %v1528, %v1544
      %v1546 = vsub.f32 1.0, %v1545
      %v1547 = vmul.f32 %v1544, %v1546
      %v1548 = vadd.f32 %v1544, %v1547
      %vm1549 = vweird.f32 %v1528
      %vm1550 = vweird.f32 %v1544
      %vm1551 = vmor %vm1549, %vm1550
      %v1552 = vsel %vm1551, %v1544, %v1548
      %v1553 = vand.u32 2147483647, %v1528
      %vm1554 = vcmp.eq.f32.partialorder %v1553, 8.507059e+37
      %v1555 = vand.u32 %v1528, 2147483648
      %v1556 = vor.u32 1.1754944e-38, %v1555
      %v1557 = vsel %vm1554, %v1556, %v1552
      %v1558 = vmul.f32 1.0, %v1557
      %v1559 = vrcp.pop %v1529
      %v1560 = vmul.f32 %v1529, %v1559
      %v1561 = vsub.f32 1.0, %v1560
      %v1562 = vmul.f32 %v1559, %v1561
      %v1563 = vadd.f32 %v1559, %v1562
      %vm1564 = vweird.f32 %v1529
      %vm1565 = vweird.f32 %v1559
      %vm1566 = vmor %vm1564, %vm1565
      %v1567 = vsel %vm1566, %v1559, %v1563
      %v1568 = vand.u32 2147483647, %v1529
      %vm1569 = vcmp.eq.f32.partialorder %v1568, 8.507059e+37
      %v1570 = vand.u32 %v1529, 2147483648
      %v1571 = vor.u32 1.1754944e-38, %v1570
      %v1572 = vsel %vm1569, %v1571, %v1567
      %v1573 = vmul.f32 1.0, %v1572
      %v1574 = vrcp.pop %v1530
      %v1575 = vmul.f32 %v1530, %v1574
      %v1576 = vsub.f32 1.0, %v1575
      %v1577 = vmul.f32 %v1574, %v1576
      %v1578 = vadd.f32 %v1574, %v1577
      %vm1579 = vweird.f32 %v1530
      %vm1580 = vweird.f32 %v1574
      %vm1581 = vmor %vm1579, %vm1580
      %v1582 = vsel %vm1581, %v1574, %v1578
      %v1583 = vand.u32 2147483647, %v1530
      %vm1584 = vcmp.eq.f32.partialorder %v1583, 8.507059e+37
      %v1585 = vand.u32 %v1530, 2147483648
      %v1586 = vor.u32 1.1754944e-38, %v1585
      %v1587 = vsel %vm1584, %v1586, %v1582
      %v1588 = vmul.f32 1.0, %v1587
      %v1589 = vrcp.pop %v1531
      %v1590 = vmul.f32 %v1531, %v1589
      %v1591 = vsub.f32 1.0, %v1590
      %v1592 = vmul.f32 %v1589, %v1591
      %v1593 = vadd.f32 %v1589, %v1592
      %vm1594 = vweird.f32 %v1531
      %vm1595 = vweird.f32 %v1589
      %vm1596 = vmor %vm1594, %vm1595
      %v1597 = vsel %vm1596, %v1589, %v1593
      %v1598 = vand.u32 2147483647, %v1531
      %vm1599 = vcmp.eq.f32.partialorder %v1598, 8.507059e+37
      %v1600 = vand.u32 %v1531, 2147483648
      %v1601 = vor.u32 1.1754944e-38, %v1600
      %v1602 = vsel %vm1599, %v1601, %v1597
      %v1603 = vmul.f32 1.0, %v1602
      %v1604 = vrcp.pop %v1532
      %v1605 = vmul.f32 %v1532, %v1604
      %v1606 = vsub.f32 1.0, %v1605
      %v1607 = vmul.f32 %v1604, %v1606
      %v1608 = vadd.f32 %v1604, %v1607
      %vm1609 = vweird.f32 %v1532
      %vm1610 = vweird.f32 %v1604
      %vm1611 = vmor %vm1609, %vm1610
      %v1612 = vsel %vm1611, %v1604, %v1608
      %v1613 = vand.u32 2147483647, %v1532
      %vm1614 = vcmp.eq.f32.partialorder %v1613, 8.507059e+37
      %v1615 = vand.u32 %v1532, 2147483648
      %v1616 = vor.u32 1.1754944e-38, %v1615
      %v1617 = vsel %vm1614, %v1616, %v1612
      %v1618 = vmul.f32 1.0, %v1617
      %v1619 = vrcp.pop %v1533
      %v1620 = vmul.f32 %v1533, %v1619
      %v1621 = vsub.f32 1.0, %v1620
      %v1622 = vmul.f32 %v1619, %v1621
      %v1623 = vadd.f32 %v1619, %v1622
      %vm1624 = vweird.f32 %v1533
      %vm1625 = vweird.f32 %v1619
      %vm1626 = vmor %vm1624, %vm1625
      %v1627 = vsel %vm1626, %v1619, %v1623
      %v1628 = vand.u32 2147483647, %v1533
      %vm1629 = vcmp.eq.f32.partialorder %v1628, 8.507059e+37
      %v1630 = vand.u32 %v1533, 2147483648
      %v1631 = vor.u32 1.1754944e-38, %v1630
      %v1632 = vsel %vm1629, %v1631, %v1627
      %v1633 = vmul.f32 1.0, %v1632
      %v1634 = vrcp.pop %v1534
      %v1635 = vmul.f32 %v1534, %v1634
      %v1636 = vsub.f32 1.0, %v1635
      %v1637 = vmul.f32 %v1634, %v1636
      %v1638 = vadd.f32 %v1634, %v1637
      %vm1639 = vweird.f32 %v1534
      %vm1640 = vweird.f32 %v1634
      %vm1641 = vmor %vm1639, %vm1640
      %v1642 = vsel %vm1641, %v1634, %v1638
      %v1643 = vand.u32 2147483647, %v1534
      %vm1644 = vcmp.eq.f32.partialorder %v1643, 8.507059e+37
      %v1645 = vand.u32 %v1534, 2147483648
      %v1646 = vor.u32 1.1754944e-38, %v1645
      %v1647 = vsel %vm1644, %v1646, %v1642
      %v1648 = vmul.f32 1.0, %v1647
      %v1649 = vrcp.pop %v1535
      %v1650 = vmul.f32 %v1535, %v1649
      %v1651 = vsub.f32 1.0, %v1650
      %v1652 = vmul.f32 %v1649, %v1651
      %v1653 = vadd.f32 %v1649, %v1652
      %vm1654 = vweird.f32 %v1535
      %vm1655 = vweird.f32 %v1649
      %vm1656 = vmor %vm1654, %vm1655
      %v1657 = vsel %vm1656, %v1649, %v1653
      %v1658 = vand.u32 2147483647, %v1535
      %vm1659 = vcmp.eq.f32.partialorder %v1658, 8.507059e+37
      %v1660 = vand.u32 %v1535, 2147483648
      %v1661 = vor.u32 1.1754944e-38, %v1660
      %v1662 = vsel %vm1659, %v1661, %v1657
      %v1663 = vmul.f32 1.0, %v1662
      %v1664 = vrcp.pop %v1536
      %v1665 = vmul.f32 %v1536, %v1664
      %v1666 = vsub.f32 1.0, %v1665
      %v1667 = vmul.f32 %v1664, %v1666
      %v1668 = vadd.f32 %v1664, %v1667
      %vm1669 = vweird.f32 %v1536
      %vm1670 = vweird.f32 %v1664
      %vm1671 = vmor %vm1669, %vm1670
      %v1672 = vsel %vm1671, %v1664, %v1668
      %v1673 = vand.u32 2147483647, %v1536
      %vm1674 = vcmp.eq.f32.partialorder %v1673, 8.507059e+37
      %v1675 = vand.u32 %v1536, 2147483648
      %v1676 = vor.u32 1.1754944e-38, %v1675
      %v1677 = vsel %vm1674, %v1676, %v1672
      %v1678 = vmul.f32 1.0, %v1677
      %v1679 = vrcp.pop %v1537
      %v1680 = vmul.f32 %v1537, %v1679
      %v1681 = vsub.f32 1.0, %v1680
      %v1682 = vmul.f32 %v1679, %v1681
      %v1683 = vadd.f32 %v1679, %v1682
      %vm1684 = vweird.f32 %v1537
      %vm1685 = vweird.f32 %v1679
      %vm1686 = vmor %vm1684, %vm1685
      %v1687 = vsel %vm1686, %v1679, %v1683
      %v1688 = vand.u32 2147483647, %v1537
      %vm1689 = vcmp.eq.f32.partialorder %v1688, 8.507059e+37
      %v1690 = vand.u32 %v1537, 2147483648
      %v1691 = vor.u32 1.1754944e-38, %v1690
      %v1692 = vsel %vm1689, %v1691, %v1687
      %v1693 = vmul.f32 1.0, %v1692
      %v1694 = vrcp.pop %v1538
      %v1695 = vmul.f32 %v1538, %v1694
      %v1696 = vsub.f32 1.0, %v1695
      %v1697 = vmul.f32 %v1694, %v1696
      %v1698 = vadd.f32 %v1694, %v1697
      %vm1699 = vweird.f32 %v1538
      %vm1700 = vweird.f32 %v1694
      %vm1701 = vmor %vm1699, %vm1700
      %v1702 = vsel %vm1701, %v1694, %v1698
      %v1703 = vand.u32 2147483647, %v1538
      %vm1704 = vcmp.eq.f32.partialorder %v1703, 8.507059e+37
      %v1705 = vand.u32 %v1538, 2147483648
      %v1706 = vor.u32 1.1754944e-38, %v1705
      %v1707 = vsel %vm1704, %v1706, %v1702
      %v1708 = vmul.f32 1.0, %v1707
      %v1709 = vrcp.pop %v1539
      %v1710 = vmul.f32 %v1539, %v1709
      %v1711 = vsub.f32 1.0, %v1710
      %v1712 = vmul.f32 %v1709, %v1711
      %v1713 = vadd.f32 %v1709, %v1712
      %vm1714 = vweird.f32 %v1539
      %vm1715 = vweird.f32 %v1709
      %vm1716 = vmor %vm1714, %vm1715
      %v1717 = vsel %vm1716, %v1709, %v1713
      %v1718 = vand.u32 2147483647, %v1539
      %vm1719 = vcmp.eq.f32.partialorder %v1718, 8.507059e+37
      %v1720 = vand.u32 %v1539, 2147483648
      %v1721 = vor.u32 1.1754944e-38, %v1720
      %v1722 = vsel %vm1719, %v1721, %v1717
      %v1723 = vmul.f32 1.0, %v1722
      %v1724 = vrcp.pop %v1540
      %v1725 = vmul.f32 %v1540, %v1724
      %v1726 = vsub.f32 1.0, %v1725
      %v1727 = vmul.f32 %v1724, %v1726
      %v1728 = vadd.f32 %v1724, %v1727
      %vm1729 = vweird.f32 %v1540
      %vm1730 = vweird.f32 %v1724
      %vm1731 = vmor %vm1729, %vm1730
      %v1732 = vsel %vm1731, %v1724, %v1728
      %v1733 = vand.u32 2147483647, %v1540
      %vm1734 = vcmp.eq.f32.partialorder %v1733, 8.507059e+37
      %v1735 = vand.u32 %v1540, 2147483648
      %v1736 = vor.u32 1.1754944e-38, %v1735
      %v1737 = vsel %vm1734, %v1736, %v1732
      %v1738 = vmul.f32 1.0, %v1737
      %v1739 = vrcp.pop %v1541
      %v1740 = vmul.f32 %v1541, %v1739
      %v1741 = vsub.f32 1.0, %v1740
      %v1742 = vmul.f32 %v1739, %v1741
      %v1743 = vadd.f32 %v1739, %v1742
      %vm1744 = vweird.f32 %v1541
      %vm1745 = vweird.f32 %v1739
      %vm1746 = vmor %vm1744, %vm1745
      %v1747 = vsel %vm1746, %v1739, %v1743
      %v1748 = vand.u32 2147483647, %v1541
      %vm1749 = vcmp.eq.f32.partialorder %v1748, 8.507059e+37
      %v1750 = vand.u32 %v1541, 2147483648
      %v1751 = vor.u32 1.1754944e-38, %v1750
      %v1752 = vsel %vm1749, %v1751, %v1747
      %v1753 = vmul.f32 1.0, %v1752
      %v1754 = vrcp.pop %v1542
      %v1755 = vmul.f32 %v1542, %v1754
      %v1756 = vsub.f32 1.0, %v1755
      %v1757 = vmul.f32 %v1754, %v1756
      %v1758 = vadd.f32 %v1754, %v1757
      %vm1759 = vweird.f32 %v1542
      %vm1760 = vweird.f32 %v1754
      %vm1761 = vmor %vm1759, %vm1760
      %v1762 = vsel %vm1761, %v1754, %v1758
      %v1763 = vand.u32 2147483647, %v1542
      %vm1764 = vcmp.eq.f32.partialorder %v1763, 8.507059e+37
      %v1765 = vand.u32 %v1542, 2147483648
      %v1766 = vor.u32 1.1754944e-38, %v1765
      %v1767 = vsel %vm1764, %v1766, %v1762
      %v1768 = vmul.f32 1.0, %v1767
      %v1769 = vrcp.pop %v1543
      %v1770 = vmul.f32 %v1543, %v1769
      %v1771 = vsub.f32 1.0, %v1770
      %v1772 = vmul.f32 %v1769, %v1771
      %v1773 = vadd.f32 %v1769, %v1772
      %vm1774 = vweird.f32 %v1543
      %vm1775 = vweird.f32 %v1769
      %vm1776 = vmor %vm1774, %vm1775
      %v1777 = vsel %vm1776, %v1769, %v1773
      %v1778 = vand.u32 2147483647, %v1543
      %vm1779 = vcmp.eq.f32.partialorder %v1778, 8.507059e+37
      %v1780 = vand.u32 %v1543, 2147483648
      %v1781 = vor.u32 1.1754944e-38, %v1780
      %v1782 = vsel %vm1779, %v1781, %v1777
      %v1783 = vmul.f32 1.0, %v1782
      %v1784 = vmul.f32 %v1464, %v1558
      %v1785 = vmul.f32 %v1465, %v1573
      %v1786 = vmul.f32 %v1466, %v1588
      %v1787 = vmul.f32 %v1467, %v1603
      %v1788 = vmul.f32 %v1468, %v1618
      %v1789 = vmul.f32 %v1469, %v1633
      %v1790 = vmul.f32 %v1470, %v1648
      %v1791 = vmul.f32 %v1471, %v1663
      %v1792 = vmul.f32 %v1472, %v1678
      %v1793 = vmul.f32 %v1473, %v1693
      %v1794 = vmul.f32 %v1474, %v1708
      %v1795 = vmul.f32 %v1475, %v1723
      %v1796 = vmul.f32 %v1476, %v1738
      %v1797 = vmul.f32 %v1477, %v1753
      %v1798 = vmul.f32 %v1478, %v1768
      %v1799 = vmul.f32 %v1479, %v1783
      %v1800 = vpack.c.bf16 %v1785, %v1784
      %v1801 = vpack.c.bf16 %v1787, %v1786
      %v1802 = vpack.c.bf16 %v1789, %v1788
      %v1803 = vpack.c.bf16 %v1791, %v1790
      %v1804 = vpack.c.bf16 %v1793, %v1792
      %v1805 = vpack.c.bf16 %v1795, %v1794
      %v1806 = vpack.c.bf16 %v1797, %v1796
      %v1807 = vpack.c.bf16 %v1799, %v1798
      %v1808 = vld [vmem:[%s4] sm:$0xf]
      %v1809 = vld [vmem:[%s4 + $0x4] sm:$0xf]
      %v1810 = vld [vmem:[%s4 + $0x8] sm:$0xf]
      %v1811 = vld [vmem:[%s4 + $0xc] sm:$0xf]
      %v1812 = vld [vmem:[%s4 + $0x10] sm:$0xf]
      %v1813 = vld [vmem:[%s4 + $0x14] sm:$0xf]
      %v1814 = vld [vmem:[%s4 + $0x18] sm:$0xf]
      %v1815 = vld [vmem:[%s4 + $0x1c] sm:$0xf]
      %v1816 = vld [vmem:[%s5] sm:$0x1]
      %v1818 = vperm.slane %v1816, 0
      %v1828 = vunpack.c.l.b16 %v1808
      %v1829 = vunpack.c.l.b16 %v1809
      %v1830 = vunpack.c.l.b16 %v1810
      %v1831 = vunpack.c.l.b16 %v1811
      %v1832 = vunpack.c.l.b16 %v1812
      %v1833 = vunpack.c.l.b16 %v1813
      %v1834 = vunpack.c.l.b16 %v1814
      %v1835 = vunpack.c.l.b16 %v1815
      %v1836 = vpack.c.b16 %v1829, %v1828
      %v1837 = vpack.c.b16 %v1831, %v1830
      %v1838 = vpack.c.b16 %v1833, %v1832
      %v1839 = vpack.c.b16 %v1835, %v1834
      %v1845 = vsel %vm693, %v1800, 0
      %v1848 = vsel %vm693, %v1801, 0
      %v1851 = vsel %vm693, %v1802, 0
      %v1854 = vsel %vm693, %v1803, 0
      %v1857 = vsel %vm693, %v1804, 0
      %v1860 = vsel %vm693, %v1805, 0
      %v1863 = vsel %vm693, %v1806, 0
      %v1866 = vsel %vm693, %v1807, 0
      %1868 = vmatpush.bf16.msra.mxu0 0
      %1869 = vmatpush.bf16.msra.mxu0 0
      %1870 = vmatpush.bf16.msra.mxu0 0
      %1871 = vmatpush.bf16.msra.mxu0 0
      %1872 = vmatpush.bf16.msra.mxu0 %v1839
      %1873 = vmatpush.bf16.msra.mxu0 %v1838
      %1874 = vmatpush.bf16.msra.mxu0 %v1837
      %1875 = vmatpush.bf16.msra.mxu0 %v1836
      %1876 = vmatmul.bf16.gmra.mxu0 %v1845
      %v1877 = vpop.f32.mrf.mxu0
      %v1878 = vadd.f32 %v1818, %v1877
      %v1879 = vpop.f32.mrf.mxu0
      %v1880 = vadd.f32 %v1818, %v1879
      %1881 = vmatmul.bf16.gmra.mxu0 %v1848
      %v1882 = vpop.f32.mrf.mxu0
      %v1883 = vadd.f32 %v1818, %v1882
      %v1884 = vpop.f32.mrf.mxu0
      %v1885 = vadd.f32 %v1818, %v1884
      %1886 = vmatmul.bf16.gmra.mxu0 %v1851
      %v1887 = vpop.f32.mrf.mxu0
      %v1888 = vadd.f32 %v1818, %v1887
      %v1889 = vpop.f32.mrf.mxu0
      %v1890 = vadd.f32 %v1818, %v1889
      %1891 = vmatmul.bf16.gmra.mxu0 %v1854
      %v1892 = vpop.f32.mrf.mxu0
      %v1893 = vadd.f32 %v1818, %v1892
      %v1894 = vpop.f32.mrf.mxu0
      %v1895 = vadd.f32 %v1818, %v1894
      %1896 = vmatmul.bf16.gmra.mxu0 %v1857
      %v1897 = vpop.f32.mrf.mxu0
      %v1898 = vadd.f32 %v1818, %v1897
      %v1899 = vpop.f32.mrf.mxu0
      %v1900 = vadd.f32 %v1818, %v1899
      %1901 = vmatmul.bf16.gmra.mxu0 %v1860
      %v1902 = vpop.f32.mrf.mxu0
      %v1903 = vadd.f32 %v1818, %v1902
      %v1904 = vpop.f32.mrf.mxu0
      %v1905 = vadd.f32 %v1818, %v1904
      %1906 = vmatmul.bf16.gmra.mxu0 %v1863
      %v1907 = vpop.f32.mrf.mxu0
      %v1908 = vadd.f32 %v1818, %v1907
      %v1909 = vpop.f32.mrf.mxu0
      %v1910 = vadd.f32 %v1818, %v1909
      %1911 = vmatmul.bf16.gmra.mxu0 %v1866
      %v1912 = vpop.f32.mrf.mxu0
      %v1913 = vadd.f32 %v1818, %v1912
      %v1914 = vpop.f32.mrf.mxu0
      %v1915 = vadd.f32 %v1818, %v1914
      %1916 = vdwg.mxu0
      %1917 = vst [vmem:[%s294] sm:$0xff] %v1878
      %1918 = vst [vmem:[%s294 + $0x8] sm:$0xff] %v1880
      %1919 = vst [vmem:[%s294 + $0x10] sm:$0xff] %v1883
      %1920 = vst [vmem:[%s294 + $0x18] sm:$0xff] %v1885
      %1921 = vst [vmem:[%s294 + $0x20] sm:$0xff] %v1888
      %1922 = vst [vmem:[%s294 + $0x28] sm:$0xff] %v1890
      %1923 = vst [vmem:[%s294 + $0x30] sm:$0xff] %v1893
      %1924 = vst [vmem:[%s294 + $0x38] sm:$0xff] %v1895
      %1925 = vst [vmem:[%s294 + $0x40] sm:$0xff] %v1898
      %1926 = vst [vmem:[%s294 + $0x48] sm:$0xff] %v1900
      %1927 = vst [vmem:[%s294 + $0x50] sm:$0xff] %v1903
      %1928 = vst [vmem:[%s294 + $0x58] sm:$0xff] %v1905
      %1929 = vst [vmem:[%s294 + $0x60] sm:$0xff] %v1908
      %1930 = vst [vmem:[%s294 + $0x68] sm:$0xff] %v1910
      %1931 = vst [vmem:[%s294 + $0x70] sm:$0xff] %v1913
      %1932 = vst [vmem:[%s294 + $0x78] sm:$0xff] %v1915
      %s1933 = smul.u32 8, %s22
      %p1934 = scmp.lt.s32.totalorder %s21, 1
      %s1935 = scalar_select %p1934, %s21, 1
      %p1936 = scmp.lt.s32.totalorder %s1933, 15
      %s1937 = scalar_select %p1936, %s1933, 15
      %s1938 = smul.addr %s1937, 2
      %s1939 = smul.addr %s1935, 32
      %s1940 = sadd.s32 %s1938, %s1939
      %s1941 = smul.addr %s1940, 8
      %s1942 = scalar_lea.vmem %s6, %s1941
      // Predicated region
      $region45: #{_lambda_.5} parent=43 // pred_check
        %p1943 = pneg %p182
      $region46: #{_lambda_.5} parent=43 // pred_check_branch
        %1945 = sbr.rel (%p1943) target = $region48
      $region47: #{_lambda_.5} parent=43 // pred_region
        %s1946 = smul.u32 8, %s22
      $region48: #{_lambda_.5} parent=43 // pred_fallthru
        _
    $region44: #{_lambda_.5} parent=5 // pred_fallthru
      _
    %p1947 = scmp.le.s32.totalorder 2, %s12
    // Predicated region
    $region49: #{_lambda_.5} parent=5 // pred_check
      %p1948 = pneg %p1947
    $region50: #{_lambda_.5} parent=5 // pred_check_branch
      %1950 = sbr.rel (%p1948) target = $region52
    $region51: #{_lambda_.5} parent=5 // pred_region
      %s1951 = ssub.s32 %s12, 2
      // Predicated region
      $region53: #{_lambda_.5} parent=51 // pred_check
        %p1952 = pneg %p188
      $region54: #{_lambda_.5} parent=51 // pred_check_branch
        %1954 = sbr.rel (%p1952) target = $region56
      $region55: #{_lambda_.5} parent=51 // pred_region
        %s1955 = smul.u32 8, %s24
        %p1956 = scmp.lt.s32.totalorder %s23, 1
        %s1957 = scalar_select %p1956, %s23, 1
        %p1958 = scmp.lt.s32.totalorder %s1955, 15
        %s1959 = scalar_select %p1958, %s1955, 15
        %s1960 = smul.addr %s1959, 2
        %s1961 = smul.addr %s1957, 32
        %s1962 = sadd.s32 %s1960, %s1961
        %s1963 = smul.addr %s1962, 8
        %s1964 = scalar_lea.vmem %s6, %s1963
      $region56: #{_lambda_.5} parent=51 // pred_fallthru
        _
    $region52: #{_lambda_.5} parent=5 // pred_fallthru
      _
  $region6: #{_lambda_.5} parent=0 // loop_footer
    %s16 = sadd.s32 1, %s12
  $region7: #{_lambda_.5} parent=0 // loop_footer_branch
    %11 = sbr.rel target = $region3
  $region8: #{_lambda_.5} parent=0 // loop_exit
    _

</llo_original>
